<compile_context>
chip_gen: v5e
topology: v5e:2x2
jax: 0.10.0
libtpu: 0.0.40
codegen_flags: <defaults>
</compile_context>

<pallas_src>
import functools

import jax
import jax.numpy as jnp
from jax.experimental import pallas as pl
from jax.experimental.pallas import tpu as pltpu

LAYER_SIZES = [2, 256, 512, 256, 1]

# Column layout of the packed (512, 9) f32 parameter array (feature-major columns).
_COL_B_FIRST = 0   # concat(b1, c1)                              : 512 rows
_COL_B2 = 1        # fcl layer-2 bias                            : 512
_COL_B3 = 2        # fcl layer-3 bias                            : rows 0..255
_COL_C2 = 3        # bias-branch layer-2 bias                    : rows 0..255
_COL_WF0 = 4       # fused first-layer weights, input feature 0  : 512
_COL_WF1 = 5       # fused first-layer weights, input feature 1  : 512
_COL_WLH = 6       # fcl last-layer weight column (w4[:,0])      : rows 0..255
_COL_WLG = 7       # bias-branch last-layer column (v3[:,0])     : rows 0..255
_COL_BLAST = 8     # b4 + c3 scalar at row 0
_N_COLS = 9


def mynet_kernel(x_ref, w2t_ref, w3t_ref, v2t_ref, p_ref, out_ref):
    x = x_ref[...]                                   # (2, TB)   f32, batch on lanes
    P = p_ref[...]                                   # (512, 9)  f32 packed params

    b_first = P[:, _COL_B_FIRST:_COL_B_FIRST + 1]    # (512, 1)
    b2 = P[:, _COL_B2:_COL_B2 + 1]                   # (512, 1)
    b3 = P[:256, _COL_B3:_COL_B3 + 1]                # (256, 1)
    c2 = P[:256, _COL_C2:_COL_C2 + 1]                # (256, 1)
    wf0 = P[:, _COL_WF0:_COL_WF0 + 1]                # (512, 1)
    wf1 = P[:, _COL_WF1:_COL_WF1 + 1]                # (512, 1)
    wlh = P[:256, _COL_WLH:_COL_WLH + 1]             # (256, 1)
    wlg = P[:256, _COL_WLG:_COL_WLG + 1]             # (256, 1)
    b_last = P[0:1, _COL_BLAST:_COL_BLAST + 1]       # (1, 1)

    # Fused first layers of both branches (K=2): pure VPU broadcast-FMAs, no MXU.
    hg = jnp.maximum(wf0 * x[0:1, :] + wf1 * x[1:2, :] + b_first, 0.0)   # (512, TB)
    h = hg[:256, :]                                  # Fcl_Net branch     (256, TB)
    g = hg[256:, :]                                  # bias-layer branch  (256, TB)

    # Middle layers on the MXU: bf16 operands, f32 accumulation, feature-major
    # (out = W^T @ act, batch stays on the lane axis).
    h = jnp.maximum(
        jnp.dot(w2t_ref[...], h.astype(jnp.bfloat16),
                preferred_element_type=jnp.float32) + b2, 0.0)           # (512, TB)
    h = jnp.maximum(
        jnp.dot(w3t_ref[...], h.astype(jnp.bfloat16),
                preferred_element_type=jnp.float32) + b3, 0.0)           # (256, TB)
    g = jnp.maximum(
        jnp.dot(v2t_ref[...], g.astype(jnp.bfloat16),
                preferred_element_type=jnp.float32) + c2, 0.0)           # (256, TB)

    # Fused final N=1 layers of both branches: one VPU FMA + one cross-sublane
    # reduce, producing a lane-dense (1, TB) output row (no masked stores).
    out = jnp.sum(h * wlh + g * wlg, axis=0, keepdims=True) + b_last     # (1, TB)
    out_ref[...] = out.astype(out_ref.dtype)


def _xavier_normal(key, shape, dtype=jnp.float32):
    # nn.init.xavier_normal_ on a torch (out, in) weight: std = sqrt(2/(fan_in+fan_out))
    fan_out, fan_in = shape
    std = (2.0 / (fan_in + fan_out)) ** 0.5
    return std * jax.random.normal(key, shape, dtype)


def init_raw_params(key):
    """f32 params in math-friendly layout: W as (in, out), b as (1, out)."""
    ks = jax.random.split(key, 7)
    dims_fcl = [(2, 256), (256, 512), (512, 256), (256, 1)]
    dims_bias = [(2, 256), (256, 256), (256, 1)]
    p = {}
    for i, (fi, fo) in enumerate(dims_fcl):
        p[f"w{i+1}"] = jnp.transpose(_xavier_normal(ks[i], (fo, fi)))
        p[f"b{i+1}"] = jnp.zeros((1, fo), jnp.float32)
    for i, (fi, fo) in enumerate(dims_bias):
        p[f"v{i+1}"] = jnp.transpose(_xavier_normal(ks[4 + i], (fo, fi)))
        p[f"c{i+1}"] = jnp.zeros((1, fo), jnp.float32)
    # TODO(synk): self.epsilon1 exists in MyNet.__init__ but is unused in forward; omitted.
    return p


def pack_params(p):
    """Fuse/pack raw params into the kernel's feature-major argument layout."""
    F = 512

    def col(v):
        v = jnp.asarray(v).reshape(-1)
        return jnp.pad(v, (0, F - v.shape[0]))

    cols = [None] * _N_COLS
    cols[_COL_B_FIRST] = col(jnp.concatenate([p["b1"].reshape(-1), p["c1"].reshape(-1)]))
    cols[_COL_B2] = col(p["b2"])
    cols[_COL_B3] = col(p["b3"])
    cols[_COL_C2] = col(p["c2"])
    cols[_COL_WF0] = col(jnp.concatenate([p["w1"][0], p["v1"][0]]))
    cols[_COL_WF1] = col(jnp.concatenate([p["w1"][1], p["v1"][1]]))
    cols[_COL_WLH] = col(p["w4"][:, 0])
    cols[_COL_WLG] = col(p["v3"][:, 0])
    cols[_COL_BLAST] = col(p["b4"].reshape(-1) + p["c3"].reshape(-1))
    pcols = jnp.stack(cols, axis=1).astype(jnp.float32)      # (512, 9) f32

    return {
        "pcols": pcols,
        "w2t": jnp.transpose(p["w2"]).astype(jnp.bfloat16),  # (512, 256) bf16
        "w3t": jnp.transpose(p["w3"]).astype(jnp.bfloat16),  # (256, 512) bf16
        "v2t": jnp.transpose(p["v2"]).astype(jnp.bfloat16),  # (256, 256) bf16
    }


def _round_up(n, m):
    return (n + m - 1) // m * m


@functools.partial(jax.jit, static_argnames=("tb_max",))
def mynet_forward(x, kp, *, tb_max=2048):
    n = x.shape[0]
    # Lane-axis batch tile: multiple of 128, capped at tb_max (2048 keeps the
    # per-step intermediates ~20 MiB, safe under v7x's 64 MiB physical VMEM).
    tb = min(tb_max, _round_up(max(n, 1), 128))
    n_blocks = pl.cdiv(n, tb)
    n_pad = n_blocks * tb

    xt = jnp.transpose(x)                      # (2, n): batch on the lane axis

    def resident(arr):
        # Weights/params: whole-array block, constant index -> fetched once,
        # VMEM-resident across all batch grid steps.
        return pl.BlockSpec(arr.shape, lambda i: (0, 0))

    out_row = pl.pallas_call(
        mynet_kernel,
        out_shape=jax.ShapeDtypeStruct((1, n_pad), jnp.float32),
        grid=(n_blocks,),
        in_specs=[
            pl.BlockSpec((2, tb), lambda i: (0, i)),      # lane-dense x tile
            resident(kp["w2t"]),
            resident(kp["w3t"]),
            resident(kp["v2t"]),
            resident(kp["pcols"]),
        ],
        out_specs=pl.BlockSpec((1, tb), lambda i: (0, i)),
        compiler_params=pltpu.CompilerParams(
            dimension_semantics=("parallel",),
            vmem_limit_bytes=48 * 1024 * 1024),
    )(xt, kp["w2t"], kp["w3t"], kp["v2t"], kp["pcols"])

    return out_row[0, :n][:, None]             # (n, 1)


def mynet_reference_f32(x, p):
    """Original (unfused, full f32, batch-major) forward, matching the PyTorch module."""
    relu = jax.nn.relu
    h = relu(x @ p["w1"] + p["b1"])
    h = relu(h @ p["w2"] + p["b2"])
    h = relu(h @ p["w3"] + p["b3"])
    h1 = h @ p["w4"] + p["b4"]
    g = relu(x @ p["v1"] + p["c1"])
    g = relu(g @ p["v2"] + p["c2"])
    h2 = g @ p["v3"] + p["c3"]
    return h1 + h2


def mynet_reference_kernel_precision(x, kp):
    """Same math / dtypes / layout as the Pallas kernel, expressed in plain JAX."""
    P = kp["pcols"]
    xt = jnp.transpose(x)
    b_first = P[:, _COL_B_FIRST:_COL_B_FIRST + 1]
    b2 = P[:, _COL_B2:_COL_B2 + 1]
    b3 = P[:256, _COL_B3:_COL_B3 + 1]
    c2 = P[:256, _COL_C2:_COL_C2 + 1]
    wf0 = P[:, _COL_WF0:_COL_WF0 + 1]
    wf1 = P[:, _COL_WF1:_COL_WF1 + 1]
    wlh = P[:256, _COL_WLH:_COL_WLH + 1]
    wlg = P[:256, _COL_WLG:_COL_WLG + 1]
    b_last = P[0:1, _COL_BLAST:_COL_BLAST + 1]

    hg = jnp.maximum(wf0 * xt[0:1, :] + wf1 * xt[1:2, :] + b_first, 0.0)
    h, g = hg[:256, :], hg[256:, :]
    h = jnp.maximum(jnp.dot(kp["w2t"], h.astype(jnp.bfloat16),
                            preferred_element_type=jnp.float32) + b2, 0.0)
    h = jnp.maximum(jnp.dot(kp["w3t"], h.astype(jnp.bfloat16),
                            preferred_element_type=jnp.float32) + b3, 0.0)
    g = jnp.maximum(jnp.dot(kp["v2t"], g.astype(jnp.bfloat16),
                            preferred_element_type=jnp.float32) + c2, 0.0)
    out = jnp.sum(h * wlh + g * wlg, axis=0, keepdims=True) + b_last
    return jnp.transpose(out)                  # (n, 1)


if __name__ == "__main__":
    key = jax.random.PRNGKey(0)
    kx, kparams = jax.random.split(key)

    raw = init_raw_params(kparams)
    kp = pack_params(raw)

    # Small example consistent with the module: batch of 8 points in R^2.
    batch = 8
    x = jax.random.normal(kx, (batch, LAYER_SIZES[0]), jnp.float32)

    out = jax.block_until_ready(mynet_forward(x, kp))
    assert out.shape == (batch, LAYER_SIZES[-1])

    ref_same = mynet_reference_kernel_precision(x, kp)          # same precision path
    assert jnp.allclose(out, ref_same, atol=1e-3, rtol=1e-3), "mismatch vs kernel-precision ref"

    ref_f32 = mynet_reference_f32(x, raw)                        # full f32 reference
    assert jnp.allclose(out, ref_f32, atol=1e-2, rtol=1e-2), "mismatch vs f32 reference"

    # Multi-step batch grid with a ragged last tile (no wrapper-side pad copies).
    x_big = jax.random.normal(kx, (600, LAYER_SIZES[0]), jnp.float32)
    out_big = jax.block_until_ready(mynet_forward(x_big, kp, tb_max=256))   # grid of 3, ragged
    assert out_big.shape == (600, LAYER_SIZES[-1])
    assert jnp.allclose(out_big, mynet_reference_kernel_precision(x_big, kp),
                        atol=1e-3, rtol=1e-3), "mismatch vs ref on gridded ragged batch"

    # Single ragged tile at the default (large) tile size must agree as well.
    out_big2 = jax.block_until_ready(mynet_forward(x_big, kp))
    assert jnp.allclose(out_big2, out_big, atol=1e-3, rtol=1e-3), "tile-size dependence detected"

    print("KERNEL_OK")
</pallas_src>

<mosaic_0001>
module attributes {stable_mosaic.version = 11 : i64} {
  func.func @mynet_kernel(%arg0: i32, %arg1: memref<2x128xf32, #tpu.memory_space<vmem>>, %arg2: memref<512x256xbf16, #tpu.memory_space<vmem>>, %arg3: memref<256x512xbf16, #tpu.memory_space<vmem>>, %arg4: memref<256x256xbf16, #tpu.memory_space<vmem>>, %arg5: memref<512x9xf32, #tpu.memory_space<vmem>>, %arg6: memref<1x128xf32, #tpu.memory_space<vmem>>) attributes {dimension_semantics = [#tpu.dimension_semantics<parallel>], iteration_bounds = array<i64: 1>, scalar_prefetch = 0 : i64, scratch_operands = 0 : i64, tpu.core_type = #tpu.core_type<tc>, window_params = [{transform_indices = @transform_0, window_bounds = array<i64: 2, 128>}, {pipeline_mode = #tpu.pipeline_mode<synchronous>, transform_indices = @transform_1, window_bounds = array<i64: 512, 256>}, {pipeline_mode = #tpu.pipeline_mode<synchronous>, transform_indices = @transform_2, window_bounds = array<i64: 256, 512>}, {pipeline_mode = #tpu.pipeline_mode<synchronous>, transform_indices = @transform_3, window_bounds = array<i64: 256, 256>}, {pipeline_mode = #tpu.pipeline_mode<synchronous>, transform_indices = @transform_4, window_bounds = array<i64: 512, 9>}, {transform_indices = @transform_5, window_bounds = array<i64: 1, 128>}]} {
    %c0 = arith.constant 0 : index
    %c0_0 = arith.constant 0 : index
    %0 = vector.load %arg1[%c0, %c0_0] : memref<2x128xf32, #tpu.memory_space<vmem>>, vector<2x128xf32>
    %c0_1 = arith.constant 0 : index
    %c0_2 = arith.constant 0 : index
    %1 = vector.load %arg5[%c0_1, %c0_2] : memref<512x9xf32, #tpu.memory_space<vmem>>, vector<512x9xf32>
    %2 = vector.extract_strided_slice %1 {offsets = [0, 0], sizes = [512, 1], strides = [1, 1]} : vector<512x9xf32> to vector<512x1xf32>
    %3 = vector.extract_strided_slice %1 {offsets = [0, 1], sizes = [512, 1], strides = [1, 1]} : vector<512x9xf32> to vector<512x1xf32>
    %4 = vector.extract_strided_slice %1 {offsets = [0, 2], sizes = [256, 1], strides = [1, 1]} : vector<512x9xf32> to vector<256x1xf32>
    %5 = vector.extract_strided_slice %1 {offsets = [0, 3], sizes = [256, 1], strides = [1, 1]} : vector<512x9xf32> to vector<256x1xf32>
    %6 = vector.extract_strided_slice %1 {offsets = [0, 4], sizes = [512, 1], strides = [1, 1]} : vector<512x9xf32> to vector<512x1xf32>
    %7 = vector.extract_strided_slice %1 {offsets = [0, 5], sizes = [512, 1], strides = [1, 1]} : vector<512x9xf32> to vector<512x1xf32>
    %8 = vector.extract_strided_slice %1 {offsets = [0, 6], sizes = [256, 1], strides = [1, 1]} : vector<512x9xf32> to vector<256x1xf32>
    %9 = vector.extract_strided_slice %1 {offsets = [0, 7], sizes = [256, 1], strides = [1, 1]} : vector<512x9xf32> to vector<256x1xf32>
    %10 = vector.extract_strided_slice %1 {offsets = [0, 8], sizes = [1, 1], strides = [1, 1]} : vector<512x9xf32> to vector<1x1xf32>
    %11 = vector.extract_strided_slice %0 {offsets = [0, 0], sizes = [1, 128], strides = [1, 1]} : vector<2x128xf32> to vector<1x128xf32>
    %12 = vector.broadcast %6 : vector<512x1xf32> to vector<512x128xf32>
    %13 = vector.broadcast %11 : vector<1x128xf32> to vector<512x128xf32>
    %14 = arith.mulf %12, %13 : vector<512x128xf32>
    %15 = vector.extract_strided_slice %0 {offsets = [1, 0], sizes = [1, 128], strides = [1, 1]} : vector<2x128xf32> to vector<1x128xf32>
    %16 = vector.broadcast %7 : vector<512x1xf32> to vector<512x128xf32>
    %17 = vector.broadcast %15 : vector<1x128xf32> to vector<512x128xf32>
    %18 = arith.mulf %16, %17 : vector<512x128xf32>
    %19 = arith.addf %14, %18 : vector<512x128xf32>
    %20 = vector.broadcast %2 : vector<512x1xf32> to vector<512x128xf32>
    %21 = arith.addf %19, %20 : vector<512x128xf32>
    %cst = arith.constant 0.000000e+00 : f32
    %22 = vector.broadcast %cst : f32 to vector<512x128xf32>
    %23 = arith.maximumf %21, %22 : vector<512x128xf32>
    %24 = vector.extract_strided_slice %23 {offsets = [0, 0], sizes = [256, 128], strides = [1, 1]} : vector<512x128xf32> to vector<256x128xf32>
    %25 = vector.extract_strided_slice %23 {offsets = [256, 0], sizes = [256, 128], strides = [1, 1]} : vector<512x128xf32> to vector<256x128xf32>
    %c0_3 = arith.constant 0 : index
    %c0_4 = arith.constant 0 : index
    %26 = vector.load %arg2[%c0_3, %c0_4] : memref<512x256xbf16, #tpu.memory_space<vmem>>, vector<512x256xbf16>
    %27 = arith.truncf %24 : vector<256x128xf32> to vector<256x128xbf16>
    %cst_5 = arith.constant dense<0.000000e+00> : vector<512x128xf32>
    %28 = tpu.matmul %26, %27, %cst_5 {dimension_numbers = #tpu.dot_dimension_numbers<[1], [0], [0], [1], [0, 0, 1, 1], [], []>} : vector<512x256xbf16>, vector<256x128xbf16>, vector<512x128xf32> -> vector<512x128xf32>
    %29 = vector.broadcast %3 : vector<512x1xf32> to vector<512x128xf32>
    %30 = arith.addf %28, %29 : vector<512x128xf32>
    %cst_6 = arith.constant 0.000000e+00 : f32
    %31 = vector.broadcast %cst_6 : f32 to vector<512x128xf32>
    %32 = arith.maximumf %30, %31 : vector<512x128xf32>
    %c0_7 = arith.constant 0 : index
    %c0_8 = arith.constant 0 : index
    %33 = vector.load %arg3[%c0_7, %c0_8] : memref<256x512xbf16, #tpu.memory_space<vmem>>, vector<256x512xbf16>
    %34 = arith.truncf %32 : vector<512x128xf32> to vector<512x128xbf16>
    %cst_9 = arith.constant dense<0.000000e+00> : vector<256x128xf32>
    %35 = tpu.matmul %33, %34, %cst_9 {dimension_numbers = #tpu.dot_dimension_numbers<[1], [0], [0], [1], [0, 0, 1, 1], [], []>} : vector<256x512xbf16>, vector<512x128xbf16>, vector<256x128xf32> -> vector<256x128xf32>
    %36 = vector.broadcast %4 : vector<256x1xf32> to vector<256x128xf32>
    %37 = arith.addf %35, %36 : vector<256x128xf32>
    %cst_10 = arith.constant 0.000000e+00 : f32
    %38 = vector.broadcast %cst_10 : f32 to vector<256x128xf32>
    %39 = arith.maximumf %37, %38 : vector<256x128xf32>
    %c0_11 = arith.constant 0 : index
    %c0_12 = arith.constant 0 : index
    %40 = vector.load %arg4[%c0_11, %c0_12] : memref<256x256xbf16, #tpu.memory_space<vmem>>, vector<256x256xbf16>
    %41 = arith.truncf %25 : vector<256x128xf32> to vector<256x128xbf16>
    %cst_13 = arith.constant dense<0.000000e+00> : vector<256x128xf32>
    %42 = tpu.matmul %40, %41, %cst_13 {dimension_numbers = #tpu.dot_dimension_numbers<[1], [0], [0], [1], [0, 0, 1, 1], [], []>} : vector<256x256xbf16>, vector<256x128xbf16>, vector<256x128xf32> -> vector<256x128xf32>
    %43 = vector.broadcast %5 : vector<256x1xf32> to vector<256x128xf32>
    %44 = arith.addf %42, %43 : vector<256x128xf32>
    %cst_14 = arith.constant 0.000000e+00 : f32
    %45 = vector.broadcast %cst_14 : f32 to vector<256x128xf32>
    %46 = arith.maximumf %44, %45 : vector<256x128xf32>
    %47 = vector.broadcast %8 : vector<256x1xf32> to vector<256x128xf32>
    %48 = arith.mulf %39, %47 : vector<256x128xf32>
    %49 = vector.broadcast %9 : vector<256x1xf32> to vector<256x128xf32>
    %50 = arith.mulf %46, %49 : vector<256x128xf32>
    %51 = arith.addf %48, %50 : vector<256x128xf32>
    %cst_15 = arith.constant dense<0.000000e+00> : vector<128xf32>
    %52 = vector.multi_reduction <add>, %51, %cst_15 [0] : vector<256x128xf32> to vector<128xf32>
    %53 = vector.shape_cast %52 : vector<128xf32> to vector<1x128xf32>
    %54 = vector.broadcast %10 : vector<1x1xf32> to vector<1x128xf32>
    %55 = arith.addf %53, %54 : vector<1x128xf32>
    %c0_16 = arith.constant 0 : index
    %c0_17 = arith.constant 0 : index
    %56 = vector.load %arg6[%c0_16, %c0_17] : memref<1x128xf32, #tpu.memory_space<vmem>>, vector<1x128xf32>
    tpu.vector_store %arg6[%c0_16, %c0_17], %55 {strides = array<i32>} : memref<1x128xf32, #tpu.memory_space<vmem>>, vector<1x128xf32>,
    return
  }
  func.func @transform_0(%arg0: i32) -> (i32, i32) {
    %c0_i32 = arith.constant 0 : i32
    %c0_i32_0 = arith.constant 0 : i32
    return %c0_i32, %arg0 : i32, i32
  }
  func.func @transform_1(%arg0: i32) -> (i32, i32) {
    %c0_i32 = arith.constant 0 : i32
    %c0_i32_0 = arith.constant 0 : i32
    %c0_i32_1 = arith.constant 0 : i32
    return %c0_i32, %c0_i32_0 : i32, i32
  }
  func.func @transform_2(%arg0: i32) -> (i32, i32) {
    %c0_i32 = arith.constant 0 : i32
    %c0_i32_0 = arith.constant 0 : i32
    %c0_i32_1 = arith.constant 0 : i32
    return %c0_i32, %c0_i32_0 : i32, i32
  }
  func.func @transform_3(%arg0: i32) -> (i32, i32) {
    %c0_i32 = arith.constant 0 : i32
    %c0_i32_0 = arith.constant 0 : i32
    %c0_i32_1 = arith.constant 0 : i32
    return %c0_i32, %c0_i32_0 : i32, i32
  }
  func.func @transform_4(%arg0: i32) -> (i32, i32) {
    %c0_i32 = arith.constant 0 : i32
    %c0_i32_0 = arith.constant 0 : i32
    %c0_i32_1 = arith.constant 0 : i32
    return %c0_i32, %c0_i32_0 : i32, i32
  }
  func.func @transform_5(%arg0: i32) -> (i32, i32) {
    %c0_i32 = arith.constant 0 : i32
    %c0_i32_0 = arith.constant 0 : i32
    return %c0_i32, %arg0 : i32, i32
  }
}

</mosaic_0001>

<llo_original>
// kernel: mynet_forward.1
$region0: #{mynet_forward.1}
  #allocation0 [shape = 'u32[]', space=smem, size = 0x4, offset = 0x4, fixed_abs, tag = 'smem constant byte address 0x4 - core index']
  #allocation1 [shape = 'u32[72,128]{1,0:T(1,128)}', space=vmem, size = 0x9000, scoped, tag = 'internal scratch']
  %s0 = inlined_call_operand.vmem [shape: f32[2,8], index: 0, kind: input, shape index: {}]
  %s1 = inlined_call_operand.vmem [shape: bf16[512,256], index: 1, kind: input, shape index: {}]
  %s2 = inlined_call_operand.hbm [shape: bf16[256,512], index: 2, kind: input, shape index: {}]
  %s3 = inlined_call_operand.hbm [shape: bf16[256,256], index: 3, kind: input, shape index: {}]
  %s4 = inlined_call_operand.vmem [shape: f32[512,9], index: 4, kind: input, shape index: {}]
  %s5 = inlined_call_operand.vmem [shape: f32[1,128], index: 5, kind: output, shape index: {}]
  %s6 = sld [smem:[#allocation0]]
  $region38: #{mynet_forward.1} parent=0
    _
  %s8 = ssub.s32 1, %s6
  %s9 = scalar_select 0, %s8, %s6
  $region1: #{mynet_forward.1} parent=0
    #allocation2 [shape = 'u8[262144]{0}', space=vmem, size = 0x40000, scoped, tag = 'input window, operand 2, single buffered']
    #allocation3 [shape = 's32[1]{0}', space=sflag, size = 0x4, scoped, tag = 'scoped memory for mynet_forward.1']
    #allocation4 [shape = 'u8[131072]{0}', space=vmem, size = 0x20000, scoped, tag = 'input window, operand 3, single buffered']
    #allocation5 [shape = 's32[1]{0}', space=sflag, size = 0x4, scoped, tag = 'scoped memory for mynet_forward.1']
    %10 = vsyncpa [#allocation3], 0
    %11 = vsyncpa [#allocation5], 0
    // Predicated region
    $region2: #{mynet_forward.1} parent=1 // pred_check
      _
    $region3: #{mynet_forward.1} parent=1 // pred_check_branch
      %13 = sbr.rel (0) target = $region5
    $region4: #{mynet_forward.1} parent=1 // pred_region
      _
    $region5: #{mynet_forward.1} parent=1 // pred_fallthru
      _
    // Predicated region
    $region6: #{mynet_forward.1} parent=1 // pred_check
      _
    $region7: #{mynet_forward.1} parent=1 // pred_check_branch
      %15 = sbr.rel (0) target = $region9
    $region8: #{mynet_forward.1} parent=1 // pred_region
      _
    $region9: #{mynet_forward.1} parent=1 // pred_fallthru
      _
    // Predicated region
    $region10: #{mynet_forward.1} parent=1 // pred_check
      _
    $region11: #{mynet_forward.1} parent=1 // pred_check_branch
      %17 = sbr.rel (0) target = $region13
    $region12: #{mynet_forward.1} parent=1 // pred_region
      %19 = vsyncadd [#allocation3], 0
      %s20 = sshll.u32 %s2, 4
      %s21 = int_to_ptr.hbm [resolvable:$true] %s20
      %s22 = sshll.u32 [#allocation2], 4
      %s23 = int_to_ptr.vmem [resolvable:$true] %s22
      %28 = dma.hbm_to_vmem [thread:$0]  %s21, 8192, %s23, [#allocation3], 256, 256, 16
    $region13: #{mynet_forward.1} parent=1 // pred_fallthru
      _
    // Predicated region
    $region14: #{mynet_forward.1} parent=1 // pred_check
      _
    $region15: #{mynet_forward.1} parent=1 // pred_check_branch
      %30 = sbr.rel (0) target = $region17
    $region16: #{mynet_forward.1} parent=1 // pred_region
      %32 = vsyncadd [#allocation5], 0
      %s33 = sshll.u32 %s3, 4
      %s34 = int_to_ptr.hbm [resolvable:$true] %s33
      %s35 = sshll.u32 [#allocation4], 4
      %s36 = int_to_ptr.vmem [resolvable:$true] %s35
      %41 = dma.hbm_to_vmem [thread:$0]  %s34, 4096, %s36, [#allocation5], 128, 128, 8
    $region17: #{mynet_forward.1} parent=1 // pred_fallthru
      _
    // Predicated region
    $region18: #{mynet_forward.1} parent=1 // pred_check
      _
    $region19: #{mynet_forward.1} parent=1 // pred_check_branch
      %43 = sbr.rel (0) target = $region21
    $region20: #{mynet_forward.1} parent=1 // pred_region
      _
    $region21: #{mynet_forward.1} parent=1 // pred_fallthru
      _
    // Predicated region
    $region22: #{mynet_forward.1} parent=1 // pred_check
      _
    $region23: #{mynet_forward.1} parent=1 // pred_check_branch
      %45 = sbr.rel (0) target = $region25
    $region24: #{mynet_forward.1} parent=1 // pred_region
      %47 = dma.done [#allocation3], 8192
    $region25: #{mynet_forward.1} parent=1 // pred_fallthru
      _
    // Predicated region
    $region26: #{mynet_forward.1} parent=1 // pred_check
      _
    $region27: #{mynet_forward.1} parent=1 // pred_check_branch
      %49 = sbr.rel (0) target = $region29
    $region28: #{mynet_forward.1} parent=1 // pred_region
      %51 = dma.done [#allocation5], 4096
    $region29: #{mynet_forward.1} parent=1 // pred_fallthru
      _
    %v52 = vld [vmem:[%s0] sm:$0x3]
    %v53 = vld [vmem:[%s4] sm:$0xff]
    %v54 = vld [vmem:[%s4 + $0x8] sm:$0xff]
    %v55 = vld [vmem:[%s4 + $0x10] sm:$0xff]
    %v56 = vld [vmem:[%s4 + $0x18] sm:$0xff]
    %v57 = vld [vmem:[%s4 + $0x20] sm:$0xff]
    %v58 = vld [vmem:[%s4 + $0x28] sm:$0xff]
    %v59 = vld [vmem:[%s4 + $0x30] sm:$0xff]
    %v60 = vld [vmem:[%s4 + $0x38] sm:$0xff]
    %v61 = vld [vmem:[%s4 + $0x40] sm:$0xff]
    %v62 = vld [vmem:[%s4 + $0x48] sm:$0xff]
    %v63 = vld [vmem:[%s4 + $0x50] sm:$0xff]
    %v64 = vld [vmem:[%s4 + $0x58] sm:$0xff]
    %v65 = vld [vmem:[%s4 + $0x60] sm:$0xff]
    %v66 = vld [vmem:[%s4 + $0x68] sm:$0xff]
    %v67 = vld [vmem:[%s4 + $0x70] sm:$0xff]
    %v68 = vld [vmem:[%s4 + $0x78] sm:$0xff]
    %v69 = vld [vmem:[%s4 + $0x80] sm:$0xff]
    %v70 = vld [vmem:[%s4 + $0x88] sm:$0xff]
    %v71 = vld [vmem:[%s4 + $0x90] sm:$0xff]
    %v72 = vld [vmem:[%s4 + $0x98] sm:$0xff]
    %v73 = vld [vmem:[%s4 + $0xa0] sm:$0xff]
    %v74 = vld [vmem:[%s4 + $0xa8] sm:$0xff]
    %v75 = vld [vmem:[%s4 + $0xb0] sm:$0xff]
    %v76 = vld [vmem:[%s4 + $0xb8] sm:$0xff]
    %v77 = vld [vmem:[%s4 + $0xc0] sm:$0xff]
    %v78 = vld [vmem:[%s4 + $0xc8] sm:$0xff]
    %v79 = vld [vmem:[%s4 + $0xd0] sm:$0xff]
    %v80 = vld [vmem:[%s4 + $0xd8] sm:$0xff]
    %v81 = vld [vmem:[%s4 + $0xe0] sm:$0xff]
    %v82 = vld [vmem:[%s4 + $0xe8] sm:$0xff]
    %v83 = vld [vmem:[%s4 + $0xf0] sm:$0xff]
    %v84 = vld [vmem:[%s4 + $0xf8] sm:$0xff]
    %v85 = vld [vmem:[%s4 + $0x100] sm:$0xff]
    %v86 = vld [vmem:[%s4 + $0x108] sm:$0xff]
    %v87 = vld [vmem:[%s4 + $0x110] sm:$0xff]
    %v88 = vld [vmem:[%s4 + $0x118] sm:$0xff]
    %v89 = vld [vmem:[%s4 + $0x120] sm:$0xff]
    %v90 = vld [vmem:[%s4 + $0x128] sm:$0xff]
    %v91 = vld [vmem:[%s4 + $0x130] sm:$0xff]
    %v92 = vld [vmem:[%s4 + $0x138] sm:$0xff]
    %v93 = vld [vmem:[%s4 + $0x140] sm:$0xff]
    %v94 = vld [vmem:[%s4 + $0x148] sm:$0xff]
    %v95 = vld [vmem:[%s4 + $0x150] sm:$0xff]
    %v96 = vld [vmem:[%s4 + $0x158] sm:$0xff]
    %v97 = vld [vmem:[%s4 + $0x160] sm:$0xff]
    %v98 = vld [vmem:[%s4 + $0x168] sm:$0xff]
    %v99 = vld [vmem:[%s4 + $0x170] sm:$0xff]
    %v100 = vld [vmem:[%s4 + $0x178] sm:$0xff]
    %v101 = vld [vmem:[%s4 + $0x180] sm:$0xff]
    %v102 = vld [vmem:[%s4 + $0x188] sm:$0xff]
    %v103 = vld [vmem:[%s4 + $0x190] sm:$0xff]
    %v104 = vld [vmem:[%s4 + $0x198] sm:$0xff]
    %v105 = vld [vmem:[%s4 + $0x1a0] sm:$0xff]
    %v106 = vld [vmem:[%s4 + $0x1a8] sm:$0xff]
    %v107 = vld [vmem:[%s4 + $0x1b0] sm:$0xff]
    %v108 = vld [vmem:[%s4 + $0x1b8] sm:$0xff]
    %v109 = vld [vmem:[%s4 + $0x1c0] sm:$0xff]
    %v110 = vld [vmem:[%s4 + $0x1c8] sm:$0xff]
    %v111 = vld [vmem:[%s4 + $0x1d0] sm:$0xff]
    %v112 = vld [vmem:[%s4 + $0x1d8] sm:$0xff]
    %v113 = vld [vmem:[%s4 + $0x1e0] sm:$0xff]
    %v114 = vld [vmem:[%s4 + $0x1e8] sm:$0xff]
    %v115 = vld [vmem:[%s4 + $0x1f0] sm:$0xff]
    %v116 = vld [vmem:[%s4 + $0x1f8] sm:$0xff]
    %118 = vset.pattern.permute.xlu0 4
    %119 = vperm.xlu0 %118, %v53
    %v120 = vpop.permute.xlu0 %119
    %123 = vset.pattern.permute.xlu0 4
    %124 = vperm.xlu0 %123, %v54
    %v125 = vpop.permute.xlu0 %124
    %128 = vset.pattern.permute.xlu0 4
    %129 = vperm.xlu0 %128, %v55
    %v130 = vpop.permute.xlu0 %129
    %133 = vset.pattern.permute.xlu0 4
    %134 = vperm.xlu0 %133, %v56
    %v135 = vpop.permute.xlu0 %134
    %138 = vset.pattern.permute.xlu0 4
    %139 = vperm.xlu0 %138, %v57
    %v140 = vpop.permute.xlu0 %139
    %143 = vset.pattern.permute.xlu0 4
    %144 = vperm.xlu0 %143, %v58
    %v145 = vpop.permute.xlu0 %144
    %148 = vset.pattern.permute.xlu0 4
    %149 = vperm.xlu0 %148, %v59
    %v150 = vpop.permute.xlu0 %149
    %153 = vset.pattern.permute.xlu0 4
    %154 = vperm.xlu0 %153, %v60
    %v155 = vpop.permute.xlu0 %154
    %158 = vset.pattern.permute.xlu0 4
    %159 = vperm.xlu0 %158, %v61
    %v160 = vpop.permute.xlu0 %159
    %163 = vset.pattern.permute.xlu0 4
    %164 = vperm.xlu0 %163, %v62
    %v165 = vpop.permute.xlu0 %164
    %168 = vset.pattern.permute.xlu0 4
    %169 = vperm.xlu0 %168, %v63
    %v170 = vpop.permute.xlu0 %169
    %173 = vset.pattern.permute.xlu0 4
    %174 = vperm.xlu0 %173, %v64
    %v175 = vpop.permute.xlu0 %174
    %178 = vset.pattern.permute.xlu0 4
    %179 = vperm.xlu0 %178, %v65
    %v180 = vpop.permute.xlu0 %179
    %183 = vset.pattern.permute.xlu0 4
    %184 = vperm.xlu0 %183, %v66
    %v185 = vpop.permute.xlu0 %184
    %188 = vset.pattern.permute.xlu0 4
    %189 = vperm.xlu0 %188, %v67
    %v190 = vpop.permute.xlu0 %189
    %193 = vset.pattern.permute.xlu0 4
    %194 = vperm.xlu0 %193, %v68
    %v195 = vpop.permute.xlu0 %194
    %198 = vset.pattern.permute.xlu0 4
    %199 = vperm.xlu0 %198, %v69
    %v200 = vpop.permute.xlu0 %199
    %203 = vset.pattern.permute.xlu0 4
    %204 = vperm.xlu0 %203, %v70
    %v205 = vpop.permute.xlu0 %204
    %208 = vset.pattern.permute.xlu0 4
    %209 = vperm.xlu0 %208, %v71
    %v210 = vpop.permute.xlu0 %209
    %213 = vset.pattern.permute.xlu0 4
    %214 = vperm.xlu0 %213, %v72
    %v215 = vpop.permute.xlu0 %214
    %218 = vset.pattern.permute.xlu0 4
    %219 = vperm.xlu0 %218, %v73
    %v220 = vpop.permute.xlu0 %219
    %223 = vset.pattern.permute.xlu0 4
    %224 = vperm.xlu0 %223, %v74
    %v225 = vpop.permute.xlu0 %224
    %228 = vset.pattern.permute.xlu0 4
    %229 = vperm.xlu0 %228, %v75
    %v230 = vpop.permute.xlu0 %229
    %233 = vset.pattern.permute.xlu0 4
    %234 = vperm.xlu0 %233, %v76
    %v235 = vpop.permute.xlu0 %234
    %238 = vset.pattern.permute.xlu0 4
    %239 = vperm.xlu0 %238, %v77
    %v240 = vpop.permute.xlu0 %239
    %243 = vset.pattern.permute.xlu0 4
    %244 = vperm.xlu0 %243, %v78
    %v245 = vpop.permute.xlu0 %244
    %248 = vset.pattern.permute.xlu0 4
    %249 = vperm.xlu0 %248, %v79
    %v250 = vpop.permute.xlu0 %249
    %253 = vset.pattern.permute.xlu0 4
    %254 = vperm.xlu0 %253, %v80
    %v255 = vpop.permute.xlu0 %254
    %258 = vset.pattern.permute.xlu0 4
    %259 = vperm.xlu0 %258, %v81
    %v260 = vpop.permute.xlu0 %259
    %263 = vset.pattern.permute.xlu0 4
    %264 = vperm.xlu0 %263, %v82
    %v265 = vpop.permute.xlu0 %264
    %268 = vset.pattern.permute.xlu0 4
    %269 = vperm.xlu0 %268, %v83
    %v270 = vpop.permute.xlu0 %269
    %273 = vset.pattern.permute.xlu0 4
    %274 = vperm.xlu0 %273, %v84
    %v275 = vpop.permute.xlu0 %274
    %278 = vset.pattern.permute.xlu0 4
    %279 = vperm.xlu0 %278, %v85
    %v280 = vpop.permute.xlu0 %279
    %283 = vset.pattern.permute.xlu0 4
    %284 = vperm.xlu0 %283, %v86
    %v285 = vpop.permute.xlu0 %284
    %288 = vset.pattern.permute.xlu0 4
    %289 = vperm.xlu0 %288, %v87
    %v290 = vpop.permute.xlu0 %289
    %293 = vset.pattern.permute.xlu0 4
    %294 = vperm.xlu0 %293, %v88
    %v295 = vpop.permute.xlu0 %294
    %298 = vset.pattern.permute.xlu0 4
    %299 = vperm.xlu0 %298, %v89
    %v300 = vpop.permute.xlu0 %299
    %303 = vset.pattern.permute.xlu0 4
    %304 = vperm.xlu0 %303, %v90
    %v305 = vpop.permute.xlu0 %304
    %308 = vset.pattern.permute.xlu0 4
    %309 = vperm.xlu0 %308, %v91
    %v310 = vpop.permute.xlu0 %309
    %313 = vset.pattern.permute.xlu0 4
    %314 = vperm.xlu0 %313, %v92
    %v315 = vpop.permute.xlu0 %314
    %318 = vset.pattern.permute.xlu0 4
    %319 = vperm.xlu0 %318, %v93
    %v320 = vpop.permute.xlu0 %319
    %323 = vset.pattern.permute.xlu0 4
    %324 = vperm.xlu0 %323, %v94
    %v325 = vpop.permute.xlu0 %324
    %328 = vset.pattern.permute.xlu0 4
    %329 = vperm.xlu0 %328, %v95
    %v330 = vpop.permute.xlu0 %329
    %333 = vset.pattern.permute.xlu0 4
    %334 = vperm.xlu0 %333, %v96
    %v335 = vpop.permute.xlu0 %334
    %338 = vset.pattern.permute.xlu0 4
    %339 = vperm.xlu0 %338, %v97
    %v340 = vpop.permute.xlu0 %339
    %343 = vset.pattern.permute.xlu0 4
    %344 = vperm.xlu0 %343, %v98
    %v345 = vpop.permute.xlu0 %344
    %348 = vset.pattern.permute.xlu0 4
    %349 = vperm.xlu0 %348, %v99
    %v350 = vpop.permute.xlu0 %349
    %353 = vset.pattern.permute.xlu0 4
    %354 = vperm.xlu0 %353, %v100
    %v355 = vpop.permute.xlu0 %354
    %358 = vset.pattern.permute.xlu0 4
    %359 = vperm.xlu0 %358, %v101
    %v360 = vpop.permute.xlu0 %359
    %363 = vset.pattern.permute.xlu0 4
    %364 = vperm.xlu0 %363, %v102
    %v365 = vpop.permute.xlu0 %364
    %368 = vset.pattern.permute.xlu0 4
    %369 = vperm.xlu0 %368, %v103
    %v370 = vpop.permute.xlu0 %369
    %373 = vset.pattern.permute.xlu0 4
    %374 = vperm.xlu0 %373, %v104
    %v375 = vpop.permute.xlu0 %374
    %378 = vset.pattern.permute.xlu0 4
    %379 = vperm.xlu0 %378, %v105
    %v380 = vpop.permute.xlu0 %379
    %383 = vset.pattern.permute.xlu0 4
    %384 = vperm.xlu0 %383, %v106
    %v385 = vpop.permute.xlu0 %384
    %388 = vset.pattern.permute.xlu0 4
    %389 = vperm.xlu0 %388, %v107
    %v390 = vpop.permute.xlu0 %389
    %393 = vset.pattern.permute.xlu0 4
    %394 = vperm.xlu0 %393, %v108
    %v395 = vpop.permute.xlu0 %394
    %398 = vset.pattern.permute.xlu0 4
    %399 = vperm.xlu0 %398, %v109
    %v400 = vpop.permute.xlu0 %399
    %403 = vset.pattern.permute.xlu0 4
    %404 = vperm.xlu0 %403, %v110
    %v405 = vpop.permute.xlu0 %404
    %408 = vset.pattern.permute.xlu0 4
    %409 = vperm.xlu0 %408, %v111
    %v410 = vpop.permute.xlu0 %409
    %413 = vset.pattern.permute.xlu0 4
    %414 = vperm.xlu0 %413, %v112
    %v415 = vpop.permute.xlu0 %414
    %418 = vset.pattern.permute.xlu0 4
    %419 = vperm.xlu0 %418, %v113
    %v420 = vpop.permute.xlu0 %419
    %423 = vset.pattern.permute.xlu0 4
    %424 = vperm.xlu0 %423, %v114
    %v425 = vpop.permute.xlu0 %424
    %428 = vset.pattern.permute.xlu0 4
    %429 = vperm.xlu0 %428, %v115
    %v430 = vpop.permute.xlu0 %429
    %433 = vset.pattern.permute.xlu0 4
    %434 = vperm.xlu0 %433, %v116
    %v435 = vpop.permute.xlu0 %434
    %v437 = vperm.slane %v52, 0
    %v438 = vmul.f32 %v120, %v437
    %v439 = vmul.f32 %v125, %v437
    %v440 = vmul.f32 %v130, %v437
    %v441 = vmul.f32 %v135, %v437
    %v442 = vmul.f32 %v140, %v437
    %v443 = vmul.f32 %v145, %v437
    %v444 = vmul.f32 %v150, %v437
    %v445 = vmul.f32 %v155, %v437
    %v446 = vmul.f32 %v160, %v437
    %v447 = vmul.f32 %v165, %v437
    %v448 = vmul.f32 %v170, %v437
    %v449 = vmul.f32 %v175, %v437
    %v450 = vmul.f32 %v180, %v437
    %v451 = vmul.f32 %v185, %v437
    %v452 = vmul.f32 %v190, %v437
    %v453 = vmul.f32 %v195, %v437
    %v454 = vmul.f32 %v200, %v437
    %v455 = vmul.f32 %v205, %v437
    %v456 = vmul.f32 %v210, %v437
    %v457 = vmul.f32 %v215, %v437
    %v458 = vmul.f32 %v220, %v437
    %v459 = vmul.f32 %v225, %v437
    %v460 = vmul.f32 %v230, %v437
    %v461 = vmul.f32 %v235, %v437
    %v462 = vmul.f32 %v240, %v437
    %v463 = vmul.f32 %v245, %v437
    %v464 = vmul.f32 %v250, %v437
    %v465 = vmul.f32 %v255, %v437
    %v466 = vmul.f32 %v260, %v437
    %v467 = vmul.f32 %v265, %v437
    %v468 = vmul.f32 %v270, %v437
    %v469 = vmul.f32 %v275, %v437
    %v470 = vmul.f32 %v280, %v437
    %v471 = vmul.f32 %v285, %v437
    %v472 = vmul.f32 %v290, %v437
    %v473 = vmul.f32 %v295, %v437
    %v474 = vmul.f32 %v300, %v437
    %v475 = vmul.f32 %v305, %v437
    %v476 = vmul.f32 %v310, %v437
    %v477 = vmul.f32 %v315, %v437
    %v478 = vmul.f32 %v320, %v437
    %v479 = vmul.f32 %v325, %v437
    %v480 = vmul.f32 %v330, %v437
    %v481 = vmul.f32 %v335, %v437
    %v482 = vmul.f32 %v340, %v437
    %v483 = vmul.f32 %v345, %v437
    %v484 = vmul.f32 %v350, %v437
    %v485 = vmul.f32 %v355, %v437
    %v486 = vmul.f32 %v360, %v437
    %v487 = vmul.f32 %v365, %v437
    %v488 = vmul.f32 %v370, %v437
    %v489 = vmul.f32 %v375, %v437
    %v490 = vmul.f32 %v380, %v437
    %v491 = vmul.f32 %v385, %v437
    %v492 = vmul.f32 %v390, %v437
    %v493 = vmul.f32 %v395, %v437
    %v494 = vmul.f32 %v400, %v437
    %v495 = vmul.f32 %v405, %v437
    %v496 = vmul.f32 %v410, %v437
    %v497 = vmul.f32 %v415, %v437
    %v498 = vmul.f32 %v420, %v437
    %v499 = vmul.f32 %v425, %v437
    %v500 = vmul.f32 %v430, %v437
    %v501 = vmul.f32 %v435, %v437
    %502 = vset.pattern.permute.xlu0 5
    %503 = vperm.xlu0 %502, %v53
    %v504 = vpop.permute.xlu0 %503
    %506 = vset.pattern.permute.xlu0 5
    %507 = vperm.xlu0 %506, %v54
    %v508 = vpop.permute.xlu0 %507
    %510 = vset.pattern.permute.xlu0 5
    %511 = vperm.xlu0 %510, %v55
    %v512 = vpop.permute.xlu0 %511
    %514 = vset.pattern.permute.xlu0 5
    %515 = vperm.xlu0 %514, %v56
    %v516 = vpop.permute.xlu0 %515
    %518 = vset.pattern.permute.xlu0 5
    %519 = vperm.xlu0 %518, %v57
    %v520 = vpop.permute.xlu0 %519
    %522 = vset.pattern.permute.xlu0 5
    %523 = vperm.xlu0 %522, %v58
    %v524 = vpop.permute.xlu0 %523
    %526 = vset.pattern.permute.xlu0 5
    %527 = vperm.xlu0 %526, %v59
    %v528 = vpop.permute.xlu0 %527
    %530 = vset.pattern.permute.xlu0 5
    %531 = vperm.xlu0 %530, %v60
    %v532 = vpop.permute.xlu0 %531
    %534 = vset.pattern.permute.xlu0 5
    %535 = vperm.xlu0 %534, %v61
    %v536 = vpop.permute.xlu0 %535
    %538 = vset.pattern.permute.xlu0 5
    %539 = vperm.xlu0 %538, %v62
    %v540 = vpop.permute.xlu0 %539
    %542 = vset.pattern.permute.xlu0 5
    %543 = vperm.xlu0 %542, %v63
    %v544 = vpop.permute.xlu0 %543
    %546 = vset.pattern.permute.xlu0 5
    %547 = vperm.xlu0 %546, %v64
    %v548 = vpop.permute.xlu0 %547
    %550 = vset.pattern.permute.xlu0 5
    %551 = vperm.xlu0 %550, %v65
    %v552 = vpop.permute.xlu0 %551
    %554 = vset.pattern.permute.xlu0 5
    %555 = vperm.xlu0 %554, %v66
    %v556 = vpop.permute.xlu0 %555
    %558 = vset.pattern.permute.xlu0 5
    %559 = vperm.xlu0 %558, %v67
    %v560 = vpop.permute.xlu0 %559
    %562 = vset.pattern.permute.xlu0 5
    %563 = vperm.xlu0 %562, %v68
    %v564 = vpop.permute.xlu0 %563
    %566 = vset.pattern.permute.xlu0 5
    %567 = vperm.xlu0 %566, %v69
    %v568 = vpop.permute.xlu0 %567
    %570 = vset.pattern.permute.xlu0 5
    %571 = vperm.xlu0 %570, %v70
    %v572 = vpop.permute.xlu0 %571
    %574 = vset.pattern.permute.xlu0 5
    %575 = vperm.xlu0 %574, %v71
    %v576 = vpop.permute.xlu0 %575
    %578 = vset.pattern.permute.xlu0 5
    %579 = vperm.xlu0 %578, %v72
    %v580 = vpop.permute.xlu0 %579
    %582 = vset.pattern.permute.xlu0 5
    %583 = vperm.xlu0 %582, %v73
    %v584 = vpop.permute.xlu0 %583
    %586 = vset.pattern.permute.xlu0 5
    %587 = vperm.xlu0 %586, %v74
    %v588 = vpop.permute.xlu0 %587
    %590 = vset.pattern.permute.xlu0 5
    %591 = vperm.xlu0 %590, %v75
    %v592 = vpop.permute.xlu0 %591
    %594 = vset.pattern.permute.xlu0 5
    %595 = vperm.xlu0 %594, %v76
    %v596 = vpop.permute.xlu0 %595
    %598 = vset.pattern.permute.xlu0 5
    %599 = vperm.xlu0 %598, %v77
    %v600 = vpop.permute.xlu0 %599
    %602 = vset.pattern.permute.xlu0 5
    %603 = vperm.xlu0 %602, %v78
    %v604 = vpop.permute.xlu0 %603
    %606 = vset.pattern.permute.xlu0 5
    %607 = vperm.xlu0 %606, %v79
    %v608 = vpop.permute.xlu0 %607
    %610 = vset.pattern.permute.xlu0 5
    %611 = vperm.xlu0 %610, %v80
    %v612 = vpop.permute.xlu0 %611
    %614 = vset.pattern.permute.xlu0 5
    %615 = vperm.xlu0 %614, %v81
    %v616 = vpop.permute.xlu0 %615
    %618 = vset.pattern.permute.xlu0 5
    %619 = vperm.xlu0 %618, %v82
    %v620 = vpop.permute.xlu0 %619
    %622 = vset.pattern.permute.xlu0 5
    %623 = vperm.xlu0 %622, %v83
    %v624 = vpop.permute.xlu0 %623
    %626 = vset.pattern.permute.xlu0 5
    %627 = vperm.xlu0 %626, %v84
    %v628 = vpop.permute.xlu0 %627
    %630 = vset.pattern.permute.xlu0 5
    %631 = vperm.xlu0 %630, %v85
    %v632 = vpop.permute.xlu0 %631
    %634 = vset.pattern.permute.xlu0 5
    %635 = vperm.xlu0 %634, %v86
    %v636 = vpop.permute.xlu0 %635
    %638 = vset.pattern.permute.xlu0 5
    %639 = vperm.xlu0 %638, %v87
    %v640 = vpop.permute.xlu0 %639
    %642 = vset.pattern.permute.xlu0 5
    %643 = vperm.xlu0 %642, %v88
    %v644 = vpop.permute.xlu0 %643
    %646 = vset.pattern.permute.xlu0 5
    %647 = vperm.xlu0 %646, %v89
    %v648 = vpop.permute.xlu0 %647
    %650 = vset.pattern.permute.xlu0 5
    %651 = vperm.xlu0 %650, %v90
    %v652 = vpop.permute.xlu0 %651
    %654 = vset.pattern.permute.xlu0 5
    %655 = vperm.xlu0 %654, %v91
    %v656 = vpop.permute.xlu0 %655
    %658 = vset.pattern.permute.xlu0 5
    %659 = vperm.xlu0 %658, %v92
    %v660 = vpop.permute.xlu0 %659
    %662 = vset.pattern.permute.xlu0 5
    %663 = vperm.xlu0 %662, %v93
    %v664 = vpop.permute.xlu0 %663
    %666 = vset.pattern.permute.xlu0 5
    %667 = vperm.xlu0 %666, %v94
    %v668 = vpop.permute.xlu0 %667
    %670 = vset.pattern.permute.xlu0 5
    %671 = vperm.xlu0 %670, %v95
    %v672 = vpop.permute.xlu0 %671
    %674 = vset.pattern.permute.xlu0 5
    %675 = vperm.xlu0 %674, %v96
    %v676 = vpop.permute.xlu0 %675
    %678 = vset.pattern.permute.xlu0 5
    %679 = vperm.xlu0 %678, %v97
    %v680 = vpop.permute.xlu0 %679
    %682 = vset.pattern.permute.xlu0 5
    %683 = vperm.xlu0 %682, %v98
    %v684 = vpop.permute.xlu0 %683
    %686 = vset.pattern.permute.xlu0 5
    %687 = vperm.xlu0 %686, %v99
    %v688 = vpop.permute.xlu0 %687
    %690 = vset.pattern.permute.xlu0 5
    %691 = vperm.xlu0 %690, %v100
    %v692 = vpop.permute.xlu0 %691
    %694 = vset.pattern.permute.xlu0 5
    %695 = vperm.xlu0 %694, %v101
    %v696 = vpop.permute.xlu0 %695
    %698 = vset.pattern.permute.xlu0 5
    %699 = vperm.xlu0 %698, %v102
    %v700 = vpop.permute.xlu0 %699
    %702 = vset.pattern.permute.xlu0 5
    %703 = vperm.xlu0 %702, %v103
    %v704 = vpop.permute.xlu0 %703
    %706 = vset.pattern.permute.xlu0 5
    %707 = vperm.xlu0 %706, %v104
    %v708 = vpop.permute.xlu0 %707
    %710 = vset.pattern.permute.xlu0 5
    %711 = vperm.xlu0 %710, %v105
    %v712 = vpop.permute.xlu0 %711
    %714 = vset.pattern.permute.xlu0 5
    %715 = vperm.xlu0 %714, %v106
    %v716 = vpop.permute.xlu0 %715
    %718 = vset.pattern.permute.xlu0 5
    %719 = vperm.xlu0 %718, %v107
    %v720 = vpop.permute.xlu0 %719
    %722 = vset.pattern.permute.xlu0 5
    %723 = vperm.xlu0 %722, %v108
    %v724 = vpop.permute.xlu0 %723
    %726 = vset.pattern.permute.xlu0 5
    %727 = vperm.xlu0 %726, %v109
    %v728 = vpop.permute.xlu0 %727
    %730 = vset.pattern.permute.xlu0 5
    %731 = vperm.xlu0 %730, %v110
    %v732 = vpop.permute.xlu0 %731
    %734 = vset.pattern.permute.xlu0 5
    %735 = vperm.xlu0 %734, %v111
    %v736 = vpop.permute.xlu0 %735
    %738 = vset.pattern.permute.xlu0 5
    %739 = vperm.xlu0 %738, %v112
    %v740 = vpop.permute.xlu0 %739
    %742 = vset.pattern.permute.xlu0 5
    %743 = vperm.xlu0 %742, %v113
    %v744 = vpop.permute.xlu0 %743
    %746 = vset.pattern.permute.xlu0 5
    %747 = vperm.xlu0 %746, %v114
    %v748 = vpop.permute.xlu0 %747
    %750 = vset.pattern.permute.xlu0 5
    %751 = vperm.xlu0 %750, %v115
    %v752 = vpop.permute.xlu0 %751
    %754 = vset.pattern.permute.xlu0 5
    %755 = vperm.xlu0 %754, %v116
    %v756 = vpop.permute.xlu0 %755
    %v758 = vperm.slane %v52, 1
    %v759 = vmul.f32 %v504, %v758
    %v760 = vmul.f32 %v508, %v758
    %v761 = vmul.f32 %v512, %v758
    %v762 = vmul.f32 %v516, %v758
    %v763 = vmul.f32 %v520, %v758
    %v764 = vmul.f32 %v524, %v758
    %v765 = vmul.f32 %v528, %v758
    %v766 = vmul.f32 %v532, %v758
    %v767 = vmul.f32 %v536, %v758
    %v768 = vmul.f32 %v540, %v758
    %v769 = vmul.f32 %v544, %v758
    %v770 = vmul.f32 %v548, %v758
    %v771 = vmul.f32 %v552, %v758
    %v772 = vmul.f32 %v556, %v758
    %v773 = vmul.f32 %v560, %v758
    %v774 = vmul.f32 %v564, %v758
    %v775 = vmul.f32 %v568, %v758
    %v776 = vmul.f32 %v572, %v758
    %v777 = vmul.f32 %v576, %v758
    %v778 = vmul.f32 %v580, %v758
    %v779 = vmul.f32 %v584, %v758
    %v780 = vmul.f32 %v588, %v758
    %v781 = vmul.f32 %v592, %v758
    %v782 = vmul.f32 %v596, %v758
    %v783 = vmul.f32 %v600, %v758
    %v784 = vmul.f32 %v604, %v758
    %v785 = vmul.f32 %v608, %v758
    %v786 = vmul.f32 %v612, %v758
    %v787 = vmul.f32 %v616, %v758
    %v788 = vmul.f32 %v620, %v758
    %v789 = vmul.f32 %v624, %v758
    %v790 = vmul.f32 %v628, %v758
    %v791 = vmul.f32 %v632, %v758
    %v792 = vmul.f32 %v636, %v758
    %v793 = vmul.f32 %v640, %v758
    %v794 = vmul.f32 %v644, %v758
    %v795 = vmul.f32 %v648, %v758
    %v796 = vmul.f32 %v652, %v758
    %v797 = vmul.f32 %v656, %v758
    %v798 = vmul.f32 %v660, %v758
    %v799 = vmul.f32 %v664, %v758
    %v800 = vmul.f32 %v668, %v758
    %v801 = vmul.f32 %v672, %v758
    %v802 = vmul.f32 %v676, %v758
    %v803 = vmul.f32 %v680, %v758
    %v804 = vmul.f32 %v684, %v758
    %v805 = vmul.f32 %v688, %v758
    %v806 = vmul.f32 %v692, %v758
    %v807 = vmul.f32 %v696, %v758
    %v808 = vmul.f32 %v700, %v758
    %v809 = vmul.f32 %v704, %v758
    %v810 = vmul.f32 %v708, %v758
    %v811 = vmul.f32 %v712, %v758
    %v812 = vmul.f32 %v716, %v758
    %v813 = vmul.f32 %v720, %v758
    %v814 = vmul.f32 %v724, %v758
    %v815 = vmul.f32 %v728, %v758
    %v816 = vmul.f32 %v732, %v758
    %v817 = vmul.f32 %v736, %v758
    %v818 = vmul.f32 %v740, %v758
    %v819 = vmul.f32 %v744, %v758
    %v820 = vmul.f32 %v748, %v758
    %v821 = vmul.f32 %v752, %v758
    %v822 = vmul.f32 %v756, %v758
    %v823 = vadd.f32 %v438, %v759
    %v824 = vadd.f32 %v439, %v760
    %v825 = vadd.f32 %v440, %v761
    %v826 = vadd.f32 %v441, %v762
    %v827 = vadd.f32 %v442, %v763
    %v828 = vadd.f32 %v443, %v764
    %v829 = vadd.f32 %v444, %v765
    %v830 = vadd.f32 %v445, %v766
    %v831 = vadd.f32 %v446, %v767
    %v832 = vadd.f32 %v447, %v768
    %v833 = vadd.f32 %v448, %v769
    %v834 = vadd.f32 %v449, %v770
    %v835 = vadd.f32 %v450, %v771
    %v836 = vadd.f32 %v451, %v772
    %v837 = vadd.f32 %v452, %v773
    %v838 = vadd.f32 %v453, %v774
    %v839 = vadd.f32 %v454, %v775
    %v840 = vadd.f32 %v455, %v776
    %v841 = vadd.f32 %v456, %v777
    %v842 = vadd.f32 %v457, %v778
    %v843 = vadd.f32 %v458, %v779
    %v844 = vadd.f32 %v459, %v780
    %v845 = vadd.f32 %v460, %v781
    %v846 = vadd.f32 %v461, %v782
    %v847 = vadd.f32 %v462, %v783
    %v848 = vadd.f32 %v463, %v784
    %v849 = vadd.f32 %v464, %v785
    %v850 = vadd.f32 %v465, %v786
    %v851 = vadd.f32 %v466, %v787
    %v852 = vadd.f32 %v467, %v788
    %v853 = vadd.f32 %v468, %v789
    %v854 = vadd.f32 %v469, %v790
    %v855 = vadd.f32 %v470, %v791
    %v856 = vadd.f32 %v471, %v792
    %v857 = vadd.f32 %v472, %v793
    %v858 = vadd.f32 %v473, %v794
    %v859 = vadd.f32 %v474, %v795
    %v860 = vadd.f32 %v475, %v796
    %v861 = vadd.f32 %v476, %v797
    %v862 = vadd.f32 %v477, %v798
    %v863 = vadd.f32 %v478, %v799
    %v864 = vadd.f32 %v479, %v800
    %v865 = vadd.f32 %v480, %v801
    %v866 = vadd.f32 %v481, %v802
    %v867 = vadd.f32 %v482, %v803
    %v868 = vadd.f32 %v483, %v804
    %v869 = vadd.f32 %v484, %v805
    %v870 = vadd.f32 %v485, %v806
    %v871 = vadd.f32 %v486, %v807
    %v872 = vadd.f32 %v487, %v808
    %v873 = vadd.f32 %v488, %v809
    %v874 = vadd.f32 %v489, %v810
    %v875 = vadd.f32 %v490, %v811
    %v876 = vadd.f32 %v491, %v812
    %v877 = vadd.f32 %v492, %v813
    %v878 = vadd.f32 %v493, %v814
    %v879 = vadd.f32 %v494, %v815
    %v880 = vadd.f32 %v495, %v816
    %v881 = vadd.f32 %v496, %v817
    %v882 = vadd.f32 %v497, %v818
    %v883 = vadd.f32 %v498, %v819
    %v884 = vadd.f32 %v499, %v820
    %v885 = vadd.f32 %v500, %v821
    %v886 = vadd.f32 %v501, %v822
    %887 = vset.pattern.permute.xlu0 0
    %888 = vperm.xlu0 %887, %v53
    %v889 = vpop.permute.xlu0 %888
    %891 = vset.pattern.permute.xlu0 0
    %892 = vperm.xlu0 %891, %v54
    %v893 = vpop.permute.xlu0 %892
    %895 = vset.pattern.permute.xlu0 0
    %896 = vperm.xlu0 %895, %v55
    %v897 = vpop.permute.xlu0 %896
    %899 = vset.pattern.permute.xlu0 0
    %900 = vperm.xlu0 %899, %v56
    %v901 = vpop.permute.xlu0 %900
    %903 = vset.pattern.permute.xlu0 0
    %904 = vperm.xlu0 %903, %v57
    %v905 = vpop.permute.xlu0 %904
    %907 = vset.pattern.permute.xlu0 0
    %908 = vperm.xlu0 %907, %v58
    %v909 = vpop.permute.xlu0 %908
    %911 = vset.pattern.permute.xlu0 0
    %912 = vperm.xlu0 %911, %v59
    %v913 = vpop.permute.xlu0 %912
    %915 = vset.pattern.permute.xlu0 0
    %916 = vperm.xlu0 %915, %v60
    %v917 = vpop.permute.xlu0 %916
    %919 = vset.pattern.permute.xlu0 0
    %920 = vperm.xlu0 %919, %v61
    %v921 = vpop.permute.xlu0 %920
    %923 = vset.pattern.permute.xlu0 0
    %924 = vperm.xlu0 %923, %v62
    %v925 = vpop.permute.xlu0 %924
    %927 = vset.pattern.permute.xlu0 0
    %928 = vperm.xlu0 %927, %v63
    %v929 = vpop.permute.xlu0 %928
    %931 = vset.pattern.permute.xlu0 0
    %932 = vperm.xlu0 %931, %v64
    %v933 = vpop.permute.xlu0 %932
    %935 = vset.pattern.permute.xlu0 0
    %936 = vperm.xlu0 %935, %v65
    %v937 = vpop.permute.xlu0 %936
    %939 = vset.pattern.permute.xlu0 0
    %940 = vperm.xlu0 %939, %v66
    %v941 = vpop.permute.xlu0 %940
    %943 = vset.pattern.permute.xlu0 0
    %944 = vperm.xlu0 %943, %v67
    %v945 = vpop.permute.xlu0 %944
    %947 = vset.pattern.permute.xlu0 0
    %948 = vperm.xlu0 %947, %v68
    %v949 = vpop.permute.xlu0 %948
    %951 = vset.pattern.permute.xlu0 0
    %952 = vperm.xlu0 %951, %v69
    %v953 = vpop.permute.xlu0 %952
    %955 = vset.pattern.permute.xlu0 0
    %956 = vperm.xlu0 %955, %v70
    %v957 = vpop.permute.xlu0 %956
    %959 = vset.pattern.permute.xlu0 0
    %960 = vperm.xlu0 %959, %v71
    %v961 = vpop.permute.xlu0 %960
    %963 = vset.pattern.permute.xlu0 0
    %964 = vperm.xlu0 %963, %v72
    %v965 = vpop.permute.xlu0 %964
    %967 = vset.pattern.permute.xlu0 0
    %968 = vperm.xlu0 %967, %v73
    %v969 = vpop.permute.xlu0 %968
    %971 = vset.pattern.permute.xlu0 0
    %972 = vperm.xlu0 %971, %v74
    %v973 = vpop.permute.xlu0 %972
    %975 = vset.pattern.permute.xlu0 0
    %976 = vperm.xlu0 %975, %v75
    %v977 = vpop.permute.xlu0 %976
    %979 = vset.pattern.permute.xlu0 0
    %980 = vperm.xlu0 %979, %v76
    %v981 = vpop.permute.xlu0 %980
    %983 = vset.pattern.permute.xlu0 0
    %984 = vperm.xlu0 %983, %v77
    %v985 = vpop.permute.xlu0 %984
    %987 = vset.pattern.permute.xlu0 0
    %988 = vperm.xlu0 %987, %v78
    %v989 = vpop.permute.xlu0 %988
    %991 = vset.pattern.permute.xlu0 0
    %992 = vperm.xlu0 %991, %v79
    %v993 = vpop.permute.xlu0 %992
    %995 = vset.pattern.permute.xlu0 0
    %996 = vperm.xlu0 %995, %v80
    %v997 = vpop.permute.xlu0 %996
    %999 = vset.pattern.permute.xlu0 0
    %1000 = vperm.xlu0 %999, %v81
    %v1001 = vpop.permute.xlu0 %1000
    %1003 = vset.pattern.permute.xlu0 0
    %1004 = vperm.xlu0 %1003, %v82
    %v1005 = vpop.permute.xlu0 %1004
    %1007 = vset.pattern.permute.xlu0 0
    %1008 = vperm.xlu0 %1007, %v83
    %v1009 = vpop.permute.xlu0 %1008
    %1011 = vset.pattern.permute.xlu0 0
    %1012 = vperm.xlu0 %1011, %v84
    %v1013 = vpop.permute.xlu0 %1012
    %1015 = vset.pattern.permute.xlu0 0
    %1016 = vperm.xlu0 %1015, %v85
    %v1017 = vpop.permute.xlu0 %1016
    %1019 = vset.pattern.permute.xlu0 0
    %1020 = vperm.xlu0 %1019, %v86
    %v1021 = vpop.permute.xlu0 %1020
    %1023 = vset.pattern.permute.xlu0 0
    %1024 = vperm.xlu0 %1023, %v87
    %v1025 = vpop.permute.xlu0 %1024
    %1027 = vset.pattern.permute.xlu0 0
    %1028 = vperm.xlu0 %1027, %v88
    %v1029 = vpop.permute.xlu0 %1028
    %1031 = vset.pattern.permute.xlu0 0
    %1032 = vperm.xlu0 %1031, %v89
    %v1033 = vpop.permute.xlu0 %1032
    %1035 = vset.pattern.permute.xlu0 0
    %1036 = vperm.xlu0 %1035, %v90
    %v1037 = vpop.permute.xlu0 %1036
    %1039 = vset.pattern.permute.xlu0 0
    %1040 = vperm.xlu0 %1039, %v91
    %v1041 = vpop.permute.xlu0 %1040
    %1043 = vset.pattern.permute.xlu0 0
    %1044 = vperm.xlu0 %1043, %v92
    %v1045 = vpop.permute.xlu0 %1044
    %1047 = vset.pattern.permute.xlu0 0
    %1048 = vperm.xlu0 %1047, %v93
    %v1049 = vpop.permute.xlu0 %1048
    %1051 = vset.pattern.permute.xlu0 0
    %1052 = vperm.xlu0 %1051, %v94
    %v1053 = vpop.permute.xlu0 %1052
    %1055 = vset.pattern.permute.xlu0 0
    %1056 = vperm.xlu0 %1055, %v95
    %v1057 = vpop.permute.xlu0 %1056
    %1059 = vset.pattern.permute.xlu0 0
    %1060 = vperm.xlu0 %1059, %v96
    %v1061 = vpop.permute.xlu0 %1060
    %1063 = vset.pattern.permute.xlu0 0
    %1064 = vperm.xlu0 %1063, %v97
    %v1065 = vpop.permute.xlu0 %1064
    %1067 = vset.pattern.permute.xlu0 0
    %1068 = vperm.xlu0 %1067, %v98
    %v1069 = vpop.permute.xlu0 %1068
    %1071 = vset.pattern.permute.xlu0 0
    %1072 = vperm.xlu0 %1071, %v99
    %v1073 = vpop.permute.xlu0 %1072
    %1075 = vset.pattern.permute.xlu0 0
    %1076 = vperm.xlu0 %1075, %v100
    %v1077 = vpop.permute.xlu0 %1076
    %1079 = vset.pattern.permute.xlu0 0
    %1080 = vperm.xlu0 %1079, %v101
    %v1081 = vpop.permute.xlu0 %1080
    %1083 = vset.pattern.permute.xlu0 0
    %1084 = vperm.xlu0 %1083, %v102
    %v1085 = vpop.permute.xlu0 %1084
    %1087 = vset.pattern.permute.xlu0 0
    %1088 = vperm.xlu0 %1087, %v103
    %v1089 = vpop.permute.xlu0 %1088
    %1091 = vset.pattern.permute.xlu0 0
    %1092 = vperm.xlu0 %1091, %v104
    %v1093 = vpop.permute.xlu0 %1092
    %1095 = vset.pattern.permute.xlu0 0
    %1096 = vperm.xlu0 %1095, %v105
    %v1097 = vpop.permute.xlu0 %1096
    %1099 = vset.pattern.permute.xlu0 0
    %1100 = vperm.xlu0 %1099, %v106
    %v1101 = vpop.permute.xlu0 %1100
    %1103 = vset.pattern.permute.xlu0 0
    %1104 = vperm.xlu0 %1103, %v107
    %v1105 = vpop.permute.xlu0 %1104
    %1107 = vset.pattern.permute.xlu0 0
    %1108 = vperm.xlu0 %1107, %v108
    %v1109 = vpop.permute.xlu0 %1108
    %1111 = vset.pattern.permute.xlu0 0
    %1112 = vperm.xlu0 %1111, %v109
    %v1113 = vpop.permute.xlu0 %1112
    %1115 = vset.pattern.permute.xlu0 0
    %1116 = vperm.xlu0 %1115, %v110
    %v1117 = vpop.permute.xlu0 %1116
    %1119 = vset.pattern.permute.xlu0 0
    %1120 = vperm.xlu0 %1119, %v111
    %v1121 = vpop.permute.xlu0 %1120
    %1123 = vset.pattern.permute.xlu0 0
    %1124 = vperm.xlu0 %1123, %v112
    %v1125 = vpop.permute.xlu0 %1124
    %1127 = vset.pattern.permute.xlu0 0
    %1128 = vperm.xlu0 %1127, %v113
    %v1129 = vpop.permute.xlu0 %1128
    %1131 = vset.pattern.permute.xlu0 0
    %1132 = vperm.xlu0 %1131, %v114
    %v1133 = vpop.permute.xlu0 %1132
    %1135 = vset.pattern.permute.xlu0 0
    %1136 = vperm.xlu0 %1135, %v115
    %v1137 = vpop.permute.xlu0 %1136
    %1139 = vset.pattern.permute.xlu0 0
    %1140 = vperm.xlu0 %1139, %v116
    %v1141 = vpop.permute.xlu0 %1140
    %v1143 = vadd.f32 %v823, %v889
    %v1144 = vadd.f32 %v824, %v893
    %v1145 = vadd.f32 %v825, %v897
    %v1146 = vadd.f32 %v826, %v901
    %v1147 = vadd.f32 %v827, %v905
    %v1148 = vadd.f32 %v828, %v909
    %v1149 = vadd.f32 %v829, %v913
    %v1150 = vadd.f32 %v830, %v917
    %v1151 = vadd.f32 %v831, %v921
    %v1152 = vadd.f32 %v832, %v925
    %v1153 = vadd.f32 %v833, %v929
    %v1154 = vadd.f32 %v834, %v933
    %v1155 = vadd.f32 %v835, %v937
    %v1156 = vadd.f32 %v836, %v941
    %v1157 = vadd.f32 %v837, %v945
    %v1158 = vadd.f32 %v838, %v949
    %v1159 = vadd.f32 %v839, %v953
    %v1160 = vadd.f32 %v840, %v957
    %v1161 = vadd.f32 %v841, %v961
    %v1162 = vadd.f32 %v842, %v965
    %v1163 = vadd.f32 %v843, %v969
    %v1164 = vadd.f32 %v844, %v973
    %v1165 = vadd.f32 %v845, %v977
    %v1166 = vadd.f32 %v846, %v981
    %v1167 = vadd.f32 %v847, %v985
    %v1168 = vadd.f32 %v848, %v989
    %v1169 = vadd.f32 %v849, %v993
    %v1170 = vadd.f32 %v850, %v997
    %v1171 = vadd.f32 %v851, %v1001
    %v1172 = vadd.f32 %v852, %v1005
    %v1173 = vadd.f32 %v853, %v1009
    %v1174 = vadd.f32 %v854, %v1013
    %v1175 = vadd.f32 %v855, %v1017
    %v1176 = vadd.f32 %v856, %v1021
    %v1177 = vadd.f32 %v857, %v1025
    %v1178 = vadd.f32 %v858, %v1029
    %v1179 = vadd.f32 %v859, %v1033
    %v1180 = vadd.f32 %v860, %v1037
    %v1181 = vadd.f32 %v861, %v1041
    %v1182 = vadd.f32 %v862, %v1045
    %v1183 = vadd.f32 %v863, %v1049
    %v1184 = vadd.f32 %v864, %v1053
    %v1185 = vadd.f32 %v865, %v1057
    %v1186 = vadd.f32 %v866, %v1061
    %v1187 = vadd.f32 %v867, %v1065
    %v1188 = vadd.f32 %v868, %v1069
    %v1189 = vadd.f32 %v869, %v1073
    %v1190 = vadd.f32 %v870, %v1077
    %v1191 = vadd.f32 %v871, %v1081
    %v1192 = vadd.f32 %v872, %v1085
    %v1193 = vadd.f32 %v873, %v1089
    %v1194 = vadd.f32 %v874, %v1093
    %v1195 = vadd.f32 %v875, %v1097
    %v1196 = vadd.f32 %v876, %v1101
    %v1197 = vadd.f32 %v877, %v1105
    %v1198 = vadd.f32 %v878, %v1109
    %v1199 = vadd.f32 %v879, %v1113
    %v1200 = vadd.f32 %v880, %v1117
    %v1201 = vadd.f32 %v881, %v1121
    %v1202 = vadd.f32 %v882, %v1125
    %v1203 = vadd.f32 %v883, %v1129
    %v1204 = vadd.f32 %v884, %v1133
    %v1205 = vadd.f32 %v885, %v1137
    %v1206 = vadd.f32 %v886, %v1141
    %v1207 = vmax.f32 %v1143, 0.0
    %v1208 = vmax.f32 %v1144, 0.0
    %v1209 = vmax.f32 %v1145, 0.0
    %v1210 = vmax.f32 %v1146, 0.0
    %v1211 = vmax.f32 %v1147, 0.0
    %v1212 = vmax.f32 %v1148, 0.0
    %v1213 = vmax.f32 %v1149, 0.0
    %v1214 = vmax.f32 %v1150, 0.0
    %v1215 = vmax.f32 %v1151, 0.0
    %v1216 = vmax.f32 %v1152, 0.0
    %v1217 = vmax.f32 %v1153, 0.0
    %v1218 = vmax.f32 %v1154, 0.0
    %v1219 = vmax.f32 %v1155, 0.0
    %v1220 = vmax.f32 %v1156, 0.0
    %v1221 = vmax.f32 %v1157, 0.0
    %v1222 = vmax.f32 %v1158, 0.0
    %v1223 = vmax.f32 %v1159, 0.0
    %v1224 = vmax.f32 %v1160, 0.0
    %v1225 = vmax.f32 %v1161, 0.0
    %v1226 = vmax.f32 %v1162, 0.0
    %v1227 = vmax.f32 %v1163, 0.0
    %v1228 = vmax.f32 %v1164, 0.0
    %v1229 = vmax.f32 %v1165, 0.0
    %v1230 = vmax.f32 %v1166, 0.0
    %v1231 = vmax.f32 %v1167, 0.0
    %v1232 = vmax.f32 %v1168, 0.0
    %v1233 = vmax.f32 %v1169, 0.0
    %v1234 = vmax.f32 %v1170, 0.0
    %v1235 = vmax.f32 %v1171, 0.0
    %v1236 = vmax.f32 %v1172, 0.0
    %v1237 = vmax.f32 %v1173, 0.0
    %v1238 = vmax.f32 %v1174, 0.0
    %v1239 = vmax.f32 %v1175, 0.0
    %v1240 = vmax.f32 %v1176, 0.0
    %v1241 = vmax.f32 %v1177, 0.0
    %v1242 = vmax.f32 %v1178, 0.0
    %v1243 = vmax.f32 %v1179, 0.0
    %v1244 = vmax.f32 %v1180, 0.0
    %v1245 = vmax.f32 %v1181, 0.0
    %v1246 = vmax.f32 %v1182, 0.0
    %v1247 = vmax.f32 %v1183, 0.0
    %v1248 = vmax.f32 %v1184, 0.0
    %v1249 = vmax.f32 %v1185, 0.0
    %v1250 = vmax.f32 %v1186, 0.0
    %v1251 = vmax.f32 %v1187, 0.0
    %v1252 = vmax.f32 %v1188, 0.0
    %v1253 = vmax.f32 %v1189, 0.0
    %v1254 = vmax.f32 %v1190, 0.0
    %v1255 = vmax.f32 %v1191, 0.0
    %v1256 = vmax.f32 %v1192, 0.0
    %v1257 = vmax.f32 %v1193, 0.0
    %v1258 = vmax.f32 %v1194, 0.0
    %v1259 = vmax.f32 %v1195, 0.0
    %v1260 = vmax.f32 %v1196, 0.0
    %v1261 = vmax.f32 %v1197, 0.0
    %v1262 = vmax.f32 %v1198, 0.0
    %v1263 = vmax.f32 %v1199, 0.0
    %v1264 = vmax.f32 %v1200, 0.0
    %v1265 = vmax.f32 %v1201, 0.0
    %v1266 = vmax.f32 %v1202, 0.0
    %v1267 = vmax.f32 %v1203, 0.0
    %v1268 = vmax.f32 %v1204, 0.0
    %v1269 = vmax.f32 %v1205, 0.0
    %v1270 = vmax.f32 %v1206, 0.0
    %v1271 = vld [vmem:[%s1] sm:$0xff]
    %v1272 = vld [vmem:[%s1 + $0x8] sm:$0xff]
    %v1273 = vld [vmem:[%s1 + $0x10] sm:$0xff]
    %v1274 = vld [vmem:[%s1 + $0x18] sm:$0xff]
    %v1275 = vld [vmem:[%s1 + $0x20] sm:$0xff]
    %v1276 = vld [vmem:[%s1 + $0x28] sm:$0xff]
    %v1277 = vld [vmem:[%s1 + $0x30] sm:$0xff]
    %v1278 = vld [vmem:[%s1 + $0x38] sm:$0xff]
    %v1279 = vld [vmem:[%s1 + $0x40] sm:$0xff]
    %v1280 = vld [vmem:[%s1 + $0x48] sm:$0xff]
    %v1281 = vld [vmem:[%s1 + $0x50] sm:$0xff]
    %v1282 = vld [vmem:[%s1 + $0x58] sm:$0xff]
    %v1283 = vld [vmem:[%s1 + $0x60] sm:$0xff]
    %v1284 = vld [vmem:[%s1 + $0x68] sm:$0xff]
    %v1285 = vld [vmem:[%s1 + $0x70] sm:$0xff]
    %v1286 = vld [vmem:[%s1 + $0x78] sm:$0xff]
    %v1287 = vld [vmem:[%s1 + $0x80] sm:$0xff]
    %v1288 = vld [vmem:[%s1 + $0x88] sm:$0xff]
    %v1289 = vld [vmem:[%s1 + $0x90] sm:$0xff]
    %v1290 = vld [vmem:[%s1 + $0x98] sm:$0xff]
    %v1291 = vld [vmem:[%s1 + $0xa0] sm:$0xff]
    %v1292 = vld [vmem:[%s1 + $0xa8] sm:$0xff]
    %v1293 = vld [vmem:[%s1 + $0xb0] sm:$0xff]
    %v1294 = vld [vmem:[%s1 + $0xb8] sm:$0xff]
    %v1295 = vld [vmem:[%s1 + $0xc0] sm:$0xff]
    %v1296 = vld [vmem:[%s1 + $0xc8] sm:$0xff]
    %v1297 = vld [vmem:[%s1 + $0xd0] sm:$0xff]
    %v1298 = vld [vmem:[%s1 + $0xd8] sm:$0xff]
    %v1299 = vld [vmem:[%s1 + $0xe0] sm:$0xff]
    %v1300 = vld [vmem:[%s1 + $0xe8] sm:$0xff]
    %v1301 = vld [vmem:[%s1 + $0xf0] sm:$0xff]
    %v1302 = vld [vmem:[%s1 + $0xf8] sm:$0xff]
    %v1303 = vld [vmem:[%s1 + $0x100] sm:$0xff]
    %v1304 = vld [vmem:[%s1 + $0x108] sm:$0xff]
    %v1305 = vld [vmem:[%s1 + $0x110] sm:$0xff]
    %v1306 = vld [vmem:[%s1 + $0x118] sm:$0xff]
    %v1307 = vld [vmem:[%s1 + $0x120] sm:$0xff]
    %v1308 = vld [vmem:[%s1 + $0x128] sm:$0xff]
    %v1309 = vld [vmem:[%s1 + $0x130] sm:$0xff]
    %v1310 = vld [vmem:[%s1 + $0x138] sm:$0xff]
    %v1311 = vld [vmem:[%s1 + $0x140] sm:$0xff]
    %v1312 = vld [vmem:[%s1 + $0x148] sm:$0xff]
    %v1313 = vld [vmem:[%s1 + $0x150] sm:$0xff]
    %v1314 = vld [vmem:[%s1 + $0x158] sm:$0xff]
    %v1315 = vld [vmem:[%s1 + $0x160] sm:$0xff]
    %v1316 = vld [vmem:[%s1 + $0x168] sm:$0xff]
    %v1317 = vld [vmem:[%s1 + $0x170] sm:$0xff]
    %v1318 = vld [vmem:[%s1 + $0x178] sm:$0xff]
    %v1319 = vld [vmem:[%s1 + $0x180] sm:$0xff]
    %v1320 = vld [vmem:[%s1 + $0x188] sm:$0xff]
    %v1321 = vld [vmem:[%s1 + $0x190] sm:$0xff]
    %v1322 = vld [vmem:[%s1 + $0x198] sm:$0xff]
    %v1323 = vld [vmem:[%s1 + $0x1a0] sm:$0xff]
    %v1324 = vld [vmem:[%s1 + $0x1a8] sm:$0xff]
    %v1325 = vld [vmem:[%s1 + $0x1b0] sm:$0xff]
    %v1326 = vld [vmem:[%s1 + $0x1b8] sm:$0xff]
    %v1327 = vld [vmem:[%s1 + $0x1c0] sm:$0xff]
    %v1328 = vld [vmem:[%s1 + $0x1c8] sm:$0xff]
    %v1329 = vld [vmem:[%s1 + $0x1d0] sm:$0xff]
    %v1330 = vld [vmem:[%s1 + $0x1d8] sm:$0xff]
    %v1331 = vld [vmem:[%s1 + $0x1e0] sm:$0xff]
    %v1332 = vld [vmem:[%s1 + $0x1e8] sm:$0xff]
    %v1333 = vld [vmem:[%s1 + $0x1f0] sm:$0xff]
    %v1334 = vld [vmem:[%s1 + $0x1f8] sm:$0xff]
    %v1335 = vpack.c.bf16 %v1208, %v1207
    %v1336 = vpack.c.bf16 %v1210, %v1209
    %v1337 = vpack.c.bf16 %v1212, %v1211
    %v1338 = vpack.c.bf16 %v1214, %v1213
    %v1339 = vpack.c.bf16 %v1216, %v1215
    %v1340 = vpack.c.bf16 %v1218, %v1217
    %v1341 = vpack.c.bf16 %v1220, %v1219
    %v1342 = vpack.c.bf16 %v1222, %v1221
    %v1343 = vpack.c.bf16 %v1224, %v1223
    %v1344 = vpack.c.bf16 %v1226, %v1225
    %v1345 = vpack.c.bf16 %v1228, %v1227
    %v1346 = vpack.c.bf16 %v1230, %v1229
    %v1347 = vpack.c.bf16 %v1232, %v1231
    %v1348 = vpack.c.bf16 %v1234, %v1233
    %v1349 = vpack.c.bf16 %v1236, %v1235
    %v1350 = vpack.c.bf16 %v1238, %v1237
    %1351 = vset.pattern.permute.xlu0 1
    %1352 = vperm.xlu0 %1351, %v53
    %v1353 = vpop.permute.xlu0 %1352
    %1355 = vset.pattern.permute.xlu0 1
    %1356 = vperm.xlu0 %1355, %v54
    %v1357 = vpop.permute.xlu0 %1356
    %1359 = vset.pattern.permute.xlu0 1
    %1360 = vperm.xlu0 %1359, %v55
    %v1361 = vpop.permute.xlu0 %1360
    %1363 = vset.pattern.permute.xlu0 1
    %1364 = vperm.xlu0 %1363, %v56
    %v1365 = vpop.permute.xlu0 %1364
    %1367 = vset.pattern.permute.xlu0 1
    %1368 = vperm.xlu0 %1367, %v57
    %v1369 = vpop.permute.xlu0 %1368
    %1371 = vset.pattern.permute.xlu0 1
    %1372 = vperm.xlu0 %1371, %v58
    %v1373 = vpop.permute.xlu0 %1372
    %1375 = vset.pattern.permute.xlu0 1
    %1376 = vperm.xlu0 %1375, %v59
    %v1377 = vpop.permute.xlu0 %1376
    %1379 = vset.pattern.permute.xlu0 1
    %1380 = vperm.xlu0 %1379, %v60
    %v1381 = vpop.permute.xlu0 %1380
    %1383 = vset.pattern.permute.xlu0 1
    %1384 = vperm.xlu0 %1383, %v61
    %v1385 = vpop.permute.xlu0 %1384
    %1387 = vset.pattern.permute.xlu0 1
    %1388 = vperm.xlu0 %1387, %v62
    %v1389 = vpop.permute.xlu0 %1388
    %1391 = vset.pattern.permute.xlu0 1
    %1392 = vperm.xlu0 %1391, %v63
    %v1393 = vpop.permute.xlu0 %1392
    %1395 = vset.pattern.permute.xlu0 1
    %1396 = vperm.xlu0 %1395, %v64
    %v1397 = vpop.permute.xlu0 %1396
    %1399 = vset.pattern.permute.xlu0 1
    %1400 = vperm.xlu0 %1399, %v65
    %v1401 = vpop.permute.xlu0 %1400
    %1403 = vset.pattern.permute.xlu0 1
    %1404 = vperm.xlu0 %1403, %v66
    %v1405 = vpop.permute.xlu0 %1404
    %1407 = vset.pattern.permute.xlu0 1
    %1408 = vperm.xlu0 %1407, %v67
    %v1409 = vpop.permute.xlu0 %1408
    %1411 = vset.pattern.permute.xlu0 1
    %1412 = vperm.xlu0 %1411, %v68
    %v1413 = vpop.permute.xlu0 %1412
    %1415 = vset.pattern.permute.xlu0 1
    %1416 = vperm.xlu0 %1415, %v69
    %v1417 = vpop.permute.xlu0 %1416
    %1419 = vset.pattern.permute.xlu0 1
    %1420 = vperm.xlu0 %1419, %v70
    %v1421 = vpop.permute.xlu0 %1420
    %1423 = vset.pattern.permute.xlu0 1
    %1424 = vperm.xlu0 %1423, %v71
    %v1425 = vpop.permute.xlu0 %1424
    %1427 = vset.pattern.permute.xlu0 1
    %1428 = vperm.xlu0 %1427, %v72
    %v1429 = vpop.permute.xlu0 %1428
    %1431 = vset.pattern.permute.xlu0 1
    %1432 = vperm.xlu0 %1431, %v73
    %v1433 = vpop.permute.xlu0 %1432
    %1435 = vset.pattern.permute.xlu0 1
    %1436 = vperm.xlu0 %1435, %v74
    %v1437 = vpop.permute.xlu0 %1436
    %1439 = vset.pattern.permute.xlu0 1
    %1440 = vperm.xlu0 %1439, %v75
    %v1441 = vpop.permute.xlu0 %1440
    %1443 = vset.pattern.permute.xlu0 1
    %1444 = vperm.xlu0 %1443, %v76
    %v1445 = vpop.permute.xlu0 %1444
    %1447 = vset.pattern.permute.xlu0 1
    %1448 = vperm.xlu0 %1447, %v77
    %v1449 = vpop.permute.xlu0 %1448
    %1451 = vset.pattern.permute.xlu0 1
    %1452 = vperm.xlu0 %1451, %v78
    %v1453 = vpop.permute.xlu0 %1452
    %1455 = vset.pattern.permute.xlu0 1
    %1456 = vperm.xlu0 %1455, %v79
    %v1457 = vpop.permute.xlu0 %1456
    %1459 = vset.pattern.permute.xlu0 1
    %1460 = vperm.xlu0 %1459, %v80
    %v1461 = vpop.permute.xlu0 %1460
    %1463 = vset.pattern.permute.xlu0 1
    %1464 = vperm.xlu0 %1463, %v81
    %v1465 = vpop.permute.xlu0 %1464
    %1467 = vset.pattern.permute.xlu0 1
    %1468 = vperm.xlu0 %1467, %v82
    %v1469 = vpop.permute.xlu0 %1468
    %1471 = vset.pattern.permute.xlu0 1
    %1472 = vperm.xlu0 %1471, %v83
    %v1473 = vpop.permute.xlu0 %1472
    %1475 = vset.pattern.permute.xlu0 1
    %1476 = vperm.xlu0 %1475, %v84
    %v1477 = vpop.permute.xlu0 %1476
    %1479 = vset.pattern.permute.xlu0 1
    %1480 = vperm.xlu0 %1479, %v85
    %v1481 = vpop.permute.xlu0 %1480
    %1483 = vset.pattern.permute.xlu0 1
    %1484 = vperm.xlu0 %1483, %v86
    %v1485 = vpop.permute.xlu0 %1484
    %1487 = vset.pattern.permute.xlu0 1
    %1488 = vperm.xlu0 %1487, %v87
    %v1489 = vpop.permute.xlu0 %1488
    %1491 = vset.pattern.permute.xlu0 1
    %1492 = vperm.xlu0 %1491, %v88
    %v1493 = vpop.permute.xlu0 %1492
    %1495 = vset.pattern.permute.xlu0 1
    %1496 = vperm.xlu0 %1495, %v89
    %v1497 = vpop.permute.xlu0 %1496
    %1499 = vset.pattern.permute.xlu0 1
    %1500 = vperm.xlu0 %1499, %v90
    %v1501 = vpop.permute.xlu0 %1500
    %1503 = vset.pattern.permute.xlu0 1
    %1504 = vperm.xlu0 %1503, %v91
    %v1505 = vpop.permute.xlu0 %1504
    %1507 = vset.pattern.permute.xlu0 1
    %1508 = vperm.xlu0 %1507, %v92
    %v1509 = vpop.permute.xlu0 %1508
    %1511 = vset.pattern.permute.xlu0 1
    %1512 = vperm.xlu0 %1511, %v93
    %v1513 = vpop.permute.xlu0 %1512
    %1515 = vset.pattern.permute.xlu0 1
    %1516 = vperm.xlu0 %1515, %v94
    %v1517 = vpop.permute.xlu0 %1516
    %1519 = vset.pattern.permute.xlu0 1
    %1520 = vperm.xlu0 %1519, %v95
    %v1521 = vpop.permute.xlu0 %1520
    %1523 = vset.pattern.permute.xlu0 1
    %1524 = vperm.xlu0 %1523, %v96
    %v1525 = vpop.permute.xlu0 %1524
    %1527 = vset.pattern.permute.xlu0 1
    %1528 = vperm.xlu0 %1527, %v97
    %v1529 = vpop.permute.xlu0 %1528
    %1531 = vset.pattern.permute.xlu0 1
    %1532 = vperm.xlu0 %1531, %v98
    %v1533 = vpop.permute.xlu0 %1532
    %1535 = vset.pattern.permute.xlu0 1
    %1536 = vperm.xlu0 %1535, %v99
    %v1537 = vpop.permute.xlu0 %1536
    %1539 = vset.pattern.permute.xlu0 1
    %1540 = vperm.xlu0 %1539, %v100
    %v1541 = vpop.permute.xlu0 %1540
    %1543 = vset.pattern.permute.xlu0 1
    %1544 = vperm.xlu0 %1543, %v101
    %v1545 = vpop.permute.xlu0 %1544
    %1547 = vset.pattern.permute.xlu0 1
    %1548 = vperm.xlu0 %1547, %v102
    %v1549 = vpop.permute.xlu0 %1548
    %1551 = vset.pattern.permute.xlu0 1
    %1552 = vperm.xlu0 %1551, %v103
    %v1553 = vpop.permute.xlu0 %1552
    %1555 = vset.pattern.permute.xlu0 1
    %1556 = vperm.xlu0 %1555, %v104
    %v1557 = vpop.permute.xlu0 %1556
    %1559 = vset.pattern.permute.xlu0 1
    %1560 = vperm.xlu0 %1559, %v105
    %v1561 = vpop.permute.xlu0 %1560
    %1563 = vset.pattern.permute.xlu0 1
    %1564 = vperm.xlu0 %1563, %v106
    %v1565 = vpop.permute.xlu0 %1564
    %1567 = vset.pattern.permute.xlu0 1
    %1568 = vperm.xlu0 %1567, %v107
    %v1569 = vpop.permute.xlu0 %1568
    %1571 = vset.pattern.permute.xlu0 1
    %1572 = vperm.xlu0 %1571, %v108
    %v1573 = vpop.permute.xlu0 %1572
    %1575 = vset.pattern.permute.xlu0 1
    %1576 = vperm.xlu0 %1575, %v109
    %v1577 = vpop.permute.xlu0 %1576
    %1579 = vset.pattern.permute.xlu0 1
    %1580 = vperm.xlu0 %1579, %v110
    %v1581 = vpop.permute.xlu0 %1580
    %1583 = vset.pattern.permute.xlu0 1
    %1584 = vperm.xlu0 %1583, %v111
    %v1585 = vpop.permute.xlu0 %1584
    %1587 = vset.pattern.permute.xlu0 1
    %1588 = vperm.xlu0 %1587, %v112
    %v1589 = vpop.permute.xlu0 %1588
    %1591 = vset.pattern.permute.xlu0 1
    %1592 = vperm.xlu0 %1591, %v113
    %v1593 = vpop.permute.xlu0 %1592
    %1595 = vset.pattern.permute.xlu0 1
    %1596 = vperm.xlu0 %1595, %v114
    %v1597 = vpop.permute.xlu0 %1596
    %1599 = vset.pattern.permute.xlu0 1
    %1600 = vperm.xlu0 %1599, %v115
    %v1601 = vpop.permute.xlu0 %1600
    %1603 = vset.pattern.permute.xlu0 1
    %1604 = vperm.xlu0 %1603, %v116
    %v1605 = vpop.permute.xlu0 %1604
    %v1671 = vunpack.c.l.b16 %v1271
    %v1672 = vunpack.c.h.b16 %v1271
    %v1673 = vunpack.c.l.b16 %v1272
    %v1674 = vunpack.c.h.b16 %v1272
    %v1675 = vunpack.c.l.b16 %v1273
    %v1676 = vunpack.c.h.b16 %v1273
    %v1677 = vunpack.c.l.b16 %v1274
    %v1678 = vunpack.c.h.b16 %v1274
    %v1679 = vunpack.c.l.b16 %v1275
    %v1680 = vunpack.c.h.b16 %v1275
    %v1681 = vunpack.c.l.b16 %v1276
    %v1682 = vunpack.c.h.b16 %v1276
    %v1683 = vunpack.c.l.b16 %v1277
    %v1684 = vunpack.c.h.b16 %v1277
    %v1685 = vunpack.c.l.b16 %v1278
    %v1686 = vunpack.c.h.b16 %v1278
    %v1687 = vunpack.c.l.b16 %v1279
    %v1688 = vunpack.c.h.b16 %v1279
    %v1689 = vunpack.c.l.b16 %v1280
    %v1690 = vunpack.c.h.b16 %v1280
    %v1691 = vunpack.c.l.b16 %v1281
    %v1692 = vunpack.c.h.b16 %v1281
    %v1693 = vunpack.c.l.b16 %v1282
    %v1694 = vunpack.c.h.b16 %v1282
    %v1695 = vunpack.c.l.b16 %v1283
    %v1696 = vunpack.c.h.b16 %v1283
    %v1697 = vunpack.c.l.b16 %v1284
    %v1698 = vunpack.c.h.b16 %v1284
    %v1699 = vunpack.c.l.b16 %v1285
    %v1700 = vunpack.c.h.b16 %v1285
    %v1701 = vunpack.c.l.b16 %v1286
    %v1702 = vunpack.c.h.b16 %v1286
    %v1703 = vunpack.c.l.b16 %v1287
    %v1704 = vunpack.c.h.b16 %v1287
    %v1705 = vunpack.c.l.b16 %v1288
    %v1706 = vunpack.c.h.b16 %v1288
    %v1707 = vunpack.c.l.b16 %v1289
    %v1708 = vunpack.c.h.b16 %v1289
    %v1709 = vunpack.c.l.b16 %v1290
    %v1710 = vunpack.c.h.b16 %v1290
    %v1711 = vunpack.c.l.b16 %v1291
    %v1712 = vunpack.c.h.b16 %v1291
    %v1713 = vunpack.c.l.b16 %v1292
    %v1714 = vunpack.c.h.b16 %v1292
    %v1715 = vunpack.c.l.b16 %v1293
    %v1716 = vunpack.c.h.b16 %v1293
    %v1717 = vunpack.c.l.b16 %v1294
    %v1718 = vunpack.c.h.b16 %v1294
    %v1719 = vunpack.c.l.b16 %v1295
    %v1720 = vunpack.c.h.b16 %v1295
    %v1721 = vunpack.c.l.b16 %v1296
    %v1722 = vunpack.c.h.b16 %v1296
    %v1723 = vunpack.c.l.b16 %v1297
    %v1724 = vunpack.c.h.b16 %v1297
    %v1725 = vunpack.c.l.b16 %v1298
    %v1726 = vunpack.c.h.b16 %v1298
    %v1727 = vunpack.c.l.b16 %v1299
    %v1728 = vunpack.c.h.b16 %v1299
    %v1729 = vunpack.c.l.b16 %v1300
    %v1730 = vunpack.c.h.b16 %v1300
    %v1731 = vunpack.c.l.b16 %v1301
    %v1732 = vunpack.c.h.b16 %v1301
    %v1733 = vunpack.c.l.b16 %v1302
    %v1734 = vunpack.c.h.b16 %v1302
    %v1735 = vunpack.c.l.b16 %v1303
    %v1736 = vunpack.c.h.b16 %v1303
    %v1737 = vunpack.c.l.b16 %v1304
    %v1738 = vunpack.c.h.b16 %v1304
    %v1739 = vunpack.c.l.b16 %v1305
    %v1740 = vunpack.c.h.b16 %v1305
    %v1741 = vunpack.c.l.b16 %v1306
    %v1742 = vunpack.c.h.b16 %v1306
    %v1743 = vunpack.c.l.b16 %v1307
    %v1744 = vunpack.c.h.b16 %v1307
    %v1745 = vunpack.c.l.b16 %v1308
    %v1746 = vunpack.c.h.b16 %v1308
    %v1747 = vunpack.c.l.b16 %v1309
    %v1748 = vunpack.c.h.b16 %v1309
    %v1749 = vunpack.c.l.b16 %v1310
    %v1750 = vunpack.c.h.b16 %v1310
    %v1751 = vunpack.c.l.b16 %v1311
    %v1752 = vunpack.c.h.b16 %v1311
    %v1753 = vunpack.c.l.b16 %v1312
    %v1754 = vunpack.c.h.b16 %v1312
    %v1755 = vunpack.c.l.b16 %v1313
    %v1756 = vunpack.c.h.b16 %v1313
    %v1757 = vunpack.c.l.b16 %v1314
    %v1758 = vunpack.c.h.b16 %v1314
    %v1759 = vunpack.c.l.b16 %v1315
    %v1760 = vunpack.c.h.b16 %v1315
    %v1761 = vunpack.c.l.b16 %v1316
    %v1762 = vunpack.c.h.b16 %v1316
    %v1763 = vunpack.c.l.b16 %v1317
    %v1764 = vunpack.c.h.b16 %v1317
    %v1765 = vunpack.c.l.b16 %v1318
    %v1766 = vunpack.c.h.b16 %v1318
    %v1767 = vunpack.c.l.b16 %v1319
    %v1768 = vunpack.c.h.b16 %v1319
    %v1769 = vunpack.c.l.b16 %v1320
    %v1770 = vunpack.c.h.b16 %v1320
    %v1771 = vunpack.c.l.b16 %v1321
    %v1772 = vunpack.c.h.b16 %v1321
    %v1773 = vunpack.c.l.b16 %v1322
    %v1774 = vunpack.c.h.b16 %v1322
    %v1775 = vunpack.c.l.b16 %v1323
    %v1776 = vunpack.c.h.b16 %v1323
    %v1777 = vunpack.c.l.b16 %v1324
    %v1778 = vunpack.c.h.b16 %v1324
    %v1779 = vunpack.c.l.b16 %v1325
    %v1780 = vunpack.c.h.b16 %v1325
    %v1781 = vunpack.c.l.b16 %v1326
    %v1782 = vunpack.c.h.b16 %v1326
    %v1783 = vunpack.c.l.b16 %v1327
    %v1784 = vunpack.c.h.b16 %v1327
    %v1785 = vunpack.c.l.b16 %v1328
    %v1786 = vunpack.c.h.b16 %v1328
    %v1787 = vunpack.c.l.b16 %v1329
    %v1788 = vunpack.c.h.b16 %v1329
    %v1789 = vunpack.c.l.b16 %v1330
    %v1790 = vunpack.c.h.b16 %v1330
    %v1791 = vunpack.c.l.b16 %v1331
    %v1792 = vunpack.c.h.b16 %v1331
    %v1793 = vunpack.c.l.b16 %v1332
    %v1794 = vunpack.c.h.b16 %v1332
    %v1795 = vunpack.c.l.b16 %v1333
    %v1796 = vunpack.c.h.b16 %v1333
    %v1797 = vunpack.c.l.b16 %v1334
    %v1798 = vunpack.c.h.b16 %v1334
    %v1799 = vpack.c.b16 %v1673, %v1671
    %v1800 = vpack.c.b16 %v1674, %v1672
    %v1801 = vpack.c.b16 %v1677, %v1675
    %v1802 = vpack.c.b16 %v1678, %v1676
    %v1803 = vpack.c.b16 %v1681, %v1679
    %v1804 = vpack.c.b16 %v1682, %v1680
    %v1805 = vpack.c.b16 %v1685, %v1683
    %v1806 = vpack.c.b16 %v1686, %v1684
    %v1807 = vpack.c.b16 %v1689, %v1687
    %v1808 = vpack.c.b16 %v1690, %v1688
    %v1809 = vpack.c.b16 %v1693, %v1691
    %v1810 = vpack.c.b16 %v1694, %v1692
    %v1811 = vpack.c.b16 %v1697, %v1695
    %v1812 = vpack.c.b16 %v1698, %v1696
    %v1813 = vpack.c.b16 %v1701, %v1699
    %v1814 = vpack.c.b16 %v1702, %v1700
    %v1815 = vpack.c.b16 %v1705, %v1703
    %v1816 = vpack.c.b16 %v1706, %v1704
    %v1817 = vpack.c.b16 %v1709, %v1707
    %v1818 = vpack.c.b16 %v1710, %v1708
    %v1819 = vpack.c.b16 %v1713, %v1711
    %v1820 = vpack.c.b16 %v1714, %v1712
    %v1821 = vpack.c.b16 %v1717, %v1715
    %v1822 = vpack.c.b16 %v1718, %v1716
    %v1823 = vpack.c.b16 %v1721, %v1719
    %v1824 = vpack.c.b16 %v1722, %v1720
    %v1825 = vpack.c.b16 %v1725, %v1723
    %v1826 = vpack.c.b16 %v1726, %v1724
    %v1827 = vpack.c.b16 %v1729, %v1727
    %v1828 = vpack.c.b16 %v1730, %v1728
    %v1829 = vpack.c.b16 %v1733, %v1731
    %v1830 = vpack.c.b16 %v1734, %v1732
    %v1831 = vpack.c.b16 %v1737, %v1735
    %v1832 = vpack.c.b16 %v1738, %v1736
    %v1833 = vpack.c.b16 %v1741, %v1739
    %v1834 = vpack.c.b16 %v1742, %v1740
    %v1835 = vpack.c.b16 %v1745, %v1743
    %v1836 = vpack.c.b16 %v1746, %v1744
    %v1837 = vpack.c.b16 %v1749, %v1747
    %v1838 = vpack.c.b16 %v1750, %v1748
    %v1839 = vpack.c.b16 %v1753, %v1751
    %v1840 = vpack.c.b16 %v1754, %v1752
    %v1841 = vpack.c.b16 %v1757, %v1755
    %v1842 = vpack.c.b16 %v1758, %v1756
    %v1843 = vpack.c.b16 %v1761, %v1759
    %v1844 = vpack.c.b16 %v1762, %v1760
    %v1845 = vpack.c.b16 %v1765, %v1763
    %v1846 = vpack.c.b16 %v1766, %v1764
    %v1847 = vpack.c.b16 %v1769, %v1767
    %v1848 = vpack.c.b16 %v1770, %v1768
    %v1849 = vpack.c.b16 %v1773, %v1771
    %v1850 = vpack.c.b16 %v1774, %v1772
    %v1851 = vpack.c.b16 %v1777, %v1775
    %v1852 = vpack.c.b16 %v1778, %v1776
    %v1853 = vpack.c.b16 %v1781, %v1779
    %v1854 = vpack.c.b16 %v1782, %v1780
    %v1855 = vpack.c.b16 %v1785, %v1783
    %v1856 = vpack.c.b16 %v1786, %v1784
    %v1857 = vpack.c.b16 %v1789, %v1787
    %v1858 = vpack.c.b16 %v1790, %v1788
    %v1859 = vpack.c.b16 %v1793, %v1791
    %v1860 = vpack.c.b16 %v1794, %v1792
    %v1861 = vpack.c.b16 %v1797, %v1795
    %v1862 = vpack.c.b16 %v1798, %v1796
    %1927 = vmatpush.bf16.msra.mxu0 %v1342
    %1928 = vmatpush.bf16.msra.mxu0 %v1341
    %1929 = vmatpush.bf16.msra.mxu0 %v1340
    %1930 = vmatpush.bf16.msra.mxu0 %v1339
    %1931 = vmatpush.bf16.msra.mxu0 %v1338
    %1932 = vmatpush.bf16.msra.mxu0 %v1337
    %1933 = vmatpush.bf16.msra.mxu0 %v1336
    %1934 = vmatpush.bf16.msra.mxu0 %v1335
    %1935 = vmatmul.bf16.gmra.mxu0 %v1799
    %v1936 = vpop.f32.mrf.mxu0
    %v1937 = vadd.f32 %v1353, %v1936
    %v1938 = vpop.f32.mrf.mxu0
    %v1939 = vadd.f32 %v1357, %v1938
    %1940 = vmatmul.bf16.gmra.mxu0 %v1801
    %v1941 = vpop.f32.mrf.mxu0
    %v1942 = vadd.f32 %v1361, %v1941
    %v1943 = vpop.f32.mrf.mxu0
    %v1944 = vadd.f32 %v1365, %v1943
    %1945 = vmatmul.bf16.gmra.mxu0 %v1803
    %v1946 = vpop.f32.mrf.mxu0
    %v1947 = vadd.f32 %v1369, %v1946
    %v1948 = vpop.f32.mrf.mxu0
    %v1949 = vadd.f32 %v1373, %v1948
    %1950 = vmatmul.bf16.gmra.mxu0 %v1805
    %v1951 = vpop.f32.mrf.mxu0
    %v1952 = vadd.f32 %v1377, %v1951
    %v1953 = vpop.f32.mrf.mxu0
    %v1954 = vadd.f32 %v1381, %v1953
    %1955 = vmatmul.bf16.gmra.mxu0 %v1807
    %v1956 = vpop.f32.mrf.mxu0
    %v1957 = vadd.f32 %v1385, %v1956
    %v1958 = vpop.f32.mrf.mxu0
    %v1959 = vadd.f32 %v1389, %v1958
    %1960 = vmatmul.bf16.gmra.mxu0 %v1809
    %v1961 = vpop.f32.mrf.mxu0
    %v1962 = vadd.f32 %v1393, %v1961
    %v1963 = vpop.f32.mrf.mxu0
    %v1964 = vadd.f32 %v1397, %v1963
    %1965 = vmatmul.bf16.gmra.mxu0 %v1811
    %v1966 = vpop.f32.mrf.mxu0
    %v1967 = vadd.f32 %v1401, %v1966
    %v1968 = vpop.f32.mrf.mxu0
    %v1969 = vadd.f32 %v1405, %v1968
    %1970 = vmatmul.bf16.gmra.mxu0 %v1813
    %v1971 = vpop.f32.mrf.mxu0
    %v1972 = vadd.f32 %v1409, %v1971
    %v1973 = vpop.f32.mrf.mxu0
    %v1974 = vadd.f32 %v1413, %v1973
    %1975 = vmatmul.bf16.gmra.mxu0 %v1815
    %v1976 = vpop.f32.mrf.mxu0
    %v1977 = vadd.f32 %v1417, %v1976
    %v1978 = vpop.f32.mrf.mxu0
    %v1979 = vadd.f32 %v1421, %v1978
    %1980 = vmatmul.bf16.gmra.mxu0 %v1817
    %v1981 = vpop.f32.mrf.mxu0
    %v1982 = vadd.f32 %v1425, %v1981
    %v1983 = vpop.f32.mrf.mxu0
    %v1984 = vadd.f32 %v1429, %v1983
    %1985 = vmatmul.bf16.gmra.mxu0 %v1819
    %v1986 = vpop.f32.mrf.mxu0
    %v1987 = vadd.f32 %v1433, %v1986
    %v1988 = vpop.f32.mrf.mxu0
    %v1989 = vadd.f32 %v1437, %v1988
    %1990 = vmatmul.bf16.gmra.mxu0 %v1821
    %v1991 = vpop.f32.mrf.mxu0
    %v1992 = vadd.f32 %v1441, %v1991
    %v1993 = vpop.f32.mrf.mxu0
    %v1994 = vadd.f32 %v1445, %v1993
    %1995 = vmatmul.bf16.gmra.mxu0 %v1823
    %v1996 = vpop.f32.mrf.mxu0
    %v1997 = vadd.f32 %v1449, %v1996
    %v1998 = vpop.f32.mrf.mxu0
    %v1999 = vadd.f32 %v1453, %v1998
    %2000 = vmatmul.bf16.gmra.mxu0 %v1825
    %v2001 = vpop.f32.mrf.mxu0
    %v2002 = vadd.f32 %v1457, %v2001
    %v2003 = vpop.f32.mrf.mxu0
    %v2004 = vadd.f32 %v1461, %v2003
    %2005 = vmatmul.bf16.gmra.mxu0 %v1827
    %v2006 = vpop.f32.mrf.mxu0
    %v2007 = vadd.f32 %v1465, %v2006
    %v2008 = vpop.f32.mrf.mxu0
    %v2009 = vadd.f32 %v1469, %v2008
    %2010 = vmatmul.bf16.gmra.mxu0 %v1829
    %v2011 = vpop.f32.mrf.mxu0
    %v2012 = vadd.f32 %v1473, %v2011
    %v2013 = vpop.f32.mrf.mxu0
    %v2014 = vadd.f32 %v1477, %v2013
    %2015 = vmatmul.bf16.gmra.mxu0 %v1831
    %v2016 = vpop.f32.mrf.mxu0
    %v2017 = vadd.f32 %v1481, %v2016
    %v2018 = vpop.f32.mrf.mxu0
    %v2019 = vadd.f32 %v1485, %v2018
    %2020 = vmatmul.bf16.gmra.mxu0 %v1833
    %v2021 = vpop.f32.mrf.mxu0
    %v2022 = vadd.f32 %v1489, %v2021
    %v2023 = vpop.f32.mrf.mxu0
    %v2024 = vadd.f32 %v1493, %v2023
    %2025 = vmatmul.bf16.gmra.mxu0 %v1835
    %v2026 = vpop.f32.mrf.mxu0
    %v2027 = vadd.f32 %v1497, %v2026
    %v2028 = vpop.f32.mrf.mxu0
    %v2029 = vadd.f32 %v1501, %v2028
    %2030 = vmatmul.bf16.gmra.mxu0 %v1837
    %v2031 = vpop.f32.mrf.mxu0
    %v2032 = vadd.f32 %v1505, %v2031
    %v2033 = vpop.f32.mrf.mxu0
    %v2034 = vadd.f32 %v1509, %v2033
    %2035 = vmatmul.bf16.gmra.mxu0 %v1839
    %v2036 = vpop.f32.mrf.mxu0
    %v2037 = vadd.f32 %v1513, %v2036
    %v2038 = vpop.f32.mrf.mxu0
    %v2039 = vadd.f32 %v1517, %v2038
    %2040 = vmatmul.bf16.gmra.mxu0 %v1841
    %v2041 = vpop.f32.mrf.mxu0
    %v2042 = vadd.f32 %v1521, %v2041
    %v2043 = vpop.f32.mrf.mxu0
    %v2044 = vadd.f32 %v1525, %v2043
    %2045 = vmatmul.bf16.gmra.mxu0 %v1843
    %v2046 = vpop.f32.mrf.mxu0
    %v2047 = vadd.f32 %v1529, %v2046
    %v2048 = vpop.f32.mrf.mxu0
    %v2049 = vadd.f32 %v1533, %v2048
    %2050 = vmatmul.bf16.gmra.mxu0 %v1845
    %v2051 = vpop.f32.mrf.mxu0
    %v2052 = vadd.f32 %v1537, %v2051
    %v2053 = vpop.f32.mrf.mxu0
    %v2054 = vadd.f32 %v1541, %v2053
    %2055 = vmatmul.bf16.gmra.mxu0 %v1847
    %v2056 = vpop.f32.mrf.mxu0
    %v2057 = vadd.f32 %v1545, %v2056
    %v2058 = vpop.f32.mrf.mxu0
    %v2059 = vadd.f32 %v1549, %v2058
    %2060 = vmatmul.bf16.gmra.mxu0 %v1849
    %v2061 = vpop.f32.mrf.mxu0
    %v2062 = vadd.f32 %v1553, %v2061
    %v2063 = vpop.f32.mrf.mxu0
    %v2064 = vadd.f32 %v1557, %v2063
    %2065 = vmatmul.bf16.gmra.mxu0 %v1851
    %v2066 = vpop.f32.mrf.mxu0
    %v2067 = vadd.f32 %v1561, %v2066
    %v2068 = vpop.f32.mrf.mxu0
    %v2069 = vadd.f32 %v1565, %v2068
    %2070 = vmatmul.bf16.gmra.mxu0 %v1853
    %v2071 = vpop.f32.mrf.mxu0
    %v2072 = vadd.f32 %v1569, %v2071
    %v2073 = vpop.f32.mrf.mxu0
    %v2074 = vadd.f32 %v1573, %v2073
    %2075 = vmatmul.bf16.gmra.mxu0 %v1855
    %v2076 = vpop.f32.mrf.mxu0
    %v2077 = vadd.f32 %v1577, %v2076
    %v2078 = vpop.f32.mrf.mxu0
    %v2079 = vadd.f32 %v1581, %v2078
    %2080 = vmatmul.bf16.gmra.mxu0 %v1857
    %v2081 = vpop.f32.mrf.mxu0
    %v2082 = vadd.f32 %v1585, %v2081
    %v2083 = vpop.f32.mrf.mxu0
    %v2084 = vadd.f32 %v1589, %v2083
    %2085 = vmatmul.bf16.gmra.mxu0 %v1859
    %v2086 = vpop.f32.mrf.mxu0
    %v2087 = vadd.f32 %v1593, %v2086
    %v2088 = vpop.f32.mrf.mxu0
    %v2089 = vadd.f32 %v1597, %v2088
    %2090 = vmatmul.bf16.gmra.mxu0 %v1861
    %v2091 = vpop.f32.mrf.mxu0
    %v2092 = vadd.f32 %v1601, %v2091
    %v2093 = vpop.f32.mrf.mxu0
    %v2094 = vadd.f32 %v1605, %v2093
    %2095 = vdwg.mxu0
    %2096 = vmatpush.bf16.msra.mxu0 %v1350
    %2097 = vmatpush.bf16.msra.mxu0 %v1349
    %2098 = vmatpush.bf16.msra.mxu0 %v1348
    %2099 = vmatpush.bf16.msra.mxu0 %v1347
    %2100 = vmatpush.bf16.msra.mxu0 %v1346
    %2101 = vmatpush.bf16.msra.mxu0 %v1345
    %2102 = vmatpush.bf16.msra.mxu0 %v1344
    %2103 = vmatpush.bf16.msra.mxu0 %v1343
    %2104 = vmatmul.bf16.gmra.mxu0 %v1800
    %v2105 = vpop.f32.mrf.mxu0
    %v2106 = vadd.f32 %v1937, %v2105
    %v2107 = vpop.f32.mrf.mxu0
    %v2108 = vadd.f32 %v1939, %v2107
    %2109 = vmatmul.bf16.gmra.mxu0 %v1802
    %v2110 = vpop.f32.mrf.mxu0
    %v2111 = vadd.f32 %v1942, %v2110
    %v2112 = vpop.f32.mrf.mxu0
    %v2113 = vadd.f32 %v1944, %v2112
    %2114 = vmatmul.bf16.gmra.mxu0 %v1804
    %v2115 = vpop.f32.mrf.mxu0
    %v2116 = vadd.f32 %v1947, %v2115
    %v2117 = vpop.f32.mrf.mxu0
    %v2118 = vadd.f32 %v1949, %v2117
    %2119 = vmatmul.bf16.gmra.mxu0 %v1806
    %v2120 = vpop.f32.mrf.mxu0
    %v2121 = vadd.f32 %v1952, %v2120
    %v2122 = vpop.f32.mrf.mxu0
    %v2123 = vadd.f32 %v1954, %v2122
    %2124 = vmatmul.bf16.gmra.mxu0 %v1808
    %v2125 = vpop.f32.mrf.mxu0
    %v2126 = vadd.f32 %v1957, %v2125
    %v2127 = vpop.f32.mrf.mxu0
    %v2128 = vadd.f32 %v1959, %v2127
    %2129 = vmatmul.bf16.gmra.mxu0 %v1810
    %v2130 = vpop.f32.mrf.mxu0
    %v2131 = vadd.f32 %v1962, %v2130
    %v2132 = vpop.f32.mrf.mxu0
    %v2133 = vadd.f32 %v1964, %v2132
    %2134 = vmatmul.bf16.gmra.mxu0 %v1812
    %v2135 = vpop.f32.mrf.mxu0
    %v2136 = vadd.f32 %v1967, %v2135
    %v2137 = vpop.f32.mrf.mxu0
    %v2138 = vadd.f32 %v1969, %v2137
    %2139 = vmatmul.bf16.gmra.mxu0 %v1814
    %v2140 = vpop.f32.mrf.mxu0
    %v2141 = vadd.f32 %v1972, %v2140
    %v2142 = vpop.f32.mrf.mxu0
    %v2143 = vadd.f32 %v1974, %v2142
    %2144 = vmatmul.bf16.gmra.mxu0 %v1816
    %v2145 = vpop.f32.mrf.mxu0
    %v2146 = vadd.f32 %v1977, %v2145
    %v2147 = vpop.f32.mrf.mxu0
    %v2148 = vadd.f32 %v1979, %v2147
    %2149 = vmatmul.bf16.gmra.mxu0 %v1818
    %v2150 = vpop.f32.mrf.mxu0
    %v2151 = vadd.f32 %v1982, %v2150
    %v2152 = vpop.f32.mrf.mxu0
    %v2153 = vadd.f32 %v1984, %v2152
    %2154 = vmatmul.bf16.gmra.mxu0 %v1820
    %v2155 = vpop.f32.mrf.mxu0
    %v2156 = vadd.f32 %v1987, %v2155
    %v2157 = vpop.f32.mrf.mxu0
    %v2158 = vadd.f32 %v1989, %v2157
    %2159 = vmatmul.bf16.gmra.mxu0 %v1822
    %v2160 = vpop.f32.mrf.mxu0
    %v2161 = vadd.f32 %v1992, %v2160
    %v2162 = vpop.f32.mrf.mxu0
    %v2163 = vadd.f32 %v1994, %v2162
    %2164 = vmatmul.bf16.gmra.mxu0 %v1824
    %v2165 = vpop.f32.mrf.mxu0
    %v2166 = vadd.f32 %v1997, %v2165
    %v2167 = vpop.f32.mrf.mxu0
    %v2168 = vadd.f32 %v1999, %v2167
    %2169 = vmatmul.bf16.gmra.mxu0 %v1826
    %v2170 = vpop.f32.mrf.mxu0
    %v2171 = vadd.f32 %v2002, %v2170
    %v2172 = vpop.f32.mrf.mxu0
    %v2173 = vadd.f32 %v2004, %v2172
    %2174 = vmatmul.bf16.gmra.mxu0 %v1828
    %v2175 = vpop.f32.mrf.mxu0
    %v2176 = vadd.f32 %v2007, %v2175
    %v2177 = vpop.f32.mrf.mxu0
    %v2178 = vadd.f32 %v2009, %v2177
    %2179 = vmatmul.bf16.gmra.mxu0 %v1830
    %v2180 = vpop.f32.mrf.mxu0
    %v2181 = vadd.f32 %v2012, %v2180
    %v2182 = vpop.f32.mrf.mxu0
    %v2183 = vadd.f32 %v2014, %v2182
    %2184 = vmatmul.bf16.gmra.mxu0 %v1832
    %v2185 = vpop.f32.mrf.mxu0
    %v2186 = vadd.f32 %v2017, %v2185
    %v2187 = vpop.f32.mrf.mxu0
    %v2188 = vadd.f32 %v2019, %v2187
    %2189 = vmatmul.bf16.gmra.mxu0 %v1834
    %v2190 = vpop.f32.mrf.mxu0
    %v2191 = vadd.f32 %v2022, %v2190
    %v2192 = vpop.f32.mrf.mxu0
    %v2193 = vadd.f32 %v2024, %v2192
    %2194 = vmatmul.bf16.gmra.mxu0 %v1836
    %v2195 = vpop.f32.mrf.mxu0
    %v2196 = vadd.f32 %v2027, %v2195
    %v2197 = vpop.f32.mrf.mxu0
    %v2198 = vadd.f32 %v2029, %v2197
    %2199 = vmatmul.bf16.gmra.mxu0 %v1838
    %v2200 = vpop.f32.mrf.mxu0
    %v2201 = vadd.f32 %v2032, %v2200
    %v2202 = vpop.f32.mrf.mxu0
    %v2203 = vadd.f32 %v2034, %v2202
    %2204 = vmatmul.bf16.gmra.mxu0 %v1840
    %v2205 = vpop.f32.mrf.mxu0
    %v2206 = vadd.f32 %v2037, %v2205
    %v2207 = vpop.f32.mrf.mxu0
    %v2208 = vadd.f32 %v2039, %v2207
    %2209 = vmatmul.bf16.gmra.mxu0 %v1842
    %v2210 = vpop.f32.mrf.mxu0
    %v2211 = vadd.f32 %v2042, %v2210
    %v2212 = vpop.f32.mrf.mxu0
    %v2213 = vadd.f32 %v2044, %v2212
    %2214 = vmatmul.bf16.gmra.mxu0 %v1844
    %v2215 = vpop.f32.mrf.mxu0
    %v2216 = vadd.f32 %v2047, %v2215
    %v2217 = vpop.f32.mrf.mxu0
    %v2218 = vadd.f32 %v2049, %v2217
    %2219 = vmatmul.bf16.gmra.mxu0 %v1846
    %v2220 = vpop.f32.mrf.mxu0
    %v2221 = vadd.f32 %v2052, %v2220
    %v2222 = vpop.f32.mrf.mxu0
    %v2223 = vadd.f32 %v2054, %v2222
    %2224 = vmatmul.bf16.gmra.mxu0 %v1848
    %v2225 = vpop.f32.mrf.mxu0
    %v2226 = vadd.f32 %v2057, %v2225
    %v2227 = vpop.f32.mrf.mxu0
    %v2228 = vadd.f32 %v2059, %v2227
    %2229 = vmatmul.bf16.gmra.mxu0 %v1850
    %v2230 = vpop.f32.mrf.mxu0
    %v2231 = vadd.f32 %v2062, %v2230
    %v2232 = vpop.f32.mrf.mxu0
    %v2233 = vadd.f32 %v2064, %v2232
    %2234 = vmatmul.bf16.gmra.mxu0 %v1852
    %v2235 = vpop.f32.mrf.mxu0
    %v2236 = vadd.f32 %v2067, %v2235
    %v2237 = vpop.f32.mrf.mxu0
    %v2238 = vadd.f32 %v2069, %v2237
    %2239 = vmatmul.bf16.gmra.mxu0 %v1854
    %v2240 = vpop.f32.mrf.mxu0
    %v2241 = vadd.f32 %v2072, %v2240
    %v2242 = vpop.f32.mrf.mxu0
    %v2243 = vadd.f32 %v2074, %v2242
    %2244 = vmatmul.bf16.gmra.mxu0 %v1856
    %v2245 = vpop.f32.mrf.mxu0
    %v2246 = vadd.f32 %v2077, %v2245
    %v2247 = vpop.f32.mrf.mxu0
    %v2248 = vadd.f32 %v2079, %v2247
    %2249 = vmatmul.bf16.gmra.mxu0 %v1858
    %v2250 = vpop.f32.mrf.mxu0
    %v2251 = vadd.f32 %v2082, %v2250
    %v2252 = vpop.f32.mrf.mxu0
    %v2253 = vadd.f32 %v2084, %v2252
    %2254 = vmatmul.bf16.gmra.mxu0 %v1860
    %v2255 = vpop.f32.mrf.mxu0
    %v2256 = vadd.f32 %v2087, %v2255
    %v2257 = vpop.f32.mrf.mxu0
    %v2258 = vadd.f32 %v2089, %v2257
    %2259 = vmatmul.bf16.gmra.mxu0 %v1862
    %v2260 = vpop.f32.mrf.mxu0
    %v2261 = vadd.f32 %v2092, %v2260
    %v2262 = vpop.f32.mrf.mxu0
    %v2263 = vadd.f32 %v2094, %v2262
    %2264 = vdwg.mxu0
    %v2265 = vmax.f32 %v2106, 0.0
    %v2266 = vmax.f32 %v2108, 0.0
    %v2267 = vmax.f32 %v2111, 0.0
    %v2268 = vmax.f32 %v2113, 0.0
    %v2269 = vmax.f32 %v2116, 0.0
    %v2270 = vmax.f32 %v2118, 0.0
    %v2271 = vmax.f32 %v2121, 0.0
    %v2272 = vmax.f32 %v2123, 0.0
    %v2273 = vmax.f32 %v2126, 0.0
    %v2274 = vmax.f32 %v2128, 0.0
    %v2275 = vmax.f32 %v2131, 0.0
    %v2276 = vmax.f32 %v2133, 0.0
    %v2277 = vmax.f32 %v2136, 0.0
    %v2278 = vmax.f32 %v2138, 0.0
    %v2279 = vmax.f32 %v2141, 0.0
    %v2280 = vmax.f32 %v2143, 0.0
    %v2281 = vmax.f32 %v2146, 0.0
    %v2282 = vmax.f32 %v2148, 0.0
    %v2283 = vmax.f32 %v2151, 0.0
    %v2284 = vmax.f32 %v2153, 0.0
    %v2285 = vmax.f32 %v2156, 0.0
    %v2286 = vmax.f32 %v2158, 0.0
    %v2287 = vmax.f32 %v2161, 0.0
    %v2288 = vmax.f32 %v2163, 0.0
    %v2289 = vmax.f32 %v2166, 0.0
    %v2290 = vmax.f32 %v2168, 0.0
    %v2291 = vmax.f32 %v2171, 0.0
    %v2292 = vmax.f32 %v2173, 0.0
    %v2293 = vmax.f32 %v2176, 0.0
    %v2294 = vmax.f32 %v2178, 0.0
    %v2295 = vmax.f32 %v2181, 0.0
    %v2296 = vmax.f32 %v2183, 0.0
    %v2297 = vmax.f32 %v2186, 0.0
    %v2298 = vmax.f32 %v2188, 0.0
    %v2299 = vmax.f32 %v2191, 0.0
    %v2300 = vmax.f32 %v2193, 0.0
    %v2301 = vmax.f32 %v2196, 0.0
    %v2302 = vmax.f32 %v2198, 0.0
    %v2303 = vmax.f32 %v2201, 0.0
    %v2304 = vmax.f32 %v2203, 0.0
    %v2305 = vmax.f32 %v2206, 0.0
    %v2306 = vmax.f32 %v2208, 0.0
    %v2307 = vmax.f32 %v2211, 0.0
    %v2308 = vmax.f32 %v2213, 0.0
    %v2309 = vmax.f32 %v2216, 0.0
    %v2310 = vmax.f32 %v2218, 0.0
    %v2311 = vmax.f32 %v2221, 0.0
    %v2312 = vmax.f32 %v2223, 0.0
    %v2313 = vmax.f32 %v2226, 0.0
    %v2314 = vmax.f32 %v2228, 0.0
    %v2315 = vmax.f32 %v2231, 0.0
    %v2316 = vmax.f32 %v2233, 0.0
    %v2317 = vmax.f32 %v2236, 0.0
    %v2318 = vmax.f32 %v2238, 0.0
    %v2319 = vmax.f32 %v2241, 0.0
    %v2320 = vmax.f32 %v2243, 0.0
    %v2321 = vmax.f32 %v2246, 0.0
    %v2322 = vmax.f32 %v2248, 0.0
    %v2323 = vmax.f32 %v2251, 0.0
    %v2324 = vmax.f32 %v2253, 0.0
    %v2325 = vmax.f32 %v2256, 0.0
    %v2326 = vmax.f32 %v2258, 0.0
    %v2327 = vmax.f32 %v2261, 0.0
    %v2328 = vmax.f32 %v2263, 0.0
    %v2329 = vld [vmem:[#allocation2] sm:$0xff]
    %v2330 = vld [vmem:[#allocation2 + $0x8] sm:$0xff]
    %v2331 = vld [vmem:[#allocation2 + $0x10] sm:$0xff]
    %v2332 = vld [vmem:[#allocation2 + $0x18] sm:$0xff]
    %v2333 = vld [vmem:[#allocation2 + $0x20] sm:$0xff]
    %v2334 = vld [vmem:[#allocation2 + $0x28] sm:$0xff]
    %v2335 = vld [vmem:[#allocation2 + $0x30] sm:$0xff]
    %v2336 = vld [vmem:[#allocation2 + $0x38] sm:$0xff]
    %v2337 = vld [vmem:[#allocation2 + $0x40] sm:$0xff]
    %v2338 = vld [vmem:[#allocation2 + $0x48] sm:$0xff]
    %v2339 = vld [vmem:[#allocation2 + $0x50] sm:$0xff]
    %v2340 = vld [vmem:[#allocation2 + $0x58] sm:$0xff]
    %v2341 = vld [vmem:[#allocation2 + $0x60] sm:$0xff]
    %v2342 = vld [vmem:[#allocation2 + $0x68] sm:$0xff]
    %v2343 = vld [vmem:[#allocation2 + $0x70] sm:$0xff]
    %v2344 = vld [vmem:[#allocation2 + $0x78] sm:$0xff]
    %v2345 = vld [vmem:[#allocation2 + $0x80] sm:$0xff]
    %v2346 = vld [vmem:[#allocation2 + $0x88] sm:$0xff]
    %v2347 = vld [vmem:[#allocation2 + $0x90] sm:$0xff]
    %v2348 = vld [vmem:[#allocation2 + $0x98] sm:$0xff]
    %v2349 = vld [vmem:[#allocation2 + $0xa0] sm:$0xff]
    %v2350 = vld [vmem:[#allocation2 + $0xa8] sm:$0xff]
    %v2351 = vld [vmem:[#allocation2 + $0xb0] sm:$0xff]
    %v2352 = vld [vmem:[#allocation2 + $0xb8] sm:$0xff]
    %v2353 = vld [vmem:[#allocation2 + $0xc0] sm:$0xff]
    %v2354 = vld [vmem:[#allocation2 + $0xc8] sm:$0xff]
    %v2355 = vld [vmem:[#allocation2 + $0xd0] sm:$0xff]
    %v2356 = vld [vmem:[#allocation2 + $0xd8] sm:$0xff]
    %v2357 = vld [vmem:[#allocation2 + $0xe0] sm:$0xff]
    %v2358 = vld [vmem:[#allocation2 + $0xe8] sm:$0xff]
    %v2359 = vld [vmem:[#allocation2 + $0xf0] sm:$0xff]
    %v2360 = vld [vmem:[#allocation2 + $0xf8] sm:$0xff]
    %v2361 = vld [vmem:[#allocation2 + $0x100] sm:$0xff]
    %v2362 = vld [vmem:[#allocation2 + $0x108] sm:$0xff]
    %v2363 = vld [vmem:[#allocation2 + $0x110] sm:$0xff]
    %v2364 = vld [vmem:[#allocation2 + $0x118] sm:$0xff]
    %v2365 = vld [vmem:[#allocation2 + $0x120] sm:$0xff]
    %v2366 = vld [vmem:[#allocation2 + $0x128] sm:$0xff]
    %v2367 = vld [vmem:[#allocation2 + $0x130] sm:$0xff]
    %v2368 = vld [vmem:[#allocation2 + $0x138] sm:$0xff]
    %v2369 = vld [vmem:[#allocation2 + $0x140] sm:$0xff]
    %v2370 = vld [vmem:[#allocation2 + $0x148] sm:$0xff]
    %v2371 = vld [vmem:[#allocation2 + $0x150] sm:$0xff]
    %v2372 = vld [vmem:[#allocation2 + $0x158] sm:$0xff]
    %v2373 = vld [vmem:[#allocation2 + $0x160] sm:$0xff]
    %v2374 = vld [vmem:[#allocation2 + $0x168] sm:$0xff]
    %v2375 = vld [vmem:[#allocation2 + $0x170] sm:$0xff]
    %v2376 = vld [vmem:[#allocation2 + $0x178] sm:$0xff]
    %v2377 = vld [vmem:[#allocation2 + $0x180] sm:$0xff]
    %v2378 = vld [vmem:[#allocation2 + $0x188] sm:$0xff]
    %v2379 = vld [vmem:[#allocation2 + $0x190] sm:$0xff]
    %v2380 = vld [vmem:[#allocation2 + $0x198] sm:$0xff]
    %v2381 = vld [vmem:[#allocation2 + $0x1a0] sm:$0xff]
    %v2382 = vld [vmem:[#allocation2 + $0x1a8] sm:$0xff]
    %v2383 = vld [vmem:[#allocation2 + $0x1b0] sm:$0xff]
    %v2384 = vld [vmem:[#allocation2 + $0x1b8] sm:$0xff]
    %v2385 = vld [vmem:[#allocation2 + $0x1c0] sm:$0xff]
    %v2386 = vld [vmem:[#allocation2 + $0x1c8] sm:$0xff]
    %v2387 = vld [vmem:[#allocation2 + $0x1d0] sm:$0xff]
    %v2388 = vld [vmem:[#allocation2 + $0x1d8] sm:$0xff]
    %v2389 = vld [vmem:[#allocation2 + $0x1e0] sm:$0xff]
    %v2390 = vld [vmem:[#allocation2 + $0x1e8] sm:$0xff]
    %v2391 = vld [vmem:[#allocation2 + $0x1f0] sm:$0xff]
    %v2392 = vld [vmem:[#allocation2 + $0x1f8] sm:$0xff]
    %v2393 = vpack.c.bf16 %v2266, %v2265
    %v2394 = vpack.c.bf16 %v2268, %v2267
    %v2395 = vpack.c.bf16 %v2270, %v2269
    %v2396 = vpack.c.bf16 %v2272, %v2271
    %v2397 = vpack.c.bf16 %v2274, %v2273
    %v2398 = vpack.c.bf16 %v2276, %v2275
    %v2399 = vpack.c.bf16 %v2278, %v2277
    %v2400 = vpack.c.bf16 %v2280, %v2279
    %v2401 = vpack.c.bf16 %v2282, %v2281
    %v2402 = vpack.c.bf16 %v2284, %v2283
    %v2403 = vpack.c.bf16 %v2286, %v2285
    %v2404 = vpack.c.bf16 %v2288, %v2287
    %v2405 = vpack.c.bf16 %v2290, %v2289
    %v2406 = vpack.c.bf16 %v2292, %v2291
    %v2407 = vpack.c.bf16 %v2294, %v2293
    %v2408 = vpack.c.bf16 %v2296, %v2295
    %v2409 = vpack.c.bf16 %v2298, %v2297
    %v2410 = vpack.c.bf16 %v2300, %v2299
    %v2411 = vpack.c.bf16 %v2302, %v2301
    %v2412 = vpack.c.bf16 %v2304, %v2303
    %v2413 = vpack.c.bf16 %v2306, %v2305
    %v2414 = vpack.c.bf16 %v2308, %v2307
    %v2415 = vpack.c.bf16 %v2310, %v2309
    %v2416 = vpack.c.bf16 %v2312, %v2311
    %v2417 = vpack.c.bf16 %v2314, %v2313
    %v2418 = vpack.c.bf16 %v2316, %v2315
    %v2419 = vpack.c.bf16 %v2318, %v2317
    %v2420 = vpack.c.bf16 %v2320, %v2319
    %v2421 = vpack.c.bf16 %v2322, %v2321
    %v2422 = vpack.c.bf16 %v2324, %v2323
    %v2423 = vpack.c.bf16 %v2326, %v2325
    %v2424 = vpack.c.bf16 %v2328, %v2327
    %2425 = vset.pattern.permute.xlu0 2
    %2426 = vperm.xlu0 %2425, %v53
    %v2427 = vpop.permute.xlu0 %2426
    %2429 = vset.pattern.permute.xlu0 2
    %2430 = vperm.xlu0 %2429, %v54
    %v2431 = vpop.permute.xlu0 %2430
    %2433 = vset.pattern.permute.xlu0 2
    %2434 = vperm.xlu0 %2433, %v55
    %v2435 = vpop.permute.xlu0 %2434
    %2437 = vset.pattern.permute.xlu0 2
    %2438 = vperm.xlu0 %2437, %v56
    %v2439 = vpop.permute.xlu0 %2438
    %2441 = vset.pattern.permute.xlu0 2
    %2442 = vperm.xlu0 %2441, %v57
    %v2443 = vpop.permute.xlu0 %2442
    %2445 = vset.pattern.permute.xlu0 2
    %2446 = vperm.xlu0 %2445, %v58
    %v2447 = vpop.permute.xlu0 %2446
    %2449 = vset.pattern.permute.xlu0 2
    %2450 = vperm.xlu0 %2449, %v59
    %v2451 = vpop.permute.xlu0 %2450
    %2453 = vset.pattern.permute.xlu0 2
    %2454 = vperm.xlu0 %2453, %v60
    %v2455 = vpop.permute.xlu0 %2454
    %2457 = vset.pattern.permute.xlu0 2
    %2458 = vperm.xlu0 %2457, %v61
    %v2459 = vpop.permute.xlu0 %2458
    %2461 = vset.pattern.permute.xlu0 2
    %2462 = vperm.xlu0 %2461, %v62
    %v2463 = vpop.permute.xlu0 %2462
    %2465 = vset.pattern.permute.xlu0 2
    %2466 = vperm.xlu0 %2465, %v63
    %v2467 = vpop.permute.xlu0 %2466
    %2469 = vset.pattern.permute.xlu0 2
    %2470 = vperm.xlu0 %2469, %v64
    %v2471 = vpop.permute.xlu0 %2470
    %2473 = vset.pattern.permute.xlu0 2
    %2474 = vperm.xlu0 %2473, %v65
    %v2475 = vpop.permute.xlu0 %2474
    %2477 = vset.pattern.permute.xlu0 2
    %2478 = vperm.xlu0 %2477, %v66
    %v2479 = vpop.permute.xlu0 %2478
    %2481 = vset.pattern.permute.xlu0 2
    %2482 = vperm.xlu0 %2481, %v67
    %v2483 = vpop.permute.xlu0 %2482
    %2485 = vset.pattern.permute.xlu0 2
    %2486 = vperm.xlu0 %2485, %v68
    %v2487 = vpop.permute.xlu0 %2486
    %2489 = vset.pattern.permute.xlu0 2
    %2490 = vperm.xlu0 %2489, %v69
    %v2491 = vpop.permute.xlu0 %2490
    %2493 = vset.pattern.permute.xlu0 2
    %2494 = vperm.xlu0 %2493, %v70
    %v2495 = vpop.permute.xlu0 %2494
    %2497 = vset.pattern.permute.xlu0 2
    %2498 = vperm.xlu0 %2497, %v71
    %v2499 = vpop.permute.xlu0 %2498
    %2501 = vset.pattern.permute.xlu0 2
    %2502 = vperm.xlu0 %2501, %v72
    %v2503 = vpop.permute.xlu0 %2502
    %2505 = vset.pattern.permute.xlu0 2
    %2506 = vperm.xlu0 %2505, %v73
    %v2507 = vpop.permute.xlu0 %2506
    %2509 = vset.pattern.permute.xlu0 2
    %2510 = vperm.xlu0 %2509, %v74
    %v2511 = vpop.permute.xlu0 %2510
    %2513 = vset.pattern.permute.xlu0 2
    %2514 = vperm.xlu0 %2513, %v75
    %v2515 = vpop.permute.xlu0 %2514
    %2517 = vset.pattern.permute.xlu0 2
    %2518 = vperm.xlu0 %2517, %v76
    %v2519 = vpop.permute.xlu0 %2518
    %2521 = vset.pattern.permute.xlu0 2
    %2522 = vperm.xlu0 %2521, %v77
    %v2523 = vpop.permute.xlu0 %2522
    %2525 = vset.pattern.permute.xlu0 2
    %2526 = vperm.xlu0 %2525, %v78
    %v2527 = vpop.permute.xlu0 %2526
    %2529 = vset.pattern.permute.xlu0 2
    %2530 = vperm.xlu0 %2529, %v79
    %v2531 = vpop.permute.xlu0 %2530
    %2533 = vset.pattern.permute.xlu0 2
    %2534 = vperm.xlu0 %2533, %v80
    %v2535 = vpop.permute.xlu0 %2534
    %2537 = vset.pattern.permute.xlu0 2
    %2538 = vperm.xlu0 %2537, %v81
    %v2539 = vpop.permute.xlu0 %2538
    %2541 = vset.pattern.permute.xlu0 2
    %2542 = vperm.xlu0 %2541, %v82
    %v2543 = vpop.permute.xlu0 %2542
    %2545 = vset.pattern.permute.xlu0 2
    %2546 = vperm.xlu0 %2545, %v83
    %v2547 = vpop.permute.xlu0 %2546
    %2549 = vset.pattern.permute.xlu0 2
    %2550 = vperm.xlu0 %2549, %v84
    %v2551 = vpop.permute.xlu0 %2550
    %v2617 = vunpack.c.l.b16 %v2329
    %v2618 = vunpack.c.h.b16 %v2329
    %v2619 = vunpack.c.l.b16 %v2330
    %v2620 = vunpack.c.h.b16 %v2330
    %v2621 = vunpack.c.l.b16 %v2331
    %v2622 = vunpack.c.h.b16 %v2331
    %v2623 = vunpack.c.l.b16 %v2332
    %v2624 = vunpack.c.h.b16 %v2332
    %v2625 = vunpack.c.l.b16 %v2333
    %v2626 = vunpack.c.h.b16 %v2333
    %v2627 = vunpack.c.l.b16 %v2334
    %v2628 = vunpack.c.h.b16 %v2334
    %v2629 = vunpack.c.l.b16 %v2335
    %v2630 = vunpack.c.h.b16 %v2335
    %v2631 = vunpack.c.l.b16 %v2336
    %v2632 = vunpack.c.h.b16 %v2336
    %v2633 = vunpack.c.l.b16 %v2337
    %v2634 = vunpack.c.h.b16 %v2337
    %v2635 = vunpack.c.l.b16 %v2338
    %v2636 = vunpack.c.h.b16 %v2338
    %v2637 = vunpack.c.l.b16 %v2339
    %v2638 = vunpack.c.h.b16 %v2339
    %v2639 = vunpack.c.l.b16 %v2340
    %v2640 = vunpack.c.h.b16 %v2340
    %v2641 = vunpack.c.l.b16 %v2341
    %v2642 = vunpack.c.h.b16 %v2341
    %v2643 = vunpack.c.l.b16 %v2342
    %v2644 = vunpack.c.h.b16 %v2342
    %v2645 = vunpack.c.l.b16 %v2343
    %v2646 = vunpack.c.h.b16 %v2343
    %v2647 = vunpack.c.l.b16 %v2344
    %v2648 = vunpack.c.h.b16 %v2344
    %v2649 = vunpack.c.l.b16 %v2345
    %v2650 = vunpack.c.h.b16 %v2345
    %v2651 = vunpack.c.l.b16 %v2346
    %v2652 = vunpack.c.h.b16 %v2346
    %v2653 = vunpack.c.l.b16 %v2347
    %v2654 = vunpack.c.h.b16 %v2347
    %v2655 = vunpack.c.l.b16 %v2348
    %v2656 = vunpack.c.h.b16 %v2348
    %v2657 = vunpack.c.l.b16 %v2349
    %v2658 = vunpack.c.h.b16 %v2349
    %v2659 = vunpack.c.l.b16 %v2350
    %v2660 = vunpack.c.h.b16 %v2350
    %v2661 = vunpack.c.l.b16 %v2351
    %v2662 = vunpack.c.h.b16 %v2351
    %v2663 = vunpack.c.l.b16 %v2352
    %v2664 = vunpack.c.h.b16 %v2352
    %v2665 = vunpack.c.l.b16 %v2353
    %v2666 = vunpack.c.h.b16 %v2353
    %v2667 = vunpack.c.l.b16 %v2354
    %v2668 = vunpack.c.h.b16 %v2354
    %v2669 = vunpack.c.l.b16 %v2355
    %v2670 = vunpack.c.h.b16 %v2355
    %v2671 = vunpack.c.l.b16 %v2356
    %v2672 = vunpack.c.h.b16 %v2356
    %v2673 = vunpack.c.l.b16 %v2357
    %v2674 = vunpack.c.h.b16 %v2357
    %v2675 = vunpack.c.l.b16 %v2358
    %v2676 = vunpack.c.h.b16 %v2358
    %v2677 = vunpack.c.l.b16 %v2359
    %v2678 = vunpack.c.h.b16 %v2359
    %v2679 = vunpack.c.l.b16 %v2360
    %v2680 = vunpack.c.h.b16 %v2360
    %v2681 = vunpack.c.l.b16 %v2361
    %v2682 = vunpack.c.h.b16 %v2361
    %v2683 = vunpack.c.l.b16 %v2362
    %v2684 = vunpack.c.h.b16 %v2362
    %v2685 = vunpack.c.l.b16 %v2363
    %v2686 = vunpack.c.h.b16 %v2363
    %v2687 = vunpack.c.l.b16 %v2364
    %v2688 = vunpack.c.h.b16 %v2364
    %v2689 = vunpack.c.l.b16 %v2365
    %v2690 = vunpack.c.h.b16 %v2365
    %v2691 = vunpack.c.l.b16 %v2366
    %v2692 = vunpack.c.h.b16 %v2366
    %v2693 = vunpack.c.l.b16 %v2367
    %v2694 = vunpack.c.h.b16 %v2367
    %v2695 = vunpack.c.l.b16 %v2368
    %v2696 = vunpack.c.h.b16 %v2368
    %v2697 = vunpack.c.l.b16 %v2369
    %v2698 = vunpack.c.h.b16 %v2369
    %v2699 = vunpack.c.l.b16 %v2370
    %v2700 = vunpack.c.h.b16 %v2370
    %v2701 = vunpack.c.l.b16 %v2371
    %v2702 = vunpack.c.h.b16 %v2371
    %v2703 = vunpack.c.l.b16 %v2372
    %v2704 = vunpack.c.h.b16 %v2372
    %v2705 = vunpack.c.l.b16 %v2373
    %v2706 = vunpack.c.h.b16 %v2373
    %v2707 = vunpack.c.l.b16 %v2374
    %v2708 = vunpack.c.h.b16 %v2374
    %v2709 = vunpack.c.l.b16 %v2375
    %v2710 = vunpack.c.h.b16 %v2375
    %v2711 = vunpack.c.l.b16 %v2376
    %v2712 = vunpack.c.h.b16 %v2376
    %v2713 = vunpack.c.l.b16 %v2377
    %v2714 = vunpack.c.h.b16 %v2377
    %v2715 = vunpack.c.l.b16 %v2378
    %v2716 = vunpack.c.h.b16 %v2378
    %v2717 = vunpack.c.l.b16 %v2379
    %v2718 = vunpack.c.h.b16 %v2379
    %v2719 = vunpack.c.l.b16 %v2380
    %v2720 = vunpack.c.h.b16 %v2380
    %v2721 = vunpack.c.l.b16 %v2381
    %v2722 = vunpack.c.h.b16 %v2381
    %v2723 = vunpack.c.l.b16 %v2382
    %v2724 = vunpack.c.h.b16 %v2382
    %v2725 = vunpack.c.l.b16 %v2383
    %v2726 = vunpack.c.h.b16 %v2383
    %v2727 = vunpack.c.l.b16 %v2384
    %v2728 = vunpack.c.h.b16 %v2384
    %v2729 = vunpack.c.l.b16 %v2385
    %v2730 = vunpack.c.h.b16 %v2385
    %v2731 = vunpack.c.l.b16 %v2386
    %v2732 = vunpack.c.h.b16 %v2386
    %v2733 = vunpack.c.l.b16 %v2387
    %v2734 = vunpack.c.h.b16 %v2387
    %v2735 = vunpack.c.l.b16 %v2388
    %v2736 = vunpack.c.h.b16 %v2388
    %v2737 = vunpack.c.l.b16 %v2389
    %v2738 = vunpack.c.h.b16 %v2389
    %v2739 = vunpack.c.l.b16 %v2390
    %v2740 = vunpack.c.h.b16 %v2390
    %v2741 = vunpack.c.l.b16 %v2391
    %v2742 = vunpack.c.h.b16 %v2391
    %v2743 = vunpack.c.l.b16 %v2392
    %v2744 = vunpack.c.h.b16 %v2392
    %v2745 = vpack.c.b16 %v2621, %v2617
    %v2746 = vpack.c.b16 %v2622, %v2618
    %v2747 = vpack.c.b16 %v2623, %v2619
    %v2748 = vpack.c.b16 %v2624, %v2620
    %v2749 = vpack.c.b16 %v2629, %v2625
    %v2750 = vpack.c.b16 %v2630, %v2626
    %v2751 = vpack.c.b16 %v2631, %v2627
    %v2752 = vpack.c.b16 %v2632, %v2628
    %v2753 = vpack.c.b16 %v2637, %v2633
    %v2754 = vpack.c.b16 %v2638, %v2634
    %v2755 = vpack.c.b16 %v2639, %v2635
    %v2756 = vpack.c.b16 %v2640, %v2636
    %v2757 = vpack.c.b16 %v2645, %v2641
    %v2758 = vpack.c.b16 %v2646, %v2642
    %v2759 = vpack.c.b16 %v2647, %v2643
    %v2760 = vpack.c.b16 %v2648, %v2644
    %v2761 = vpack.c.b16 %v2653, %v2649
    %v2762 = vpack.c.b16 %v2654, %v2650
    %v2763 = vpack.c.b16 %v2655, %v2651
    %v2764 = vpack.c.b16 %v2656, %v2652
    %v2765 = vpack.c.b16 %v2661, %v2657
    %v2766 = vpack.c.b16 %v2662, %v2658
    %v2767 = vpack.c.b16 %v2663, %v2659
    %v2768 = vpack.c.b16 %v2664, %v2660
    %v2769 = vpack.c.b16 %v2669, %v2665
    %v2770 = vpack.c.b16 %v2670, %v2666
    %v2771 = vpack.c.b16 %v2671, %v2667
    %v2772 = vpack.c.b16 %v2672, %v2668
    %v2773 = vpack.c.b16 %v2677, %v2673
    %v2774 = vpack.c.b16 %v2678, %v2674
    %v2775 = vpack.c.b16 %v2679, %v2675
    %v2776 = vpack.c.b16 %v2680, %v2676
    %v2777 = vpack.c.b16 %v2685, %v2681
    %v2778 = vpack.c.b16 %v2686, %v2682
    %v2779 = vpack.c.b16 %v2687, %v2683
    %v2780 = vpack.c.b16 %v2688, %v2684
    %v2781 = vpack.c.b16 %v2693, %v2689
    %v2782 = vpack.c.b16 %v2694, %v2690
    %v2783 = vpack.c.b16 %v2695, %v2691
    %v2784 = vpack.c.b16 %v2696, %v2692
    %v2785 = vpack.c.b16 %v2701, %v2697
    %v2786 = vpack.c.b16 %v2702, %v2698
    %v2787 = vpack.c.b16 %v2703, %v2699
    %v2788 = vpack.c.b16 %v2704, %v2700
    %v2789 = vpack.c.b16 %v2709, %v2705
    %v2790 = vpack.c.b16 %v2710, %v2706
    %v2791 = vpack.c.b16 %v2711, %v2707
    %v2792 = vpack.c.b16 %v2712, %v2708
    %v2793 = vpack.c.b16 %v2717, %v2713
    %v2794 = vpack.c.b16 %v2718, %v2714
    %v2795 = vpack.c.b16 %v2719, %v2715
    %v2796 = vpack.c.b16 %v2720, %v2716
    %v2797 = vpack.c.b16 %v2725, %v2721
    %v2798 = vpack.c.b16 %v2726, %v2722
    %v2799 = vpack.c.b16 %v2727, %v2723
    %v2800 = vpack.c.b16 %v2728, %v2724
    %v2801 = vpack.c.b16 %v2733, %v2729
    %v2802 = vpack.c.b16 %v2734, %v2730
    %v2803 = vpack.c.b16 %v2735, %v2731
    %v2804 = vpack.c.b16 %v2736, %v2732
    %v2805 = vpack.c.b16 %v2741, %v2737
    %v2806 = vpack.c.b16 %v2742, %v2738
    %v2807 = vpack.c.b16 %v2743, %v2739
    %v2808 = vpack.c.b16 %v2744, %v2740
    %2873 = vmatpush.bf16.msra.mxu0 %v2400
    %2874 = vmatpush.bf16.msra.mxu0 %v2399
    %2875 = vmatpush.bf16.msra.mxu0 %v2398
    %2876 = vmatpush.bf16.msra.mxu0 %v2397
    %2877 = vmatpush.bf16.msra.mxu0 %v2396
    %2878 = vmatpush.bf16.msra.mxu0 %v2395
    %2879 = vmatpush.bf16.msra.mxu0 %v2394
    %2880 = vmatpush.bf16.msra.mxu0 %v2393
    %2881 = vmatmul.bf16.gmra.mxu0 %v2745
    %v2882 = vpop.f32.mrf.mxu0
    %v2883 = vadd.f32 %v2427, %v2882
    %v2884 = vpop.f32.mrf.mxu0
    %v2885 = vadd.f32 %v2431, %v2884
    %2886 = vmatmul.bf16.gmra.mxu0 %v2749
    %v2887 = vpop.f32.mrf.mxu0
    %v2888 = vadd.f32 %v2435, %v2887
    %v2889 = vpop.f32.mrf.mxu0
    %v2890 = vadd.f32 %v2439, %v2889
    %2891 = vmatmul.bf16.gmra.mxu0 %v2753
    %v2892 = vpop.f32.mrf.mxu0
    %v2893 = vadd.f32 %v2443, %v2892
    %v2894 = vpop.f32.mrf.mxu0
    %v2895 = vadd.f32 %v2447, %v2894
    %2896 = vmatmul.bf16.gmra.mxu0 %v2757
    %v2897 = vpop.f32.mrf.mxu0
    %v2898 = vadd.f32 %v2451, %v2897
    %v2899 = vpop.f32.mrf.mxu0
    %v2900 = vadd.f32 %v2455, %v2899
    %2901 = vmatmul.bf16.gmra.mxu0 %v2761
    %v2902 = vpop.f32.mrf.mxu0
    %v2903 = vadd.f32 %v2459, %v2902
    %v2904 = vpop.f32.mrf.mxu0
    %v2905 = vadd.f32 %v2463, %v2904
    %2906 = vmatmul.bf16.gmra.mxu0 %v2765
    %v2907 = vpop.f32.mrf.mxu0
    %v2908 = vadd.f32 %v2467, %v2907
    %v2909 = vpop.f32.mrf.mxu0
    %v2910 = vadd.f32 %v2471, %v2909
    %2911 = vmatmul.bf16.gmra.mxu0 %v2769
    %v2912 = vpop.f32.mrf.mxu0
    %v2913 = vadd.f32 %v2475, %v2912
    %v2914 = vpop.f32.mrf.mxu0
    %v2915 = vadd.f32 %v2479, %v2914
    %2916 = vmatmul.bf16.gmra.mxu0 %v2773
    %v2917 = vpop.f32.mrf.mxu0
    %v2918 = vadd.f32 %v2483, %v2917
    %v2919 = vpop.f32.mrf.mxu0
    %v2920 = vadd.f32 %v2487, %v2919
    %2921 = vmatmul.bf16.gmra.mxu0 %v2777
    %v2922 = vpop.f32.mrf.mxu0
    %v2923 = vadd.f32 %v2491, %v2922
    %v2924 = vpop.f32.mrf.mxu0
    %v2925 = vadd.f32 %v2495, %v2924
    %2926 = vmatmul.bf16.gmra.mxu0 %v2781
    %v2927 = vpop.f32.mrf.mxu0
    %v2928 = vadd.f32 %v2499, %v2927
    %v2929 = vpop.f32.mrf.mxu0
    %v2930 = vadd.f32 %v2503, %v2929
    %2931 = vmatmul.bf16.gmra.mxu0 %v2785
    %v2932 = vpop.f32.mrf.mxu0
    %v2933 = vadd.f32 %v2507, %v2932
    %v2934 = vpop.f32.mrf.mxu0
    %v2935 = vadd.f32 %v2511, %v2934
    %2936 = vmatmul.bf16.gmra.mxu0 %v2789
    %v2937 = vpop.f32.mrf.mxu0
    %v2938 = vadd.f32 %v2515, %v2937
    %v2939 = vpop.f32.mrf.mxu0
    %v2940 = vadd.f32 %v2519, %v2939
    %2941 = vmatmul.bf16.gmra.mxu0 %v2793
    %v2942 = vpop.f32.mrf.mxu0
    %v2943 = vadd.f32 %v2523, %v2942
    %v2944 = vpop.f32.mrf.mxu0
    %v2945 = vadd.f32 %v2527, %v2944
    %2946 = vmatmul.bf16.gmra.mxu0 %v2797
    %v2947 = vpop.f32.mrf.mxu0
    %v2948 = vadd.f32 %v2531, %v2947
    %v2949 = vpop.f32.mrf.mxu0
    %v2950 = vadd.f32 %v2535, %v2949
    %2951 = vmatmul.bf16.gmra.mxu0 %v2801
    %v2952 = vpop.f32.mrf.mxu0
    %v2953 = vadd.f32 %v2539, %v2952
    %v2954 = vpop.f32.mrf.mxu0
    %v2955 = vadd.f32 %v2543, %v2954
    %2956 = vmatmul.bf16.gmra.mxu0 %v2805
    %v2957 = vpop.f32.mrf.mxu0
    %v2958 = vadd.f32 %v2547, %v2957
    %v2959 = vpop.f32.mrf.mxu0
    %v2960 = vadd.f32 %v2551, %v2959
    %2961 = vdwg.mxu0
    %2962 = vmatpush.bf16.msra.mxu0 %v2408
    %2963 = vmatpush.bf16.msra.mxu0 %v2407
    %2964 = vmatpush.bf16.msra.mxu0 %v2406
    %2965 = vmatpush.bf16.msra.mxu0 %v2405
    %2966 = vmatpush.bf16.msra.mxu0 %v2404
    %2967 = vmatpush.bf16.msra.mxu0 %v2403
    %2968 = vmatpush.bf16.msra.mxu0 %v2402
    %2969 = vmatpush.bf16.msra.mxu0 %v2401
    %2970 = vmatmul.bf16.gmra.mxu0 %v2746
    %v2971 = vpop.f32.mrf.mxu0
    %v2972 = vadd.f32 %v2883, %v2971
    %v2973 = vpop.f32.mrf.mxu0
    %v2974 = vadd.f32 %v2885, %v2973
    %2975 = vmatmul.bf16.gmra.mxu0 %v2750
    %v2976 = vpop.f32.mrf.mxu0
    %v2977 = vadd.f32 %v2888, %v2976
    %v2978 = vpop.f32.mrf.mxu0
    %v2979 = vadd.f32 %v2890, %v2978
    %2980 = vmatmul.bf16.gmra.mxu0 %v2754
    %v2981 = vpop.f32.mrf.mxu0
    %v2982 = vadd.f32 %v2893, %v2981
    %v2983 = vpop.f32.mrf.mxu0
    %v2984 = vadd.f32 %v2895, %v2983
    %2985 = vmatmul.bf16.gmra.mxu0 %v2758
    %v2986 = vpop.f32.mrf.mxu0
    %v2987 = vadd.f32 %v2898, %v2986
    %v2988 = vpop.f32.mrf.mxu0
    %v2989 = vadd.f32 %v2900, %v2988
    %2990 = vmatmul.bf16.gmra.mxu0 %v2762
    %v2991 = vpop.f32.mrf.mxu0
    %v2992 = vadd.f32 %v2903, %v2991
    %v2993 = vpop.f32.mrf.mxu0
    %v2994 = vadd.f32 %v2905, %v2993
    %2995 = vmatmul.bf16.gmra.mxu0 %v2766
    %v2996 = vpop.f32.mrf.mxu0
    %v2997 = vadd.f32 %v2908, %v2996
    %v2998 = vpop.f32.mrf.mxu0
    %v2999 = vadd.f32 %v2910, %v2998
    %3000 = vmatmul.bf16.gmra.mxu0 %v2770
    %v3001 = vpop.f32.mrf.mxu0
    %v3002 = vadd.f32 %v2913, %v3001
    %v3003 = vpop.f32.mrf.mxu0
    %v3004 = vadd.f32 %v2915, %v3003
    %3005 = vmatmul.bf16.gmra.mxu0 %v2774
    %v3006 = vpop.f32.mrf.mxu0
    %v3007 = vadd.f32 %v2918, %v3006
    %v3008 = vpop.f32.mrf.mxu0
    %v3009 = vadd.f32 %v2920, %v3008
    %3010 = vmatmul.bf16.gmra.mxu0 %v2778
    %v3011 = vpop.f32.mrf.mxu0
    %v3012 = vadd.f32 %v2923, %v3011
    %v3013 = vpop.f32.mrf.mxu0
    %v3014 = vadd.f32 %v2925, %v3013
    %3015 = vmatmul.bf16.gmra.mxu0 %v2782
    %v3016 = vpop.f32.mrf.mxu0
    %v3017 = vadd.f32 %v2928, %v3016
    %v3018 = vpop.f32.mrf.mxu0
    %v3019 = vadd.f32 %v2930, %v3018
    %3020 = vmatmul.bf16.gmra.mxu0 %v2786
    %v3021 = vpop.f32.mrf.mxu0
    %v3022 = vadd.f32 %v2933, %v3021
    %v3023 = vpop.f32.mrf.mxu0
    %v3024 = vadd.f32 %v2935, %v3023
    %3025 = vmatmul.bf16.gmra.mxu0 %v2790
    %v3026 = vpop.f32.mrf.mxu0
    %v3027 = vadd.f32 %v2938, %v3026
    %v3028 = vpop.f32.mrf.mxu0
    %v3029 = vadd.f32 %v2940, %v3028
    %3030 = vmatmul.bf16.gmra.mxu0 %v2794
    %v3031 = vpop.f32.mrf.mxu0
    %v3032 = vadd.f32 %v2943, %v3031
    %v3033 = vpop.f32.mrf.mxu0
    %v3034 = vadd.f32 %v2945, %v3033
    %3035 = vmatmul.bf16.gmra.mxu0 %v2798
    %v3036 = vpop.f32.mrf.mxu0
    %v3037 = vadd.f32 %v2948, %v3036
    %v3038 = vpop.f32.mrf.mxu0
    %v3039 = vadd.f32 %v2950, %v3038
    %3040 = vmatmul.bf16.gmra.mxu0 %v2802
    %v3041 = vpop.f32.mrf.mxu0
    %v3042 = vadd.f32 %v2953, %v3041
    %v3043 = vpop.f32.mrf.mxu0
    %v3044 = vadd.f32 %v2955, %v3043
    %3045 = vmatmul.bf16.gmra.mxu0 %v2806
    %v3046 = vpop.f32.mrf.mxu0
    %v3047 = vadd.f32 %v2958, %v3046
    %v3048 = vpop.f32.mrf.mxu0
    %v3049 = vadd.f32 %v2960, %v3048
    %3050 = vdwg.mxu0
    %3051 = vmatpush.bf16.msra.mxu0 %v2416
    %3052 = vmatpush.bf16.msra.mxu0 %v2415
    %3053 = vmatpush.bf16.msra.mxu0 %v2414
    %3054 = vmatpush.bf16.msra.mxu0 %v2413
    %3055 = vmatpush.bf16.msra.mxu0 %v2412
    %3056 = vmatpush.bf16.msra.mxu0 %v2411
    %3057 = vmatpush.bf16.msra.mxu0 %v2410
    %3058 = vmatpush.bf16.msra.mxu0 %v2409
    %3059 = vmatmul.bf16.gmra.mxu0 %v2747
    %v3060 = vpop.f32.mrf.mxu0
    %v3061 = vadd.f32 %v2972, %v3060
    %v3062 = vpop.f32.mrf.mxu0
    %v3063 = vadd.f32 %v2974, %v3062
    %3064 = vmatmul.bf16.gmra.mxu0 %v2751
    %v3065 = vpop.f32.mrf.mxu0
    %v3066 = vadd.f32 %v2977, %v3065
    %v3067 = vpop.f32.mrf.mxu0
    %v3068 = vadd.f32 %v2979, %v3067
    %3069 = vmatmul.bf16.gmra.mxu0 %v2755
    %v3070 = vpop.f32.mrf.mxu0
    %v3071 = vadd.f32 %v2982, %v3070
    %v3072 = vpop.f32.mrf.mxu0
    %v3073 = vadd.f32 %v2984, %v3072
    %3074 = vmatmul.bf16.gmra.mxu0 %v2759
    %v3075 = vpop.f32.mrf.mxu0
    %v3076 = vadd.f32 %v2987, %v3075
    %v3077 = vpop.f32.mrf.mxu0
    %v3078 = vadd.f32 %v2989, %v3077
    %3079 = vmatmul.bf16.gmra.mxu0 %v2763
    %v3080 = vpop.f32.mrf.mxu0
    %v3081 = vadd.f32 %v2992, %v3080
    %v3082 = vpop.f32.mrf.mxu0
    %v3083 = vadd.f32 %v2994, %v3082
    %3084 = vmatmul.bf16.gmra.mxu0 %v2767
    %v3085 = vpop.f32.mrf.mxu0
    %v3086 = vadd.f32 %v2997, %v3085
    %v3087 = vpop.f32.mrf.mxu0
    %v3088 = vadd.f32 %v2999, %v3087
    %3089 = vmatmul.bf16.gmra.mxu0 %v2771
    %v3090 = vpop.f32.mrf.mxu0
    %v3091 = vadd.f32 %v3002, %v3090
    %v3092 = vpop.f32.mrf.mxu0
    %v3093 = vadd.f32 %v3004, %v3092
    %3094 = vmatmul.bf16.gmra.mxu0 %v2775
    %v3095 = vpop.f32.mrf.mxu0
    %v3096 = vadd.f32 %v3007, %v3095
    %v3097 = vpop.f32.mrf.mxu0
    %v3098 = vadd.f32 %v3009, %v3097
    %3099 = vmatmul.bf16.gmra.mxu0 %v2779
    %v3100 = vpop.f32.mrf.mxu0
    %v3101 = vadd.f32 %v3012, %v3100
    %v3102 = vpop.f32.mrf.mxu0
    %v3103 = vadd.f32 %v3014, %v3102
    %3104 = vmatmul.bf16.gmra.mxu0 %v2783
    %v3105 = vpop.f32.mrf.mxu0
    %v3106 = vadd.f32 %v3017, %v3105
    %v3107 = vpop.f32.mrf.mxu0
    %v3108 = vadd.f32 %v3019, %v3107
    %3109 = vmatmul.bf16.gmra.mxu0 %v2787
    %v3110 = vpop.f32.mrf.mxu0
    %v3111 = vadd.f32 %v3022, %v3110
    %v3112 = vpop.f32.mrf.mxu0
    %v3113 = vadd.f32 %v3024, %v3112
    %3114 = vmatmul.bf16.gmra.mxu0 %v2791
    %v3115 = vpop.f32.mrf.mxu0
    %v3116 = vadd.f32 %v3027, %v3115
    %v3117 = vpop.f32.mrf.mxu0
    %v3118 = vadd.f32 %v3029, %v3117
    %3119 = vmatmul.bf16.gmra.mxu0 %v2795
    %v3120 = vpop.f32.mrf.mxu0
    %v3121 = vadd.f32 %v3032, %v3120
    %v3122 = vpop.f32.mrf.mxu0
    %v3123 = vadd.f32 %v3034, %v3122
    %3124 = vmatmul.bf16.gmra.mxu0 %v2799
    %v3125 = vpop.f32.mrf.mxu0
    %v3126 = vadd.f32 %v3037, %v3125
    %v3127 = vpop.f32.mrf.mxu0
    %v3128 = vadd.f32 %v3039, %v3127
    %3129 = vmatmul.bf16.gmra.mxu0 %v2803
    %v3130 = vpop.f32.mrf.mxu0
    %v3131 = vadd.f32 %v3042, %v3130
    %v3132 = vpop.f32.mrf.mxu0
    %v3133 = vadd.f32 %v3044, %v3132
    %3134 = vmatmul.bf16.gmra.mxu0 %v2807
    %v3135 = vpop.f32.mrf.mxu0
    %v3136 = vadd.f32 %v3047, %v3135
    %v3137 = vpop.f32.mrf.mxu0
    %v3138 = vadd.f32 %v3049, %v3137
    %3139 = vdwg.mxu0
    %3140 = vmatpush.bf16.msra.mxu0 %v2424
    %3141 = vmatpush.bf16.msra.mxu0 %v2423
    %3142 = vmatpush.bf16.msra.mxu0 %v2422
    %3143 = vmatpush.bf16.msra.mxu0 %v2421
    %3144 = vmatpush.bf16.msra.mxu0 %v2420
    %3145 = vmatpush.bf16.msra.mxu0 %v2419
    %3146 = vmatpush.bf16.msra.mxu0 %v2418
    %3147 = vmatpush.bf16.msra.mxu0 %v2417
    %3148 = vmatmul.bf16.gmra.mxu0 %v2748
    %v3149 = vpop.f32.mrf.mxu0
    %v3150 = vadd.f32 %v3061, %v3149
    %v3151 = vpop.f32.mrf.mxu0
    %v3152 = vadd.f32 %v3063, %v3151
    %3153 = vmatmul.bf16.gmra.mxu0 %v2752
    %v3154 = vpop.f32.mrf.mxu0
    %v3155 = vadd.f32 %v3066, %v3154
    %v3156 = vpop.f32.mrf.mxu0
    %v3157 = vadd.f32 %v3068, %v3156
    %3158 = vmatmul.bf16.gmra.mxu0 %v2756
    %v3159 = vpop.f32.mrf.mxu0
    %v3160 = vadd.f32 %v3071, %v3159
    %v3161 = vpop.f32.mrf.mxu0
    %v3162 = vadd.f32 %v3073, %v3161
    %3163 = vmatmul.bf16.gmra.mxu0 %v2760
    %v3164 = vpop.f32.mrf.mxu0
    %v3165 = vadd.f32 %v3076, %v3164
    %v3166 = vpop.f32.mrf.mxu0
    %v3167 = vadd.f32 %v3078, %v3166
    %3168 = vmatmul.bf16.gmra.mxu0 %v2764
    %v3169 = vpop.f32.mrf.mxu0
    %v3170 = vadd.f32 %v3081, %v3169
    %v3171 = vpop.f32.mrf.mxu0
    %v3172 = vadd.f32 %v3083, %v3171
    %3173 = vmatmul.bf16.gmra.mxu0 %v2768
    %v3174 = vpop.f32.mrf.mxu0
    %v3175 = vadd.f32 %v3086, %v3174
    %v3176 = vpop.f32.mrf.mxu0
    %v3177 = vadd.f32 %v3088, %v3176
    %3178 = vmatmul.bf16.gmra.mxu0 %v2772
    %v3179 = vpop.f32.mrf.mxu0
    %v3180 = vadd.f32 %v3091, %v3179
    %v3181 = vpop.f32.mrf.mxu0
    %v3182 = vadd.f32 %v3093, %v3181
    %3183 = vmatmul.bf16.gmra.mxu0 %v2776
    %v3184 = vpop.f32.mrf.mxu0
    %v3185 = vadd.f32 %v3096, %v3184
    %v3186 = vpop.f32.mrf.mxu0
    %v3187 = vadd.f32 %v3098, %v3186
    %3188 = vmatmul.bf16.gmra.mxu0 %v2780
    %v3189 = vpop.f32.mrf.mxu0
    %v3190 = vadd.f32 %v3101, %v3189
    %v3191 = vpop.f32.mrf.mxu0
    %v3192 = vadd.f32 %v3103, %v3191
    %3193 = vmatmul.bf16.gmra.mxu0 %v2784
    %v3194 = vpop.f32.mrf.mxu0
    %v3195 = vadd.f32 %v3106, %v3194
    %v3196 = vpop.f32.mrf.mxu0
    %v3197 = vadd.f32 %v3108, %v3196
    %3198 = vmatmul.bf16.gmra.mxu0 %v2788
    %v3199 = vpop.f32.mrf.mxu0
    %v3200 = vadd.f32 %v3111, %v3199
    %v3201 = vpop.f32.mrf.mxu0
    %v3202 = vadd.f32 %v3113, %v3201
    %3203 = vmatmul.bf16.gmra.mxu0 %v2792
    %v3204 = vpop.f32.mrf.mxu0
    %v3205 = vadd.f32 %v3116, %v3204
    %v3206 = vpop.f32.mrf.mxu0
    %v3207 = vadd.f32 %v3118, %v3206
    %3208 = vmatmul.bf16.gmra.mxu0 %v2796
    %v3209 = vpop.f32.mrf.mxu0
    %v3210 = vadd.f32 %v3121, %v3209
    %v3211 = vpop.f32.mrf.mxu0
    %v3212 = vadd.f32 %v3123, %v3211
    %3213 = vmatmul.bf16.gmra.mxu0 %v2800
    %v3214 = vpop.f32.mrf.mxu0
    %v3215 = vadd.f32 %v3126, %v3214
    %v3216 = vpop.f32.mrf.mxu0
    %v3217 = vadd.f32 %v3128, %v3216
    %3218 = vmatmul.bf16.gmra.mxu0 %v2804
    %v3219 = vpop.f32.mrf.mxu0
    %v3220 = vadd.f32 %v3131, %v3219
    %v3221 = vpop.f32.mrf.mxu0
    %v3222 = vadd.f32 %v3133, %v3221
    %3223 = vmatmul.bf16.gmra.mxu0 %v2808
    %v3224 = vpop.f32.mrf.mxu0
    %v3225 = vadd.f32 %v3136, %v3224
    %v3226 = vpop.f32.mrf.mxu0
    %v3227 = vadd.f32 %v3138, %v3226
    %3228 = vdwg.mxu0
    %v3229 = vmax.f32 %v3150, 0.0
    %v3230 = vmax.f32 %v3152, 0.0
    %v3231 = vmax.f32 %v3155, 0.0
    %v3232 = vmax.f32 %v3157, 0.0
    %v3233 = vmax.f32 %v3160, 0.0
    %v3234 = vmax.f32 %v3162, 0.0
    %v3235 = vmax.f32 %v3165, 0.0
    %v3236 = vmax.f32 %v3167, 0.0
    %v3237 = vmax.f32 %v3170, 0.0
    %v3238 = vmax.f32 %v3172, 0.0
    %v3239 = vmax.f32 %v3175, 0.0
    %v3240 = vmax.f32 %v3177, 0.0
    %v3241 = vmax.f32 %v3180, 0.0
    %v3242 = vmax.f32 %v3182, 0.0
    %v3243 = vmax.f32 %v3185, 0.0
    %v3244 = vmax.f32 %v3187, 0.0
    %v3245 = vmax.f32 %v3190, 0.0
    %v3246 = vmax.f32 %v3192, 0.0
    %v3247 = vmax.f32 %v3195, 0.0
    %v3248 = vmax.f32 %v3197, 0.0
    %v3249 = vmax.f32 %v3200, 0.0
    %v3250 = vmax.f32 %v3202, 0.0
    %v3251 = vmax.f32 %v3205, 0.0
    %v3252 = vmax.f32 %v3207, 0.0
    %v3253 = vmax.f32 %v3210, 0.0
    %v3254 = vmax.f32 %v3212, 0.0
    %v3255 = vmax.f32 %v3215, 0.0
    %v3256 = vmax.f32 %v3217, 0.0
    %v3257 = vmax.f32 %v3220, 0.0
    %v3258 = vmax.f32 %v3222, 0.0
    %v3259 = vmax.f32 %v3225, 0.0
    %v3260 = vmax.f32 %v3227, 0.0
    %v3261 = vld [vmem:[#allocation4] sm:$0xff]
    %v3262 = vld [vmem:[#allocation4 + $0x8] sm:$0xff]
    %v3263 = vld [vmem:[#allocation4 + $0x10] sm:$0xff]
    %v3264 = vld [vmem:[#allocation4 + $0x18] sm:$0xff]
    %v3265 = vld [vmem:[#allocation4 + $0x20] sm:$0xff]
    %v3266 = vld [vmem:[#allocation4 + $0x28] sm:$0xff]
    %v3267 = vld [vmem:[#allocation4 + $0x30] sm:$0xff]
    %v3268 = vld [vmem:[#allocation4 + $0x38] sm:$0xff]
    %v3269 = vld [vmem:[#allocation4 + $0x40] sm:$0xff]
    %v3270 = vld [vmem:[#allocation4 + $0x48] sm:$0xff]
    %v3271 = vld [vmem:[#allocation4 + $0x50] sm:$0xff]
    %v3272 = vld [vmem:[#allocation4 + $0x58] sm:$0xff]
    %v3273 = vld [vmem:[#allocation4 + $0x60] sm:$0xff]
    %v3274 = vld [vmem:[#allocation4 + $0x68] sm:$0xff]
    %v3275 = vld [vmem:[#allocation4 + $0x70] sm:$0xff]
    %v3276 = vld [vmem:[#allocation4 + $0x78] sm:$0xff]
    %v3277 = vld [vmem:[#allocation4 + $0x80] sm:$0xff]
    %v3278 = vld [vmem:[#allocation4 + $0x88] sm:$0xff]
    %v3279 = vld [vmem:[#allocation4 + $0x90] sm:$0xff]
    %v3280 = vld [vmem:[#allocation4 + $0x98] sm:$0xff]
    %v3281 = vld [vmem:[#allocation4 + $0xa0] sm:$0xff]
    %v3282 = vld [vmem:[#allocation4 + $0xa8] sm:$0xff]
    %v3283 = vld [vmem:[#allocation4 + $0xb0] sm:$0xff]
    %v3284 = vld [vmem:[#allocation4 + $0xb8] sm:$0xff]
    %v3285 = vld [vmem:[#allocation4 + $0xc0] sm:$0xff]
    %v3286 = vld [vmem:[#allocation4 + $0xc8] sm:$0xff]
    %v3287 = vld [vmem:[#allocation4 + $0xd0] sm:$0xff]
    %v3288 = vld [vmem:[#allocation4 + $0xd8] sm:$0xff]
    %v3289 = vld [vmem:[#allocation4 + $0xe0] sm:$0xff]
    %v3290 = vld [vmem:[#allocation4 + $0xe8] sm:$0xff]
    %v3291 = vld [vmem:[#allocation4 + $0xf0] sm:$0xff]
    %v3292 = vld [vmem:[#allocation4 + $0xf8] sm:$0xff]
    %v3293 = vpack.c.bf16 %v1240, %v1239
    %v3294 = vpack.c.bf16 %v1242, %v1241
    %v3295 = vpack.c.bf16 %v1244, %v1243
    %v3296 = vpack.c.bf16 %v1246, %v1245
    %v3297 = vpack.c.bf16 %v1248, %v1247
    %v3298 = vpack.c.bf16 %v1250, %v1249
    %v3299 = vpack.c.bf16 %v1252, %v1251
    %v3300 = vpack.c.bf16 %v1254, %v1253
    %v3301 = vpack.c.bf16 %v1256, %v1255
    %v3302 = vpack.c.bf16 %v1258, %v1257
    %v3303 = vpack.c.bf16 %v1260, %v1259
    %v3304 = vpack.c.bf16 %v1262, %v1261
    %v3305 = vpack.c.bf16 %v1264, %v1263
    %v3306 = vpack.c.bf16 %v1266, %v1265
    %v3307 = vpack.c.bf16 %v1268, %v1267
    %v3308 = vpack.c.bf16 %v1270, %v1269
    %3309 = vset.pattern.permute.xlu0 3
    %3310 = vperm.xlu0 %3309, %v53
    %v3311 = vpop.permute.xlu0 %3310
    %3313 = vset.pattern.permute.xlu0 3
    %3314 = vperm.xlu0 %3313, %v54
    %v3315 = vpop.permute.xlu0 %3314
    %3317 = vset.pattern.permute.xlu0 3
    %3318 = vperm.xlu0 %3317, %v55
    %v3319 = vpop.permute.xlu0 %3318
    %3321 = vset.pattern.permute.xlu0 3
    %3322 = vperm.xlu0 %3321, %v56
    %v3323 = vpop.permute.xlu0 %3322
    %3325 = vset.pattern.permute.xlu0 3
    %3326 = vperm.xlu0 %3325, %v57
    %v3327 = vpop.permute.xlu0 %3326
    %3329 = vset.pattern.permute.xlu0 3
    %3330 = vperm.xlu0 %3329, %v58
    %v3331 = vpop.permute.xlu0 %3330
    %3333 = vset.pattern.permute.xlu0 3
    %3334 = vperm.xlu0 %3333, %v59
    %v3335 = vpop.permute.xlu0 %3334
    %3337 = vset.pattern.permute.xlu0 3
    %3338 = vperm.xlu0 %3337, %v60
    %v3339 = vpop.permute.xlu0 %3338
    %3341 = vset.pattern.permute.xlu0 3
    %3342 = vperm.xlu0 %3341, %v61
    %v3343 = vpop.permute.xlu0 %3342
    %3345 = vset.pattern.permute.xlu0 3
    %3346 = vperm.xlu0 %3345, %v62
    %v3347 = vpop.permute.xlu0 %3346
    %3349 = vset.pattern.permute.xlu0 3
    %3350 = vperm.xlu0 %3349, %v63
    %v3351 = vpop.permute.xlu0 %3350
    %3353 = vset.pattern.permute.xlu0 3
    %3354 = vperm.xlu0 %3353, %v64
    %v3355 = vpop.permute.xlu0 %3354
    %3357 = vset.pattern.permute.xlu0 3
    %3358 = vperm.xlu0 %3357, %v65
    %v3359 = vpop.permute.xlu0 %3358
    %3361 = vset.pattern.permute.xlu0 3
    %3362 = vperm.xlu0 %3361, %v66
    %v3363 = vpop.permute.xlu0 %3362
    %3365 = vset.pattern.permute.xlu0 3
    %3366 = vperm.xlu0 %3365, %v67
    %v3367 = vpop.permute.xlu0 %3366
    %3369 = vset.pattern.permute.xlu0 3
    %3370 = vperm.xlu0 %3369, %v68
    %v3371 = vpop.permute.xlu0 %3370
    %3373 = vset.pattern.permute.xlu0 3
    %3374 = vperm.xlu0 %3373, %v69
    %v3375 = vpop.permute.xlu0 %3374
    %3377 = vset.pattern.permute.xlu0 3
    %3378 = vperm.xlu0 %3377, %v70
    %v3379 = vpop.permute.xlu0 %3378
    %3381 = vset.pattern.permute.xlu0 3
    %3382 = vperm.xlu0 %3381, %v71
    %v3383 = vpop.permute.xlu0 %3382
    %3385 = vset.pattern.permute.xlu0 3
    %3386 = vperm.xlu0 %3385, %v72
    %v3387 = vpop.permute.xlu0 %3386
    %3389 = vset.pattern.permute.xlu0 3
    %3390 = vperm.xlu0 %3389, %v73
    %v3391 = vpop.permute.xlu0 %3390
    %3393 = vset.pattern.permute.xlu0 3
    %3394 = vperm.xlu0 %3393, %v74
    %v3395 = vpop.permute.xlu0 %3394
    %3397 = vset.pattern.permute.xlu0 3
    %3398 = vperm.xlu0 %3397, %v75
    %v3399 = vpop.permute.xlu0 %3398
    %3401 = vset.pattern.permute.xlu0 3
    %3402 = vperm.xlu0 %3401, %v76
    %v3403 = vpop.permute.xlu0 %3402
    %3405 = vset.pattern.permute.xlu0 3
    %3406 = vperm.xlu0 %3405, %v77
    %v3407 = vpop.permute.xlu0 %3406
    %3409 = vset.pattern.permute.xlu0 3
    %3410 = vperm.xlu0 %3409, %v78
    %v3411 = vpop.permute.xlu0 %3410
    %3413 = vset.pattern.permute.xlu0 3
    %3414 = vperm.xlu0 %3413, %v79
    %v3415 = vpop.permute.xlu0 %3414
    %3417 = vset.pattern.permute.xlu0 3
    %3418 = vperm.xlu0 %3417, %v80
    %v3419 = vpop.permute.xlu0 %3418
    %3421 = vset.pattern.permute.xlu0 3
    %3422 = vperm.xlu0 %3421, %v81
    %v3423 = vpop.permute.xlu0 %3422
    %3425 = vset.pattern.permute.xlu0 3
    %3426 = vperm.xlu0 %3425, %v82
    %v3427 = vpop.permute.xlu0 %3426
    %3429 = vset.pattern.permute.xlu0 3
    %3430 = vperm.xlu0 %3429, %v83
    %v3431 = vpop.permute.xlu0 %3430
    %3433 = vset.pattern.permute.xlu0 3
    %3434 = vperm.xlu0 %3433, %v84
    %v3435 = vpop.permute.xlu0 %3434
    %v3469 = vunpack.c.l.b16 %v3261
    %v3470 = vunpack.c.h.b16 %v3261
    %v3471 = vunpack.c.l.b16 %v3262
    %v3472 = vunpack.c.h.b16 %v3262
    %v3473 = vunpack.c.l.b16 %v3263
    %v3474 = vunpack.c.h.b16 %v3263
    %v3475 = vunpack.c.l.b16 %v3264
    %v3476 = vunpack.c.h.b16 %v3264
    %v3477 = vunpack.c.l.b16 %v3265
    %v3478 = vunpack.c.h.b16 %v3265
    %v3479 = vunpack.c.l.b16 %v3266
    %v3480 = vunpack.c.h.b16 %v3266
    %v3481 = vunpack.c.l.b16 %v3267
    %v3482 = vunpack.c.h.b16 %v3267
    %v3483 = vunpack.c.l.b16 %v3268
    %v3484 = vunpack.c.h.b16 %v3268
    %v3485 = vunpack.c.l.b16 %v3269
    %v3486 = vunpack.c.h.b16 %v3269
    %v3487 = vunpack.c.l.b16 %v3270
    %v3488 = vunpack.c.h.b16 %v3270
    %v3489 = vunpack.c.l.b16 %v3271
    %v3490 = vunpack.c.h.b16 %v3271
    %v3491 = vunpack.c.l.b16 %v3272
    %v3492 = vunpack.c.h.b16 %v3272
    %v3493 = vunpack.c.l.b16 %v3273
    %v3494 = vunpack.c.h.b16 %v3273
    %v3495 = vunpack.c.l.b16 %v3274
    %v3496 = vunpack.c.h.b16 %v3274
    %v3497 = vunpack.c.l.b16 %v3275
    %v3498 = vunpack.c.h.b16 %v3275
    %v3499 = vunpack.c.l.b16 %v3276
    %v3500 = vunpack.c.h.b16 %v3276
    %v3501 = vunpack.c.l.b16 %v3277
    %v3502 = vunpack.c.h.b16 %v3277
    %v3503 = vunpack.c.l.b16 %v3278
    %v3504 = vunpack.c.h.b16 %v3278
    %v3505 = vunpack.c.l.b16 %v3279
    %v3506 = vunpack.c.h.b16 %v3279
    %v3507 = vunpack.c.l.b16 %v3280
    %v3508 = vunpack.c.h.b16 %v3280
    %v3509 = vunpack.c.l.b16 %v3281
    %v3510 = vunpack.c.h.b16 %v3281
    %v3511 = vunpack.c.l.b16 %v3282
    %v3512 = vunpack.c.h.b16 %v3282
    %v3513 = vunpack.c.l.b16 %v3283
    %v3514 = vunpack.c.h.b16 %v3283
    %v3515 = vunpack.c.l.b16 %v3284
    %v3516 = vunpack.c.h.b16 %v3284
    %v3517 = vunpack.c.l.b16 %v3285
    %v3518 = vunpack.c.h.b16 %v3285
    %v3519 = vunpack.c.l.b16 %v3286
    %v3520 = vunpack.c.h.b16 %v3286
    %v3521 = vunpack.c.l.b16 %v3287
    %v3522 = vunpack.c.h.b16 %v3287
    %v3523 = vunpack.c.l.b16 %v3288
    %v3524 = vunpack.c.h.b16 %v3288
    %v3525 = vunpack.c.l.b16 %v3289
    %v3526 = vunpack.c.h.b16 %v3289
    %v3527 = vunpack.c.l.b16 %v3290
    %v3528 = vunpack.c.h.b16 %v3290
    %v3529 = vunpack.c.l.b16 %v3291
    %v3530 = vunpack.c.h.b16 %v3291
    %v3531 = vunpack.c.l.b16 %v3292
    %v3532 = vunpack.c.h.b16 %v3292
    %v3533 = vpack.c.b16 %v3471, %v3469
    %v3534 = vpack.c.b16 %v3472, %v3470
    %v3535 = vpack.c.b16 %v3475, %v3473
    %v3536 = vpack.c.b16 %v3476, %v3474
    %v3537 = vpack.c.b16 %v3479, %v3477
    %v3538 = vpack.c.b16 %v3480, %v3478
    %v3539 = vpack.c.b16 %v3483, %v3481
    %v3540 = vpack.c.b16 %v3484, %v3482
    %v3541 = vpack.c.b16 %v3487, %v3485
    %v3542 = vpack.c.b16 %v3488, %v3486
    %v3543 = vpack.c.b16 %v3491, %v3489
    %v3544 = vpack.c.b16 %v3492, %v3490
    %v3545 = vpack.c.b16 %v3495, %v3493
    %v3546 = vpack.c.b16 %v3496, %v3494
    %v3547 = vpack.c.b16 %v3499, %v3497
    %v3548 = vpack.c.b16 %v3500, %v3498
    %v3549 = vpack.c.b16 %v3503, %v3501
    %v3550 = vpack.c.b16 %v3504, %v3502
    %v3551 = vpack.c.b16 %v3507, %v3505
    %v3552 = vpack.c.b16 %v3508, %v3506
    %v3553 = vpack.c.b16 %v3511, %v3509
    %v3554 = vpack.c.b16 %v3512, %v3510
    %v3555 = vpack.c.b16 %v3515, %v3513
    %v3556 = vpack.c.b16 %v3516, %v3514
    %v3557 = vpack.c.b16 %v3519, %v3517
    %v3558 = vpack.c.b16 %v3520, %v3518
    %v3559 = vpack.c.b16 %v3523, %v3521
    %v3560 = vpack.c.b16 %v3524, %v3522
    %v3561 = vpack.c.b16 %v3527, %v3525
    %v3562 = vpack.c.b16 %v3528, %v3526
    %v3563 = vpack.c.b16 %v3531, %v3529
    %v3564 = vpack.c.b16 %v3532, %v3530
    %3597 = vmatpush.bf16.msra.mxu0 %v3300
    %3598 = vmatpush.bf16.msra.mxu0 %v3299
    %3599 = vmatpush.bf16.msra.mxu0 %v3298
    %3600 = vmatpush.bf16.msra.mxu0 %v3297
    %3601 = vmatpush.bf16.msra.mxu0 %v3296
    %3602 = vmatpush.bf16.msra.mxu0 %v3295
    %3603 = vmatpush.bf16.msra.mxu0 %v3294
    %3604 = vmatpush.bf16.msra.mxu0 %v3293
    %3605 = vmatmul.bf16.gmra.mxu0 %v3533
    %v3606 = vpop.f32.mrf.mxu0
    %v3607 = vadd.f32 %v3311, %v3606
    %v3608 = vpop.f32.mrf.mxu0
    %v3609 = vadd.f32 %v3315, %v3608
    %3610 = vmatmul.bf16.gmra.mxu0 %v3535
    %v3611 = vpop.f32.mrf.mxu0
    %v3612 = vadd.f32 %v3319, %v3611
    %v3613 = vpop.f32.mrf.mxu0
    %v3614 = vadd.f32 %v3323, %v3613
    %3615 = vmatmul.bf16.gmra.mxu0 %v3537
    %v3616 = vpop.f32.mrf.mxu0
    %v3617 = vadd.f32 %v3327, %v3616
    %v3618 = vpop.f32.mrf.mxu0
    %v3619 = vadd.f32 %v3331, %v3618
    %3620 = vmatmul.bf16.gmra.mxu0 %v3539
    %v3621 = vpop.f32.mrf.mxu0
    %v3622 = vadd.f32 %v3335, %v3621
    %v3623 = vpop.f32.mrf.mxu0
    %v3624 = vadd.f32 %v3339, %v3623
    %3625 = vmatmul.bf16.gmra.mxu0 %v3541
    %v3626 = vpop.f32.mrf.mxu0
    %v3627 = vadd.f32 %v3343, %v3626
    %v3628 = vpop.f32.mrf.mxu0
    %v3629 = vadd.f32 %v3347, %v3628
    %3630 = vmatmul.bf16.gmra.mxu0 %v3543
    %v3631 = vpop.f32.mrf.mxu0
    %v3632 = vadd.f32 %v3351, %v3631
    %v3633 = vpop.f32.mrf.mxu0
    %v3634 = vadd.f32 %v3355, %v3633
    %3635 = vmatmul.bf16.gmra.mxu0 %v3545
    %v3636 = vpop.f32.mrf.mxu0
    %v3637 = vadd.f32 %v3359, %v3636
    %v3638 = vpop.f32.mrf.mxu0
    %v3639 = vadd.f32 %v3363, %v3638
    %3640 = vmatmul.bf16.gmra.mxu0 %v3547
    %v3641 = vpop.f32.mrf.mxu0
    %v3642 = vadd.f32 %v3367, %v3641
    %v3643 = vpop.f32.mrf.mxu0
    %v3644 = vadd.f32 %v3371, %v3643
    %3645 = vmatmul.bf16.gmra.mxu0 %v3549
    %v3646 = vpop.f32.mrf.mxu0
    %v3647 = vadd.f32 %v3375, %v3646
    %v3648 = vpop.f32.mrf.mxu0
    %v3649 = vadd.f32 %v3379, %v3648
    %3650 = vmatmul.bf16.gmra.mxu0 %v3551
    %v3651 = vpop.f32.mrf.mxu0
    %v3652 = vadd.f32 %v3383, %v3651
    %v3653 = vpop.f32.mrf.mxu0
    %v3654 = vadd.f32 %v3387, %v3653
    %3655 = vmatmul.bf16.gmra.mxu0 %v3553
    %v3656 = vpop.f32.mrf.mxu0
    %v3657 = vadd.f32 %v3391, %v3656
    %v3658 = vpop.f32.mrf.mxu0
    %v3659 = vadd.f32 %v3395, %v3658
    %3660 = vmatmul.bf16.gmra.mxu0 %v3555
    %v3661 = vpop.f32.mrf.mxu0
    %v3662 = vadd.f32 %v3399, %v3661
    %v3663 = vpop.f32.mrf.mxu0
    %v3664 = vadd.f32 %v3403, %v3663
    %3665 = vmatmul.bf16.gmra.mxu0 %v3557
    %v3666 = vpop.f32.mrf.mxu0
    %v3667 = vadd.f32 %v3407, %v3666
    %v3668 = vpop.f32.mrf.mxu0
    %v3669 = vadd.f32 %v3411, %v3668
    %3670 = vmatmul.bf16.gmra.mxu0 %v3559
    %v3671 = vpop.f32.mrf.mxu0
    %v3672 = vadd.f32 %v3415, %v3671
    %v3673 = vpop.f32.mrf.mxu0
    %v3674 = vadd.f32 %v3419, %v3673
    %3675 = vmatmul.bf16.gmra.mxu0 %v3561
    %v3676 = vpop.f32.mrf.mxu0
    %v3677 = vadd.f32 %v3423, %v3676
    %v3678 = vpop.f32.mrf.mxu0
    %v3679 = vadd.f32 %v3427, %v3678
    %3680 = vmatmul.bf16.gmra.mxu0 %v3563
    %v3681 = vpop.f32.mrf.mxu0
    %v3682 = vadd.f32 %v3431, %v3681
    %v3683 = vpop.f32.mrf.mxu0
    %v3684 = vadd.f32 %v3435, %v3683
    %3685 = vdwg.mxu0
    %3686 = vmatpush.bf16.msra.mxu0 %v3308
    %3687 = vmatpush.bf16.msra.mxu0 %v3307
    %3688 = vmatpush.bf16.msra.mxu0 %v3306
    %3689 = vmatpush.bf16.msra.mxu0 %v3305
    %3690 = vmatpush.bf16.msra.mxu0 %v3304
    %3691 = vmatpush.bf16.msra.mxu0 %v3303
    %3692 = vmatpush.bf16.msra.mxu0 %v3302
    %3693 = vmatpush.bf16.msra.mxu0 %v3301
    %3694 = vmatmul.bf16.gmra.mxu0 %v3534
    %v3695 = vpop.f32.mrf.mxu0
    %v3696 = vadd.f32 %v3607, %v3695
    %v3697 = vpop.f32.mrf.mxu0
    %v3698 = vadd.f32 %v3609, %v3697
    %3699 = vmatmul.bf16.gmra.mxu0 %v3536
    %v3700 = vpop.f32.mrf.mxu0
    %v3701 = vadd.f32 %v3612, %v3700
    %v3702 = vpop.f32.mrf.mxu0
    %v3703 = vadd.f32 %v3614, %v3702
    %3704 = vmatmul.bf16.gmra.mxu0 %v3538
    %v3705 = vpop.f32.mrf.mxu0
    %v3706 = vadd.f32 %v3617, %v3705
    %v3707 = vpop.f32.mrf.mxu0
    %v3708 = vadd.f32 %v3619, %v3707
    %3709 = vmatmul.bf16.gmra.mxu0 %v3540
    %v3710 = vpop.f32.mrf.mxu0
    %v3711 = vadd.f32 %v3622, %v3710
    %v3712 = vpop.f32.mrf.mxu0
    %v3713 = vadd.f32 %v3624, %v3712
    %3714 = vmatmul.bf16.gmra.mxu0 %v3542
    %v3715 = vpop.f32.mrf.mxu0
    %v3716 = vadd.f32 %v3627, %v3715
    %v3717 = vpop.f32.mrf.mxu0
    %v3718 = vadd.f32 %v3629, %v3717
    %3719 = vmatmul.bf16.gmra.mxu0 %v3544
    %v3720 = vpop.f32.mrf.mxu0
    %v3721 = vadd.f32 %v3632, %v3720
    %v3722 = vpop.f32.mrf.mxu0
    %v3723 = vadd.f32 %v3634, %v3722
    %3724 = vmatmul.bf16.gmra.mxu0 %v3546
    %v3725 = vpop.f32.mrf.mxu0
    %v3726 = vadd.f32 %v3637, %v3725
    %v3727 = vpop.f32.mrf.mxu0
    %v3728 = vadd.f32 %v3639, %v3727
    %3729 = vmatmul.bf16.gmra.mxu0 %v3548
    %v3730 = vpop.f32.mrf.mxu0
    %v3731 = vadd.f32 %v3642, %v3730
    %v3732 = vpop.f32.mrf.mxu0
    %v3733 = vadd.f32 %v3644, %v3732
    %3734 = vmatmul.bf16.gmra.mxu0 %v3550
    %v3735 = vpop.f32.mrf.mxu0
    %v3736 = vadd.f32 %v3647, %v3735
    %v3737 = vpop.f32.mrf.mxu0
    %v3738 = vadd.f32 %v3649, %v3737
    %3739 = vmatmul.bf16.gmra.mxu0 %v3552
    %v3740 = vpop.f32.mrf.mxu0
    %v3741 = vadd.f32 %v3652, %v3740
    %v3742 = vpop.f32.mrf.mxu0
    %v3743 = vadd.f32 %v3654, %v3742
    %3744 = vmatmul.bf16.gmra.mxu0 %v3554
    %v3745 = vpop.f32.mrf.mxu0
    %v3746 = vadd.f32 %v3657, %v3745
    %v3747 = vpop.f32.mrf.mxu0
    %v3748 = vadd.f32 %v3659, %v3747
    %3749 = vmatmul.bf16.gmra.mxu0 %v3556
    %v3750 = vpop.f32.mrf.mxu0
    %v3751 = vadd.f32 %v3662, %v3750
    %v3752 = vpop.f32.mrf.mxu0
    %v3753 = vadd.f32 %v3664, %v3752
    %3754 = vmatmul.bf16.gmra.mxu0 %v3558
    %v3755 = vpop.f32.mrf.mxu0
    %v3756 = vadd.f32 %v3667, %v3755
    %v3757 = vpop.f32.mrf.mxu0
    %v3758 = vadd.f32 %v3669, %v3757
    %3759 = vmatmul.bf16.gmra.mxu0 %v3560
    %v3760 = vpop.f32.mrf.mxu0
    %v3761 = vadd.f32 %v3672, %v3760
    %v3762 = vpop.f32.mrf.mxu0
    %v3763 = vadd.f32 %v3674, %v3762
    %3764 = vmatmul.bf16.gmra.mxu0 %v3562
    %v3765 = vpop.f32.mrf.mxu0
    %v3766 = vadd.f32 %v3677, %v3765
    %v3767 = vpop.f32.mrf.mxu0
    %v3768 = vadd.f32 %v3679, %v3767
    %3769 = vmatmul.bf16.gmra.mxu0 %v3564
    %v3770 = vpop.f32.mrf.mxu0
    %v3771 = vadd.f32 %v3682, %v3770
    %v3772 = vpop.f32.mrf.mxu0
    %v3773 = vadd.f32 %v3684, %v3772
    %3774 = vdwg.mxu0
    %v3775 = vmax.f32 %v3696, 0.0
    %v3776 = vmax.f32 %v3698, 0.0
    %v3777 = vmax.f32 %v3701, 0.0
    %v3778 = vmax.f32 %v3703, 0.0
    %v3779 = vmax.f32 %v3706, 0.0
    %v3780 = vmax.f32 %v3708, 0.0
    %v3781 = vmax.f32 %v3711, 0.0
    %v3782 = vmax.f32 %v3713, 0.0
    %v3783 = vmax.f32 %v3716, 0.0
    %v3784 = vmax.f32 %v3718, 0.0
    %v3785 = vmax.f32 %v3721, 0.0
    %v3786 = vmax.f32 %v3723, 0.0
    %v3787 = vmax.f32 %v3726, 0.0
    %v3788 = vmax.f32 %v3728, 0.0
    %v3789 = vmax.f32 %v3731, 0.0
    %v3790 = vmax.f32 %v3733, 0.0
    %v3791 = vmax.f32 %v3736, 0.0
    %v3792 = vmax.f32 %v3738, 0.0
    %v3793 = vmax.f32 %v3741, 0.0
    %v3794 = vmax.f32 %v3743, 0.0
    %v3795 = vmax.f32 %v3746, 0.0
    %v3796 = vmax.f32 %v3748, 0.0
    %v3797 = vmax.f32 %v3751, 0.0
    %v3798 = vmax.f32 %v3753, 0.0
    %v3799 = vmax.f32 %v3756, 0.0
    %v3800 = vmax.f32 %v3758, 0.0
    %v3801 = vmax.f32 %v3761, 0.0
    %v3802 = vmax.f32 %v3763, 0.0
    %v3803 = vmax.f32 %v3766, 0.0
    %v3804 = vmax.f32 %v3768, 0.0
    %v3805 = vmax.f32 %v3771, 0.0
    %v3806 = vmax.f32 %v3773, 0.0
    %3807 = vset.pattern.permute.xlu0 6
    %3808 = vperm.xlu0 %3807, %v53
    %v3809 = vpop.permute.xlu0 %3808
    %3811 = vset.pattern.permute.xlu0 6
    %3812 = vperm.xlu0 %3811, %v54
    %v3813 = vpop.permute.xlu0 %3812
    %3815 = vset.pattern.permute.xlu0 6
    %3816 = vperm.xlu0 %3815, %v55
    %v3817 = vpop.permute.xlu0 %3816
    %3819 = vset.pattern.permute.xlu0 6
    %3820 = vperm.xlu0 %3819, %v56
    %v3821 = vpop.permute.xlu0 %3820
    %3823 = vset.pattern.permute.xlu0 6
    %3824 = vperm.xlu0 %3823, %v57
    %v3825 = vpop.permute.xlu0 %3824
    %3827 = vset.pattern.permute.xlu0 6
    %3828 = vperm.xlu0 %3827, %v58
    %v3829 = vpop.permute.xlu0 %3828
    %3831 = vset.pattern.permute.xlu0 6
    %3832 = vperm.xlu0 %3831, %v59
    %v3833 = vpop.permute.xlu0 %3832
    %3835 = vset.pattern.permute.xlu0 6
    %3836 = vperm.xlu0 %3835, %v60
    %v3837 = vpop.permute.xlu0 %3836
    %3839 = vset.pattern.permute.xlu0 6
    %3840 = vperm.xlu0 %3839, %v61
    %v3841 = vpop.permute.xlu0 %3840
    %3843 = vset.pattern.permute.xlu0 6
    %3844 = vperm.xlu0 %3843, %v62
    %v3845 = vpop.permute.xlu0 %3844
    %3847 = vset.pattern.permute.xlu0 6
    %3848 = vperm.xlu0 %3847, %v63
    %v3849 = vpop.permute.xlu0 %3848
    %3851 = vset.pattern.permute.xlu0 6
    %3852 = vperm.xlu0 %3851, %v64
    %v3853 = vpop.permute.xlu0 %3852
    %3855 = vset.pattern.permute.xlu0 6
    %3856 = vperm.xlu0 %3855, %v65
    %v3857 = vpop.permute.xlu0 %3856
    %3859 = vset.pattern.permute.xlu0 6
    %3860 = vperm.xlu0 %3859, %v66
    %v3861 = vpop.permute.xlu0 %3860
    %3863 = vset.pattern.permute.xlu0 6
    %3864 = vperm.xlu0 %3863, %v67
    %v3865 = vpop.permute.xlu0 %3864
    %3867 = vset.pattern.permute.xlu0 6
    %3868 = vperm.xlu0 %3867, %v68
    %v3869 = vpop.permute.xlu0 %3868
    %3871 = vset.pattern.permute.xlu0 6
    %3872 = vperm.xlu0 %3871, %v69
    %v3873 = vpop.permute.xlu0 %3872
    %3875 = vset.pattern.permute.xlu0 6
    %3876 = vperm.xlu0 %3875, %v70
    %v3877 = vpop.permute.xlu0 %3876
    %3879 = vset.pattern.permute.xlu0 6
    %3880 = vperm.xlu0 %3879, %v71
    %v3881 = vpop.permute.xlu0 %3880
    %3883 = vset.pattern.permute.xlu0 6
    %3884 = vperm.xlu0 %3883, %v72
    %v3885 = vpop.permute.xlu0 %3884
    %3887 = vset.pattern.permute.xlu0 6
    %3888 = vperm.xlu0 %3887, %v73
    %v3889 = vpop.permute.xlu0 %3888
    %3891 = vset.pattern.permute.xlu0 6
    %3892 = vperm.xlu0 %3891, %v74
    %v3893 = vpop.permute.xlu0 %3892
    %3895 = vset.pattern.permute.xlu0 6
    %3896 = vperm.xlu0 %3895, %v75
    %v3897 = vpop.permute.xlu0 %3896
    %3899 = vset.pattern.permute.xlu0 6
    %3900 = vperm.xlu0 %3899, %v76
    %v3901 = vpop.permute.xlu0 %3900
    %3903 = vset.pattern.permute.xlu0 6
    %3904 = vperm.xlu0 %3903, %v77
    %v3905 = vpop.permute.xlu0 %3904
    %3907 = vset.pattern.permute.xlu0 6
    %3908 = vperm.xlu0 %3907, %v78
    %v3909 = vpop.permute.xlu0 %3908
    %3911 = vset.pattern.permute.xlu0 6
    %3912 = vperm.xlu0 %3911, %v79
    %v3913 = vpop.permute.xlu0 %3912
    %3915 = vset.pattern.permute.xlu0 6
    %3916 = vperm.xlu0 %3915, %v80
    %v3917 = vpop.permute.xlu0 %3916
    %3919 = vset.pattern.permute.xlu0 6
    %3920 = vperm.xlu0 %3919, %v81
    %v3921 = vpop.permute.xlu0 %3920
    %3923 = vset.pattern.permute.xlu0 6
    %3924 = vperm.xlu0 %3923, %v82
    %v3925 = vpop.permute.xlu0 %3924
    %3927 = vset.pattern.permute.xlu0 6
    %3928 = vperm.xlu0 %3927, %v83
    %v3929 = vpop.permute.xlu0 %3928
    %3931 = vset.pattern.permute.xlu0 6
    %3932 = vperm.xlu0 %3931, %v84
    %v3933 = vpop.permute.xlu0 %3932
    %v3935 = vmul.f32 %v3229, %v3809
    %v3936 = vmul.f32 %v3230, %v3813
    %v3937 = vmul.f32 %v3231, %v3817
    %v3938 = vmul.f32 %v3232, %v3821
    %v3939 = vmul.f32 %v3233, %v3825
    %v3940 = vmul.f32 %v3234, %v3829
    %v3941 = vmul.f32 %v3235, %v3833
    %v3942 = vmul.f32 %v3236, %v3837
    %v3943 = vmul.f32 %v3237, %v3841
    %v3944 = vmul.f32 %v3238, %v3845
    %v3945 = vmul.f32 %v3239, %v3849
    %v3946 = vmul.f32 %v3240, %v3853
    %v3947 = vmul.f32 %v3241, %v3857
    %v3948 = vmul.f32 %v3242, %v3861
    %v3949 = vmul.f32 %v3243, %v3865
    %v3950 = vmul.f32 %v3244, %v3869
    %v3951 = vmul.f32 %v3245, %v3873
    %v3952 = vmul.f32 %v3246, %v3877
    %v3953 = vmul.f32 %v3247, %v3881
    %v3954 = vmul.f32 %v3248, %v3885
    %v3955 = vmul.f32 %v3249, %v3889
    %v3956 = vmul.f32 %v3250, %v3893
    %v3957 = vmul.f32 %v3251, %v3897
    %v3958 = vmul.f32 %v3252, %v3901
    %v3959 = vmul.f32 %v3253, %v3905
    %v3960 = vmul.f32 %v3254, %v3909
    %v3961 = vmul.f32 %v3255, %v3913
    %v3962 = vmul.f32 %v3256, %v3917
    %v3963 = vmul.f32 %v3257, %v3921
    %v3964 = vmul.f32 %v3258, %v3925
    %v3965 = vmul.f32 %v3259, %v3929
    %v3966 = vmul.f32 %v3260, %v3933
    %3967 = vset.pattern.permute.xlu0 7
    %3968 = vperm.xlu0 %3967, %v53
    %v3969 = vpop.permute.xlu0 %3968
    %3971 = vset.pattern.permute.xlu0 7
    %3972 = vperm.xlu0 %3971, %v54
    %v3973 = vpop.permute.xlu0 %3972
    %3975 = vset.pattern.permute.xlu0 7
    %3976 = vperm.xlu0 %3975, %v55
    %v3977 = vpop.permute.xlu0 %3976
    %3979 = vset.pattern.permute.xlu0 7
    %3980 = vperm.xlu0 %3979, %v56
    %v3981 = vpop.permute.xlu0 %3980
    %3983 = vset.pattern.permute.xlu0 7
    %3984 = vperm.xlu0 %3983, %v57
    %v3985 = vpop.permute.xlu0 %3984
    %3987 = vset.pattern.permute.xlu0 7
    %3988 = vperm.xlu0 %3987, %v58
    %v3989 = vpop.permute.xlu0 %3988
    %3991 = vset.pattern.permute.xlu0 7
    %3992 = vperm.xlu0 %3991, %v59
    %v3993 = vpop.permute.xlu0 %3992
    %3995 = vset.pattern.permute.xlu0 7
    %3996 = vperm.xlu0 %3995, %v60
    %v3997 = vpop.permute.xlu0 %3996
    %3999 = vset.pattern.permute.xlu0 7
    %4000 = vperm.xlu0 %3999, %v61
    %v4001 = vpop.permute.xlu0 %4000
    %4003 = vset.pattern.permute.xlu0 7
    %4004 = vperm.xlu0 %4003, %v62
    %v4005 = vpop.permute.xlu0 %4004
    %4007 = vset.pattern.permute.xlu0 7
    %4008 = vperm.xlu0 %4007, %v63
    %v4009 = vpop.permute.xlu0 %4008
    %4011 = vset.pattern.permute.xlu0 7
    %4012 = vperm.xlu0 %4011, %v64
    %v4013 = vpop.permute.xlu0 %4012
    %4015 = vset.pattern.permute.xlu0 7
    %4016 = vperm.xlu0 %4015, %v65
    %v4017 = vpop.permute.xlu0 %4016
    %4019 = vset.pattern.permute.xlu0 7
    %4020 = vperm.xlu0 %4019, %v66
    %v4021 = vpop.permute.xlu0 %4020
    %4023 = vset.pattern.permute.xlu0 7
    %4024 = vperm.xlu0 %4023, %v67
    %v4025 = vpop.permute.xlu0 %4024
    %4027 = vset.pattern.permute.xlu0 7
    %4028 = vperm.xlu0 %4027, %v68
    %v4029 = vpop.permute.xlu0 %4028
    %4031 = vset.pattern.permute.xlu0 7
    %4032 = vperm.xlu0 %4031, %v69
    %v4033 = vpop.permute.xlu0 %4032
    %4035 = vset.pattern.permute.xlu0 7
    %4036 = vperm.xlu0 %4035, %v70
    %v4037 = vpop.permute.xlu0 %4036
    %4039 = vset.pattern.permute.xlu0 7
    %4040 = vperm.xlu0 %4039, %v71
    %v4041 = vpop.permute.xlu0 %4040
    %4043 = vset.pattern.permute.xlu0 7
    %4044 = vperm.xlu0 %4043, %v72
    %v4045 = vpop.permute.xlu0 %4044
    %4047 = vset.pattern.permute.xlu0 7
    %4048 = vperm.xlu0 %4047, %v73
    %v4049 = vpop.permute.xlu0 %4048
    %4051 = vset.pattern.permute.xlu0 7
    %4052 = vperm.xlu0 %4051, %v74
    %v4053 = vpop.permute.xlu0 %4052
    %4055 = vset.pattern.permute.xlu0 7
    %4056 = vperm.xlu0 %4055, %v75
    %v4057 = vpop.permute.xlu0 %4056
    %4059 = vset.pattern.permute.xlu0 7
    %4060 = vperm.xlu0 %4059, %v76
    %v4061 = vpop.permute.xlu0 %4060
    %4063 = vset.pattern.permute.xlu0 7
    %4064 = vperm.xlu0 %4063, %v77
    %v4065 = vpop.permute.xlu0 %4064
    %4067 = vset.pattern.permute.xlu0 7
    %4068 = vperm.xlu0 %4067, %v78
    %v4069 = vpop.permute.xlu0 %4068
    %4071 = vset.pattern.permute.xlu0 7
    %4072 = vperm.xlu0 %4071, %v79
    %v4073 = vpop.permute.xlu0 %4072
    %4075 = vset.pattern.permute.xlu0 7
    %4076 = vperm.xlu0 %4075, %v80
    %v4077 = vpop.permute.xlu0 %4076
    %4079 = vset.pattern.permute.xlu0 7
    %4080 = vperm.xlu0 %4079, %v81
    %v4081 = vpop.permute.xlu0 %4080
    %4083 = vset.pattern.permute.xlu0 7
    %4084 = vperm.xlu0 %4083, %v82
    %v4085 = vpop.permute.xlu0 %4084
    %4087 = vset.pattern.permute.xlu0 7
    %4088 = vperm.xlu0 %4087, %v83
    %v4089 = vpop.permute.xlu0 %4088
    %4091 = vset.pattern.permute.xlu0 7
    %4092 = vperm.xlu0 %4091, %v84
    %v4093 = vpop.permute.xlu0 %4092
    %v4095 = vmul.f32 %v3775, %v3969
    %v4096 = vmul.f32 %v3776, %v3973
    %v4097 = vmul.f32 %v3777, %v3977
    %v4098 = vmul.f32 %v3778, %v3981
    %v4099 = vmul.f32 %v3779, %v3985
    %v4100 = vmul.f32 %v3780, %v3989
    %v4101 = vmul.f32 %v3781, %v3993
    %v4102 = vmul.f32 %v3782, %v3997
    %v4103 = vmul.f32 %v3783, %v4001
    %v4104 = vmul.f32 %v3784, %v4005
    %v4105 = vmul.f32 %v3785, %v4009
    %v4106 = vmul.f32 %v3786, %v4013
    %v4107 = vmul.f32 %v3787, %v4017
    %v4108 = vmul.f32 %v3788, %v4021
    %v4109 = vmul.f32 %v3789, %v4025
    %v4110 = vmul.f32 %v3790, %v4029
    %v4111 = vmul.f32 %v3791, %v4033
    %v4112 = vmul.f32 %v3792, %v4037
    %v4113 = vmul.f32 %v3793, %v4041
    %v4114 = vmul.f32 %v3794, %v4045
    %v4115 = vmul.f32 %v3795, %v4049
    %v4116 = vmul.f32 %v3796, %v4053
    %v4117 = vmul.f32 %v3797, %v4057
    %v4118 = vmul.f32 %v3798, %v4061
    %v4119 = vmul.f32 %v3799, %v4065
    %v4120 = vmul.f32 %v3800, %v4069
    %v4121 = vmul.f32 %v3801, %v4073
    %v4122 = vmul.f32 %v3802, %v4077
    %v4123 = vmul.f32 %v3803, %v4081
    %v4124 = vmul.f32 %v3804, %v4085
    %v4125 = vmul.f32 %v3805, %v4089
    %v4126 = vmul.f32 %v3806, %v4093
    %v4127 = vadd.f32 %v3935, %v4095
    %v4128 = vadd.f32 %v3936, %v4096
    %v4129 = vadd.f32 %v3937, %v4097
    %v4130 = vadd.f32 %v3938, %v4098
    %v4131 = vadd.f32 %v3939, %v4099
    %v4132 = vadd.f32 %v3940, %v4100
    %v4133 = vadd.f32 %v3941, %v4101
    %v4134 = vadd.f32 %v3942, %v4102
    %v4135 = vadd.f32 %v3943, %v4103
    %v4136 = vadd.f32 %v3944, %v4104
    %v4137 = vadd.f32 %v3945, %v4105
    %v4138 = vadd.f32 %v3946, %v4106
    %v4139 = vadd.f32 %v3947, %v4107
    %v4140 = vadd.f32 %v3948, %v4108
    %v4141 = vadd.f32 %v3949, %v4109
    %v4142 = vadd.f32 %v3950, %v4110
    %v4143 = vadd.f32 %v3951, %v4111
    %v4144 = vadd.f32 %v3952, %v4112
    %v4145 = vadd.f32 %v3953, %v4113
    %v4146 = vadd.f32 %v3954, %v4114
    %v4147 = vadd.f32 %v3955, %v4115
    %v4148 = vadd.f32 %v3956, %v4116
    %v4149 = vadd.f32 %v3957, %v4117
    %v4150 = vadd.f32 %v3958, %v4118
    %v4151 = vadd.f32 %v3959, %v4119
    %v4152 = vadd.f32 %v3960, %v4120
    %v4153 = vadd.f32 %v3961, %v4121
    %v4154 = vadd.f32 %v3962, %v4122
    %v4155 = vadd.f32 %v3963, %v4123
    %v4156 = vadd.f32 %v3964, %v4124
    %v4157 = vadd.f32 %v3965, %v4125
    %v4158 = vadd.f32 %v3966, %v4126
    %v4159 = vadd.f32 %v4127, %v4128
    %v4160 = vadd.f32 %v4159, %v4129
    %v4161 = vadd.f32 %v4160, %v4130
    %v4162 = vadd.f32 %v4161, %v4131
    %v4163 = vadd.f32 %v4162, %v4132
    %v4164 = vadd.f32 %v4163, %v4133
    %v4165 = vadd.f32 %v4164, %v4134
    %v4166 = vadd.f32 %v4165, %v4135
    %v4167 = vadd.f32 %v4166, %v4136
    %v4168 = vadd.f32 %v4167, %v4137
    %v4169 = vadd.f32 %v4168, %v4138
    %v4170 = vadd.f32 %v4169, %v4139
    %v4171 = vadd.f32 %v4170, %v4140
    %v4172 = vadd.f32 %v4171, %v4141
    %v4173 = vadd.f32 %v4172, %v4142
    %v4174 = vadd.f32 %v4173, %v4143
    %v4175 = vadd.f32 %v4174, %v4144
    %v4176 = vadd.f32 %v4175, %v4145
    %v4177 = vadd.f32 %v4176, %v4146
    %v4178 = vadd.f32 %v4177, %v4147
    %v4179 = vadd.f32 %v4178, %v4148
    %v4180 = vadd.f32 %v4179, %v4149
    %v4181 = vadd.f32 %v4180, %v4150
    %v4182 = vadd.f32 %v4181, %v4151
    %v4183 = vadd.f32 %v4182, %v4152
    %v4184 = vadd.f32 %v4183, %v4153
    %v4185 = vadd.f32 %v4184, %v4154
    %v4186 = vadd.f32 %v4185, %v4155
    %v4187 = vadd.f32 %v4186, %v4156
    %v4188 = vadd.f32 %v4187, %v4157
    %v4189 = vadd.f32 %v4188, %v4158
    %v4190 = vrot.slane %v4189, 4
    %v4191 = vadd.f32 %v4189, %v4190
    %v4192 = vrot.slane %v4191, 2
    %v4193 = vadd.f32 %v4191, %v4192
    %v4194 = vrot.slane %v4193, 1
    %v4195 = vadd.f32 %v4193, %v4194
    %4196 = vset.pattern.permute.xlu0 8
    %4197 = vperm.xlu0 %4196, %v53
    %v4198 = vpop.permute.xlu0 %4197
    %v4200 = vadd.f32 %v4195, %v4198
    %4201 = vst [vmem:[%s5] sm:$0x1] %v4200
    // Predicated region
    $region30: #{mynet_forward.1} parent=1 // pred_check
      _
    $region31: #{mynet_forward.1} parent=1 // pred_check_branch
      %4203 = sbr.rel (0) target = $region33
    $region32: #{mynet_forward.1} parent=1 // pred_region
      _
    $region33: #{mynet_forward.1} parent=1 // pred_fallthru
      _
    // Predicated region
    $region34: #{mynet_forward.1} parent=1 // pred_check
      _
    $region35: #{mynet_forward.1} parent=1 // pred_check_branch
      %4205 = sbr.rel (0) target = $region37
    $region36: #{mynet_forward.1} parent=1 // pred_region
      _
    $region37: #{mynet_forward.1} parent=1 // pred_fallthru
      _
    %4206 = vsyncpa [#allocation3], 1
    %4207 = vsyncpa [#allocation5], 1

</llo_original>
